<compile_context>
chip_gen: v5e
topology: v5e:2x2
jax: 0.10.0
libtpu: 0.0.40
codegen_flags: <defaults>
</compile_context>

<pallas_src>
import functools

import jax
import jax.numpy as jnp
import numpy as np
from jax.experimental import pallas as pl
from jax.experimental.pallas import tpu as pltpu

N_EMBD = 256 + 128 + 64          # 448
HIDDEN = 4 * N_EMBD              # 1792
DROPOUT_P = 0.25
NEG_SLOPE = 0.01
_VMEM_LIMIT = 48 * 1024 * 1024   # fits v7x's 64 MiB VMEM with headroom


def _leaky_relu(h):
    return jnp.where(h > 0, h, NEG_SLOPE * h)


def _ffn_kernel_eval(x_ref, w1_ref, b1_ref, w2_ref, b2_ref, o_ref):
    """Fused FFN, dropout in eval mode (identity). bf16 MXU, f32 accumulation."""
    h = jnp.dot(x_ref[...], w1_ref[...], preferred_element_type=jnp.float32)
    h = _leaky_relu(h + b1_ref[...])
    y = jnp.dot(h.astype(jnp.bfloat16), w2_ref[...],
                preferred_element_type=jnp.float32)
    o_ref[...] = (y + b2_ref[...]).astype(o_ref.dtype)


def _ffn_kernel_train(x_ref, w1_ref, b1_ref, w2_ref, b2_ref, u_ref, o_ref):
    """Fused FFN with inverted dropout; mask from precomputed uniforms in u_ref."""
    h = jnp.dot(x_ref[...], w1_ref[...], preferred_element_type=jnp.float32)
    h = _leaky_relu(h + b1_ref[...])
    y = jnp.dot(h.astype(jnp.bfloat16), w2_ref[...],
                preferred_element_type=jnp.float32)
    y = y + b2_ref[...]
    keep = u_ref[...] >= DROPOUT_P
    y = jnp.where(keep, y * (1.0 / (1.0 - DROPOUT_P)), 0.0)
    o_ref[...] = y.astype(o_ref.dtype)


def init_feedforward_params(key, n_embd=N_EMBD, dtype=jnp.float32):
    """PyTorch-style init: U(-1/sqrt(fan_in), 1/sqrt(fan_in)).

    Weights are stored transposed to (in, out) for the kernel's x @ W and in
    bfloat16 so the MXU runs native bf16 passes (accumulation stays f32).
    Biases stay f32.
    """
    hidden = 4 * n_embd
    k1, k2, k3, k4 = jax.random.split(key, 4)
    bnd1 = 1.0 / np.sqrt(n_embd)
    bnd2 = 1.0 / np.sqrt(hidden)
    w1 = jax.random.uniform(k1, (n_embd, hidden), dtype, -bnd1, bnd1).astype(jnp.bfloat16)
    b1 = jax.random.uniform(k2, (1, hidden), dtype, -bnd1, bnd1)
    w2 = jax.random.uniform(k3, (hidden, n_embd), dtype, -bnd2, bnd2).astype(jnp.bfloat16)
    b2 = jax.random.uniform(k4, (1, n_embd), dtype, -bnd2, bnd2)
    return {"w1": w1, "b1": b1, "w2": w2, "b2": b2}


def _pick_tile_m(M):
    """512-row tiles when M is large; otherwise split into >=2 grid steps
    (keeps both v7x TensorCores busy), rounded up to the 8-row sublane."""
    if M >= 1024:
        return 512
    half = pl.cdiv(M, 2)
    return max(8, min(512, pl.cdiv(half, 8) * 8))


@functools.partial(jax.jit, static_argnames=("training", "tile_m"))
def feed_forward(x, params, seed=0, *, training=False, tile_m=None):
    w1, b1, w2, b2 = params["w1"], params["b1"], params["w2"], params["b2"]
    B, T, C = x.shape
    H = w1.shape[1]
    M = B * T

    if tile_m is None:
        tile_m = _pick_tile_m(M)
    grid_m = pl.cdiv(M, tile_m)
    M_pad = grid_m * tile_m

    # bf16 activations feed the MXU; accumulation is f32 inside the kernel.
    x2 = x.reshape(M, C).astype(jnp.bfloat16)
    if M_pad != M:
        x2 = jnp.pad(x2, ((0, M_pad - M), (0, 0)))

    x_spec = pl.BlockSpec((tile_m, C), lambda i: (i, 0))
    # Constant index_maps -> weights/biases stay resident in VMEM across the grid.
    # (pipeline_mode=pl.Buffered(1) could reclaim the second weight buffer on
    # v7x, but bf16 weights already leave ample VMEM headroom on every gen.)
    w1_spec = pl.BlockSpec((C, H), lambda i: (0, 0))
    b1_spec = pl.BlockSpec((1, H), lambda i: (0, 0))
    w2_spec = pl.BlockSpec((H, C), lambda i: (0, 0))
    b2_spec = pl.BlockSpec((1, C), lambda i: (0, 0))
    o_spec = pl.BlockSpec((tile_m, C), lambda i: (i, 0))

    cp = pltpu.CompilerParams(
        dimension_semantics=("parallel",),
        vmem_limit_bytes=_VMEM_LIMIT,
    )

    flops = 4 * M_pad * C * H  # two (M,C)x(C,H)-class matmuls, mul+add each
    base_bytes = (x2.size * 2 + (w1.size + w2.size) * 2
                  + (b1.size + b2.size) * 4 + M_pad * C * 4)

    if training:
        # TODO(synk): dropout mask cannot match torch's RNG stream bit-for-bit;
        # it is a statistically-equivalent inverted dropout with p=0.25.
        u = jax.random.uniform(jax.random.PRNGKey(seed), (M_pad, C), jnp.float32)
        u_spec = pl.BlockSpec((tile_m, C), lambda i: (i, 0))
        out = pl.pallas_call(
            _ffn_kernel_train,
            out_shape=jax.ShapeDtypeStruct((M_pad, C), x.dtype),
            grid=(grid_m,),
            in_specs=[x_spec, w1_spec, b1_spec, w2_spec, b2_spec, u_spec],
            out_specs=o_spec,
            compiler_params=cp,
            cost_estimate=pl.CostEstimate(
                flops=flops, transcendentals=0,
                bytes_accessed=base_bytes + M_pad * C * 4),
        )(x2, w1, b1, w2, b2, u)
    else:
        out = pl.pallas_call(
            _ffn_kernel_eval,
            out_shape=jax.ShapeDtypeStruct((M_pad, C), x.dtype),
            grid=(grid_m,),
            in_specs=[x_spec, w1_spec, b1_spec, w2_spec, b2_spec],
            out_specs=o_spec,
            compiler_params=cp,
            cost_estimate=pl.CostEstimate(
                flops=flops, transcendentals=0, bytes_accessed=base_bytes),
        )(x2, w1, b1, w2, b2)
    return out[:M].reshape(B, T, C)


def feed_forward_ref(x, params):
    """Pure-JAX reference (eval mode) with the same bf16-input / f32-accumulate math."""
    xb = x.astype(jnp.bfloat16).astype(jnp.float32)
    h = xb @ params["w1"].astype(jnp.float32) + params["b1"][0]
    h = jnp.where(h > 0, h, NEG_SLOPE * h)
    hb = h.astype(jnp.bfloat16).astype(jnp.float32)
    return hb @ params["w2"].astype(jnp.float32) + params["b2"][0]


if __name__ == "__main__":
    key = jax.random.PRNGKey(0)
    k_param, k_x = jax.random.split(key)

    B, T, C = 2, 8, N_EMBD   # small batch/seq; C must equal n_embd = 448
    params = init_feedforward_params(k_param)
    x = jax.random.normal(k_x, (B, T, C), jnp.float32)

    # Eval-mode forward (dropout == identity): check against pure-JAX reference.
    y_eval = feed_forward(x, params, training=False)
    jax.block_until_ready(y_eval)
    y_ref = feed_forward_ref(x, params)
    np.testing.assert_allclose(np.asarray(y_eval), np.asarray(y_ref),
                               rtol=2e-3, atol=2e-3)

    # Training-mode forward (inverted dropout, p=0.25, mask from jax.random).
    y_train = feed_forward(x, params, seed=123, training=True)
    jax.block_until_ready(y_train)
    yt = np.asarray(y_train)
    ye = np.asarray(y_eval)
    frac_zero = float(np.mean(yt == 0.0))
    assert 0.1 < frac_zero < 0.4, f"unexpected dropout rate {frac_zero}"
    nz = yt != 0.0
    np.testing.assert_allclose(yt[nz], ye[nz] / (1.0 - DROPOUT_P),
                               rtol=1e-4, atol=1e-4)

    print("KERNEL_OK")
</pallas_src>

<mosaic_0001>
module attributes {stable_mosaic.version = 11 : i64} {
  func.func @_ffn_kernel_eval(%arg0: i32, %arg1: memref<8x448xbf16, #tpu.memory_space<vmem>>, %arg2: memref<448x1792xbf16, #tpu.memory_space<vmem>>, %arg3: memref<1x1792xf32, #tpu.memory_space<vmem>>, %arg4: memref<1792x448xbf16, #tpu.memory_space<vmem>>, %arg5: memref<1x448xf32, #tpu.memory_space<vmem>>, %arg6: memref<8x448xf32, #tpu.memory_space<vmem>>) attributes {dimension_semantics = [#tpu.dimension_semantics<parallel>], iteration_bounds = array<i64: 2>, scalar_prefetch = 0 : i64, scratch_operands = 0 : i64, tpu.core_type = #tpu.core_type<tc>, window_params = [{transform_indices = @transform_0, window_bounds = array<i64: 8, 448>}, {pipeline_mode = #tpu.pipeline_mode<synchronous>, transform_indices = @transform_1, window_bounds = array<i64: 448, 1792>}, {pipeline_mode = #tpu.pipeline_mode<synchronous>, transform_indices = @transform_2, window_bounds = array<i64: 1, 1792>}, {pipeline_mode = #tpu.pipeline_mode<synchronous>, transform_indices = @transform_3, window_bounds = array<i64: 1792, 448>}, {pipeline_mode = #tpu.pipeline_mode<synchronous>, transform_indices = @transform_4, window_bounds = array<i64: 1, 448>}, {transform_indices = @transform_5, window_bounds = array<i64: 8, 448>}]} {
    %c0 = arith.constant 0 : index
    %c0_0 = arith.constant 0 : index
    %0 = vector.load %arg1[%c0, %c0_0] : memref<8x448xbf16, #tpu.memory_space<vmem>>, vector<8x448xbf16>
    %c0_1 = arith.constant 0 : index
    %c0_2 = arith.constant 0 : index
    %1 = vector.load %arg2[%c0_1, %c0_2] : memref<448x1792xbf16, #tpu.memory_space<vmem>>, vector<448x1792xbf16>
    %cst = arith.constant dense<0.000000e+00> : vector<8x1792xf32>
    %2 = tpu.matmul %0, %1, %cst {dimension_numbers = #tpu.dot_dimension_numbers<[1], [0], [0], [1], [0, 0, 1, 1], [], []>} : vector<8x448xbf16>, vector<448x1792xbf16>, vector<8x1792xf32> -> vector<8x1792xf32>
    %c0_3 = arith.constant 0 : index
    %c0_4 = arith.constant 0 : index
    %3 = vector.load %arg3[%c0_3, %c0_4] : memref<1x1792xf32, #tpu.memory_space<vmem>>, vector<1x1792xf32>
    %4 = vector.broadcast %3 : vector<1x1792xf32> to vector<8x1792xf32>
    %5 = arith.addf %2, %4 : vector<8x1792xf32>
    %cst_5 = arith.constant 0.000000e+00 : f32
    %6 = vector.broadcast %cst_5 : f32 to vector<8x1792xf32>
    %7 = arith.cmpf ogt, %5, %6 : vector<8x1792xf32>
    %cst_6 = arith.constant 0.00999999977 : f32
    %8 = vector.broadcast %cst_6 : f32 to vector<8x1792xf32>
    %9 = arith.mulf %8, %5 : vector<8x1792xf32>
    %10 = arith.select %7, %5, %9 : vector<8x1792xi1>, vector<8x1792xf32>
    %11 = arith.truncf %10 : vector<8x1792xf32> to vector<8x1792xbf16>
    %c0_7 = arith.constant 0 : index
    %c0_8 = arith.constant 0 : index
    %12 = vector.load %arg4[%c0_7, %c0_8] : memref<1792x448xbf16, #tpu.memory_space<vmem>>, vector<1792x448xbf16>
    %cst_9 = arith.constant dense<0.000000e+00> : vector<8x448xf32>
    %13 = tpu.matmul %11, %12, %cst_9 {dimension_numbers = #tpu.dot_dimension_numbers<[1], [0], [0], [1], [0, 0, 1, 1], [], []>} : vector<8x1792xbf16>, vector<1792x448xbf16>, vector<8x448xf32> -> vector<8x448xf32>
    %c0_10 = arith.constant 0 : index
    %c0_11 = arith.constant 0 : index
    %14 = vector.load %arg5[%c0_10, %c0_11] : memref<1x448xf32, #tpu.memory_space<vmem>>, vector<1x448xf32>
    %15 = vector.broadcast %14 : vector<1x448xf32> to vector<8x448xf32>
    %16 = arith.addf %13, %15 : vector<8x448xf32>
    %c0_12 = arith.constant 0 : index
    %c0_13 = arith.constant 0 : index
    %17 = vector.load %arg6[%c0_12, %c0_13] : memref<8x448xf32, #tpu.memory_space<vmem>>, vector<8x448xf32>
    tpu.vector_store %arg6[%c0_12, %c0_13], %16 {strides = array<i32>} : memref<8x448xf32, #tpu.memory_space<vmem>>, vector<8x448xf32>,
    return
  }
  func.func @transform_0(%arg0: i32) -> (i32, i32) {
    %c0_i32 = arith.constant 0 : i32
    %c0_i32_0 = arith.constant 0 : i32
    return %arg0, %c0_i32 : i32, i32
  }
  func.func @transform_1(%arg0: i32) -> (i32, i32) {
    %c0_i32 = arith.constant 0 : i32
    %c0_i32_0 = arith.constant 0 : i32
    %c0_i32_1 = arith.constant 0 : i32
    return %c0_i32, %c0_i32_0 : i32, i32
  }
  func.func @transform_2(%arg0: i32) -> (i32, i32) {
    %c0_i32 = arith.constant 0 : i32
    %c0_i32_0 = arith.constant 0 : i32
    %c0_i32_1 = arith.constant 0 : i32
    return %c0_i32, %c0_i32_0 : i32, i32
  }
  func.func @transform_3(%arg0: i32) -> (i32, i32) {
    %c0_i32 = arith.constant 0 : i32
    %c0_i32_0 = arith.constant 0 : i32
    %c0_i32_1 = arith.constant 0 : i32
    return %c0_i32, %c0_i32_0 : i32, i32
  }
  func.func @transform_4(%arg0: i32) -> (i32, i32) {
    %c0_i32 = arith.constant 0 : i32
    %c0_i32_0 = arith.constant 0 : i32
    %c0_i32_1 = arith.constant 0 : i32
    return %c0_i32, %c0_i32_0 : i32, i32
  }
  func.func @transform_5(%arg0: i32) -> (i32, i32) {
    %c0_i32 = arith.constant 0 : i32
    %c0_i32_0 = arith.constant 0 : i32
    return %arg0, %c0_i32 : i32, i32
  }
}

</mosaic_0001>

<llo_original>
// kernel: feed_forward.1
$region0: #{feed_forward.1}
  #allocation0 [shape = 'u32[]', space=smem, size = 0x4, offset = 0x4, fixed_abs, tag = 'smem constant byte address 0x4 - core index']
  #allocation1 [shape = 'u32[72,128]{1,0:T(1,128)}', space=vmem, size = 0x9000, scoped, tag = 'internal scratch']
  %s0 = inlined_call_operand.vmem [shape: bf16[16,448], index: 0, kind: input, shape index: {}]
  %s1 = inlined_call_operand.vmem [shape: bf16[448,1792], index: 1, kind: input, shape index: {}]
  %s2 = inlined_call_operand.vmem [shape: f32[1,1792], index: 2, kind: input, shape index: {}]
  %s3 = inlined_call_operand.vmem [shape: bf16[1792,448], index: 3, kind: input, shape index: {}]
  %s4 = inlined_call_operand.vmem [shape: f32[1,448], index: 4, kind: input, shape index: {}]
  %s5 = inlined_call_operand.hbm [shape: f32[16,448], index: 5, kind: output, shape index: {}]
  %s6 = sld [smem:[#allocation0]]
  $region53: #{feed_forward.1} parent=0
    _
  %s8 = ssub.s32 1, %s6
  %s9 = scalar_select 0, %s8, %s6
  $region1: #{feed_forward.1} parent=0
    #allocation2 [shape = 'u8[32768]{0}', space=vmem, size = 0x8000, scoped, tag = 'output window, operand 0']
    #allocation3 [shape = 's32[2]{0}', space=sflag, size = 0x8, scoped, tag = 'scoped memory for feed_forward.1']
    %10 = vsyncpa [#allocation3], 0
    %s11 = scalar_lea.sflag [#allocation3], 1
    %12 = vsyncpa %s11, 0
    loop: start=0, step=1, limit=4
    $region2: #{feed_forward.1} parent=1 // loop_pre_header
      _
    $region3: #{feed_forward.1} parent=1 // loop_header
      %s14 = sphi 0, %s18
      %p15 = scmp.ge.s32.totalorder %s14, 4
      %s24 = sphi 0, %s26
      %s27 = sphi 0, %s24
      %s28 = sphi 0, %s27
      %s44 = sphi 0, %s28
      %s48 = sphi 0, %s48
      %s50 = sphi 0, %s48
      %s51 = sphi 0, %s50
      %s65 = sphi 0, %s51
      %s69 = sphi 0, %s69
      %s71 = sphi 0, %s69
      %s72 = sphi 0, %s71
      %s86 = sphi 0, %s72
      %s90 = sphi 0, %s90
      %s92 = sphi 0, %s90
      %s93 = sphi 0, %s92
      %s107 = sphi 0, %s93
      %s111 = sphi 0, %s111
      %s113 = sphi 0, %s111
      %s114 = sphi 0, %s113
      %s128 = sphi 0, %s114
      %s134 = sphi 0, %s136
      %s137 = sphi 0, %s134
      %s138 = sphi 0, %s137
      %s154 = sphi 0, %s138
    $region4: #{feed_forward.1} parent=1 // loop_header_branch
      %17 = sbr.rel (%p15) target = $region8
    $region5: #{feed_forward.1} parent=1 // loop_body
      %s19 = ssub.s32 %s14, 1
      %s20 = ssub.s32 %s14, 2
      %s21 = sadd.s32 %s14, 1
      %s22 = ssub.s32 %s14, %s21
      %p23 = scmp.eq.s32.totalorder %s22, 0
      %s25 = sadd.s32 %s24, 1
      %s26 = scalar_select %p23, %s24, %s25
      %p29 = pneg %p23
      %p30 = scmp.eq.s32.totalorder %s14, 1
      %p31 = por %p29, %p30
      %p32 = scmp.ne.s32.totalorder %s24, %s27
      %p33 = scmp.eq.s32.totalorder %s14, 0
      %p34 = por %p32, %p33
      %p35 = scmp.ne.s32.totalorder %s24, %s27
      %p36 = scmp.eq.s32.totalorder %s19, 1
      %p37 = por %p35, %p36
      %p38 = scmp.ne.s32.totalorder %s27, %s28
      %p39 = scmp.eq.s32.totalorder %s19, 0
      %p40 = por %p38, %p39
      %p41 = scmp.ne.s32.totalorder %s27, %s28
      %p42 = scmp.eq.s32.totalorder %s20, 1
      %p43 = por %p41, %p42
      %p45 = scmp.ne.s32.totalorder %s28, %s44
      %p46 = scmp.eq.s32.totalorder %s20, 0
      %p47 = por %p45, %p46
      %s49 = sadd.s32 %s48, 1
      %p52 = scmp.eq.s32.totalorder %s14, 1
      %p53 = scmp.ne.s32.totalorder %s48, %s50
      %p54 = scmp.eq.s32.totalorder %s14, 0
      %p55 = por %p53, %p54
      %p56 = scmp.ne.s32.totalorder %s48, %s50
      %p57 = scmp.eq.s32.totalorder %s19, 1
      %p58 = por %p56, %p57
      %p59 = scmp.ne.s32.totalorder %s50, %s51
      %p60 = scmp.eq.s32.totalorder %s19, 0
      %p61 = por %p59, %p60
      %p62 = scmp.ne.s32.totalorder %s50, %s51
      %p63 = scmp.eq.s32.totalorder %s20, 1
      %p64 = por %p62, %p63
      %p66 = scmp.ne.s32.totalorder %s51, %s65
      %p67 = scmp.eq.s32.totalorder %s20, 0
      %p68 = por %p66, %p67
      %s70 = sadd.s32 %s69, 1
      %p73 = scmp.eq.s32.totalorder %s14, 1
      %p74 = scmp.ne.s32.totalorder %s69, %s71
      %p75 = scmp.eq.s32.totalorder %s14, 0
      %p76 = por %p74, %p75
      %p77 = scmp.ne.s32.totalorder %s69, %s71
      %p78 = scmp.eq.s32.totalorder %s19, 1
      %p79 = por %p77, %p78
      %p80 = scmp.ne.s32.totalorder %s71, %s72
      %p81 = scmp.eq.s32.totalorder %s19, 0
      %p82 = por %p80, %p81
      %p83 = scmp.ne.s32.totalorder %s71, %s72
      %p84 = scmp.eq.s32.totalorder %s20, 1
      %p85 = por %p83, %p84
      %p87 = scmp.ne.s32.totalorder %s72, %s86
      %p88 = scmp.eq.s32.totalorder %s20, 0
      %p89 = por %p87, %p88
      %s91 = sadd.s32 %s90, 1
      %p94 = scmp.eq.s32.totalorder %s14, 1
      %p95 = scmp.ne.s32.totalorder %s90, %s92
      %p96 = scmp.eq.s32.totalorder %s14, 0
      %p97 = por %p95, %p96
      %p98 = scmp.ne.s32.totalorder %s90, %s92
      %p99 = scmp.eq.s32.totalorder %s19, 1
      %p100 = por %p98, %p99
      %p101 = scmp.ne.s32.totalorder %s92, %s93
      %p102 = scmp.eq.s32.totalorder %s19, 0
      %p103 = por %p101, %p102
      %p104 = scmp.ne.s32.totalorder %s92, %s93
      %p105 = scmp.eq.s32.totalorder %s20, 1
      %p106 = por %p104, %p105
      %p108 = scmp.ne.s32.totalorder %s93, %s107
      %p109 = scmp.eq.s32.totalorder %s20, 0
      %p110 = por %p108, %p109
      %s112 = sadd.s32 %s111, 1
      %p115 = scmp.eq.s32.totalorder %s14, 1
      %p116 = scmp.ne.s32.totalorder %s111, %s113
      %p117 = scmp.eq.s32.totalorder %s14, 0
      %p118 = por %p116, %p117
      %p119 = scmp.ne.s32.totalorder %s111, %s113
      %p120 = scmp.eq.s32.totalorder %s19, 1
      %p121 = por %p119, %p120
      %p122 = scmp.ne.s32.totalorder %s113, %s114
      %p123 = scmp.eq.s32.totalorder %s19, 0
      %p124 = por %p122, %p123
      %p125 = scmp.ne.s32.totalorder %s113, %s114
      %p126 = scmp.eq.s32.totalorder %s20, 1
      %p127 = por %p125, %p126
      %p129 = scmp.ne.s32.totalorder %s114, %s128
      %p130 = scmp.eq.s32.totalorder %s20, 0
      %p131 = por %p129, %p130
      %s132 = ssub.s32 %s14, %s21
      %p133 = scmp.eq.s32.totalorder %s132, 0
      %s135 = sadd.s32 %s134, 1
      %s136 = scalar_select %p133, %s134, %s135
      %p139 = pneg %p133
      %p140 = scmp.eq.s32.totalorder %s14, 1
      %p141 = por %p139, %p140
      %p142 = scmp.ne.s32.totalorder %s134, %s137
      %p143 = scmp.eq.s32.totalorder %s14, 0
      %p144 = por %p142, %p143
      %p145 = scmp.ne.s32.totalorder %s134, %s137
      %p146 = scmp.eq.s32.totalorder %s19, 1
      %p147 = por %p145, %p146
      %p148 = scmp.ne.s32.totalorder %s137, %s138
      %p149 = scmp.eq.s32.totalorder %s19, 0
      %p150 = por %p148, %p149
      %p151 = scmp.ne.s32.totalorder %s137, %s138
      %p152 = scmp.eq.s32.totalorder %s20, 1
      %p153 = por %p151, %p152
      %p155 = scmp.ne.s32.totalorder %s138, %s154
      %p156 = scmp.eq.s32.totalorder %s20, 0
      %p157 = por %p155, %p156
      %p158 = scmp.le.s32.totalorder 1, %s14
      %p159 = scmp.lt.s32.totalorder %s14, 3
      %p160 = pnand %p158, %p159
      %p161 = pneg %p160
      // Predicated region
      $region9: #{feed_forward.1} parent=5 // pred_check
        _
      $region10: #{feed_forward.1} parent=5 // pred_check_branch
        %163 = sbr.rel (%p160) target = $region12
      $region11: #{feed_forward.1} parent=5 // pred_region
        %s164 = ssub.s32 %s14, 1
        // Predicated region
        $region13: #{feed_forward.1} parent=11 // pred_check
          %p165 = pneg %p61
        $region14: #{feed_forward.1} parent=11 // pred_check_branch
          %167 = sbr.rel (%p165) target = $region16
        $region15: #{feed_forward.1} parent=11 // pred_region
          _
        $region16: #{feed_forward.1} parent=11 // pred_fallthru
          _
        // Predicated region
        $region17: #{feed_forward.1} parent=11 // pred_check
          %p168 = pneg %p82
        $region18: #{feed_forward.1} parent=11 // pred_check_branch
          %170 = sbr.rel (%p168) target = $region20
        $region19: #{feed_forward.1} parent=11 // pred_region
          _
        $region20: #{feed_forward.1} parent=11 // pred_fallthru
          _
        // Predicated region
        $region21: #{feed_forward.1} parent=11 // pred_check
          %p171 = pneg %p103
        $region22: #{feed_forward.1} parent=11 // pred_check_branch
          %173 = sbr.rel (%p171) target = $region24
        $region23: #{feed_forward.1} parent=11 // pred_region
          _
        $region24: #{feed_forward.1} parent=11 // pred_fallthru
          _
        // Predicated region
        $region25: #{feed_forward.1} parent=11 // pred_check
          %p174 = pneg %p124
        $region26: #{feed_forward.1} parent=11 // pred_check_branch
          %176 = sbr.rel (%p174) target = $region28
        $region27: #{feed_forward.1} parent=11 // pred_region
          _
        $region28: #{feed_forward.1} parent=11 // pred_fallthru
          _
      $region12: #{feed_forward.1} parent=5 // pred_fallthru
        _
      %p177 = scmp.lt.s32.totalorder %s14, 2
      // Predicated region
      $region29: #{feed_forward.1} parent=5 // pred_check
        %p178 = pneg %p177
      $region30: #{feed_forward.1} parent=5 // pred_check_branch
        %180 = sbr.rel (%p178) target = $region32
      $region31: #{feed_forward.1} parent=5 // pred_region
        // Predicated region
        $region33: #{feed_forward.1} parent=31 // pred_check
          %p181 = pneg %p34
        $region34: #{feed_forward.1} parent=31 // pred_check_branch
          %183 = sbr.rel (%p181) target = $region36
        $region35: #{feed_forward.1} parent=31 // pred_region
          %p184 = scmp.lt.s32.totalorder %s14, 1
          %s185 = scalar_select %p184, %s14, 1
          %s186 = smul.addr %s185, 4
          %s187 = smul.addr %s186, 4
          %s188 = scalar_lea.vmem %s0, %s187
        $region36: #{feed_forward.1} parent=31 // pred_fallthru
          _
      $region32: #{feed_forward.1} parent=5 // pred_fallthru
        _
      %p189 = scmp.le.s32.totalorder 1, %s14
      %p190 = scmp.lt.s32.totalorder %s14, 3
      %p191 = pnand %p189, %p190
      %p192 = pneg %p191
      // Predicated region
      $region37: #{feed_forward.1} parent=5 // pred_check
        _
      $region38: #{feed_forward.1} parent=5 // pred_check_branch
        %194 = sbr.rel (%p191) target = $region40
      $region39: #{feed_forward.1} parent=5 // pred_region
        %s195 = ssub.s32 %s14, 1
        %p196 = scmp.lt.s32.totalorder %s19, 1
        %s197 = scalar_select %p196, %s19, 1
        %s198 = smul.addr %s197, 4
        %s199 = smul.addr %s198, 4
        %s200 = scalar_lea.vmem %s0, %s199
        %p201 = pneg %p40
        %p202 = pneg %p37
        %p203 = pneg %p61
        %p204 = pneg %p58
        %p205 = pneg %p82
        %p206 = pneg %p79
        %p207 = pneg %p103
        %p208 = pneg %p100
        %p209 = pneg %p124
        %p210 = pneg %p121
        %p211 = pneg %p150
        %p212 = pneg %p147
        %s213 = sand.u32 %s137, 1
        %s214 = scalar_lea.sflag [#allocation3], %s213
        %s215 = sand.u32 %s137, 1
        %s216 = smul.addr %s215, 32
        %s217 = scalar_lea.vmem [#allocation2], %s216
        %p218 = scmp.lt.s32.totalorder %s19, 1
        %s219 = scalar_select %p218, %s19, 1
        %s220 = smul.addr %s219, 4
        %s221 = smul.addr %s220, 4
        %s222 = scalar_lea.vmem %s0, %s221
        %v224 = vld [vmem:[%s222] sm:$0xff]
        %v225 = vld [vmem:[%s222 + $0x8] sm:$0xff]
        %v226 = vld [vmem:[%s1] sm:$0xff]
        %v227 = vld [vmem:[%s1 + $0x8] sm:$0xff]
        %v228 = vld [vmem:[%s1 + $0x10] sm:$0xff]
        %v229 = vld [vmem:[%s1 + $0x18] sm:$0xff]
        %v230 = vld [vmem:[%s1 + $0x20] sm:$0xff]
        %v231 = vld [vmem:[%s1 + $0x28] sm:$0xff]
        %v232 = vld [vmem:[%s1 + $0x30] sm:$0xff]
        %v233 = vld [vmem:[%s1 + $0x38] sm:$0xff]
        %v234 = vld [vmem:[%s1 + $0x40] sm:$0xff]
        %v235 = vld [vmem:[%s1 + $0x48] sm:$0xff]
        %v236 = vld [vmem:[%s1 + $0x50] sm:$0xff]
        %v237 = vld [vmem:[%s1 + $0x58] sm:$0xff]
        %v238 = vld [vmem:[%s1 + $0x60] sm:$0xff]
        %v239 = vld [vmem:[%s1 + $0x68] sm:$0xff]
        %v240 = vld [vmem:[%s1 + $0x70] sm:$0xff]
        %v241 = vld [vmem:[%s1 + $0x78] sm:$0xff]
        %v242 = vld [vmem:[%s1 + $0x80] sm:$0xff]
        %v243 = vld [vmem:[%s1 + $0x88] sm:$0xff]
        %v244 = vld [vmem:[%s1 + $0x90] sm:$0xff]
        %v245 = vld [vmem:[%s1 + $0x98] sm:$0xff]
        %v246 = vld [vmem:[%s1 + $0xa0] sm:$0xff]
        %v247 = vld [vmem:[%s1 + $0xa8] sm:$0xff]
        %v248 = vld [vmem:[%s1 + $0xb0] sm:$0xff]
        %v249 = vld [vmem:[%s1 + $0xb8] sm:$0xff]
        %v250 = vld [vmem:[%s1 + $0xc0] sm:$0xff]
        %v251 = vld [vmem:[%s1 + $0xc8] sm:$0xff]
        %v252 = vld [vmem:[%s1 + $0xd0] sm:$0xff]
        %v253 = vld [vmem:[%s1 + $0xd8] sm:$0xff]
        %v254 = vld [vmem:[%s1 + $0xe0] sm:$0xff]
        %v255 = vld [vmem:[%s1 + $0xe8] sm:$0xff]
        %v256 = vld [vmem:[%s1 + $0xf0] sm:$0xff]
        %v257 = vld [vmem:[%s1 + $0xf8] sm:$0xff]
        %v258 = vld [vmem:[%s1 + $0x100] sm:$0xff]
        %v259 = vld [vmem:[%s1 + $0x108] sm:$0xff]
        %v260 = vld [vmem:[%s1 + $0x110] sm:$0xff]
        %v261 = vld [vmem:[%s1 + $0x118] sm:$0xff]
        %v262 = vld [vmem:[%s1 + $0x120] sm:$0xff]
        %v263 = vld [vmem:[%s1 + $0x128] sm:$0xff]
        %v264 = vld [vmem:[%s1 + $0x130] sm:$0xff]
        %v265 = vld [vmem:[%s1 + $0x138] sm:$0xff]
        %v266 = vld [vmem:[%s1 + $0x140] sm:$0xff]
        %v267 = vld [vmem:[%s1 + $0x148] sm:$0xff]
        %v268 = vld [vmem:[%s1 + $0x150] sm:$0xff]
        %v269 = vld [vmem:[%s1 + $0x158] sm:$0xff]
        %v270 = vld [vmem:[%s1 + $0x160] sm:$0xff]
        %v271 = vld [vmem:[%s1 + $0x168] sm:$0xff]
        %v272 = vld [vmem:[%s1 + $0x170] sm:$0xff]
        %v273 = vld [vmem:[%s1 + $0x178] sm:$0xff]
        %v274 = vld [vmem:[%s1 + $0x180] sm:$0xff]
        %v275 = vld [vmem:[%s1 + $0x188] sm:$0xff]
        %v276 = vld [vmem:[%s1 + $0x190] sm:$0xff]
        %v277 = vld [vmem:[%s1 + $0x198] sm:$0xff]
        %v278 = vld [vmem:[%s1 + $0x1a0] sm:$0xff]
        %v279 = vld [vmem:[%s1 + $0x1a8] sm:$0xff]
        %v280 = vld [vmem:[%s1 + $0x1b0] sm:$0xff]
        %v281 = vld [vmem:[%s1 + $0x1b8] sm:$0xff]
        %v282 = vld [vmem:[%s1 + $0x1c0] sm:$0xff]
        %v283 = vld [vmem:[%s1 + $0x1c8] sm:$0xff]
        %v284 = vld [vmem:[%s1 + $0x1d0] sm:$0xff]
        %v285 = vld [vmem:[%s1 + $0x1d8] sm:$0xff]
        %v286 = vld [vmem:[%s1 + $0x1e0] sm:$0xff]
        %v287 = vld [vmem:[%s1 + $0x1e8] sm:$0xff]
        %v288 = vld [vmem:[%s1 + $0x1f0] sm:$0xff]
        %v289 = vld [vmem:[%s1 + $0x1f8] sm:$0xff]
        %v290 = vld [vmem:[%s1 + $0x200] sm:$0xff]
        %v291 = vld [vmem:[%s1 + $0x208] sm:$0xff]
        %v292 = vld [vmem:[%s1 + $0x210] sm:$0xff]
        %v293 = vld [vmem:[%s1 + $0x218] sm:$0xff]
        %v294 = vld [vmem:[%s1 + $0x220] sm:$0xff]
        %v295 = vld [vmem:[%s1 + $0x228] sm:$0xff]
        %v296 = vld [vmem:[%s1 + $0x230] sm:$0xff]
        %v297 = vld [vmem:[%s1 + $0x238] sm:$0xff]
        %v298 = vld [vmem:[%s1 + $0x240] sm:$0xff]
        %v299 = vld [vmem:[%s1 + $0x248] sm:$0xff]
        %v300 = vld [vmem:[%s1 + $0x250] sm:$0xff]
        %v301 = vld [vmem:[%s1 + $0x258] sm:$0xff]
        %v302 = vld [vmem:[%s1 + $0x260] sm:$0xff]
        %v303 = vld [vmem:[%s1 + $0x268] sm:$0xff]
        %v304 = vld [vmem:[%s1 + $0x270] sm:$0xff]
        %v305 = vld [vmem:[%s1 + $0x278] sm:$0xff]
        %v306 = vld [vmem:[%s1 + $0x280] sm:$0xff]
        %v307 = vld [vmem:[%s1 + $0x288] sm:$0xff]
        %v308 = vld [vmem:[%s1 + $0x290] sm:$0xff]
        %v309 = vld [vmem:[%s1 + $0x298] sm:$0xff]
        %v310 = vld [vmem:[%s1 + $0x2a0] sm:$0xff]
        %v311 = vld [vmem:[%s1 + $0x2a8] sm:$0xff]
        %v312 = vld [vmem:[%s1 + $0x2b0] sm:$0xff]
        %v313 = vld [vmem:[%s1 + $0x2b8] sm:$0xff]
        %v314 = vld [vmem:[%s1 + $0x2c0] sm:$0xff]
        %v315 = vld [vmem:[%s1 + $0x2c8] sm:$0xff]
        %v316 = vld [vmem:[%s1 + $0x2d0] sm:$0xff]
        %v317 = vld [vmem:[%s1 + $0x2d8] sm:$0xff]
        %v318 = vld [vmem:[%s1 + $0x2e0] sm:$0xff]
        %v319 = vld [vmem:[%s1 + $0x2e8] sm:$0xff]
        %v320 = vld [vmem:[%s1 + $0x2f0] sm:$0xff]
        %v321 = vld [vmem:[%s1 + $0x2f8] sm:$0xff]
        %v322 = vld [vmem:[%s1 + $0x300] sm:$0xff]
        %v323 = vld [vmem:[%s1 + $0x308] sm:$0xff]
        %v324 = vld [vmem:[%s1 + $0x310] sm:$0xff]
        %v325 = vld [vmem:[%s1 + $0x318] sm:$0xff]
        %v326 = vld [vmem:[%s1 + $0x320] sm:$0xff]
        %v327 = vld [vmem:[%s1 + $0x328] sm:$0xff]
        %v328 = vld [vmem:[%s1 + $0x330] sm:$0xff]
        %v329 = vld [vmem:[%s1 + $0x338] sm:$0xff]
        %v330 = vld [vmem:[%s1 + $0x340] sm:$0xff]
        %v331 = vld [vmem:[%s1 + $0x348] sm:$0xff]
        %v332 = vld [vmem:[%s1 + $0x350] sm:$0xff]
        %v333 = vld [vmem:[%s1 + $0x358] sm:$0xff]
        %v334 = vld [vmem:[%s1 + $0x360] sm:$0xff]
        %v335 = vld [vmem:[%s1 + $0x368] sm:$0xff]
        %v336 = vld [vmem:[%s1 + $0x370] sm:$0xff]
        %v337 = vld [vmem:[%s1 + $0x378] sm:$0xff]
        %v338 = vld [vmem:[%s1 + $0x380] sm:$0xff]
        %v339 = vld [vmem:[%s1 + $0x388] sm:$0xff]
        %v340 = vld [vmem:[%s1 + $0x390] sm:$0xff]
        %v341 = vld [vmem:[%s1 + $0x398] sm:$0xff]
        %v342 = vld [vmem:[%s1 + $0x3a0] sm:$0xff]
        %v343 = vld [vmem:[%s1 + $0x3a8] sm:$0xff]
        %v344 = vld [vmem:[%s1 + $0x3b0] sm:$0xff]
        %v345 = vld [vmem:[%s1 + $0x3b8] sm:$0xff]
        %v346 = vld [vmem:[%s1 + $0x3c0] sm:$0xff]
        %v347 = vld [vmem:[%s1 + $0x3c8] sm:$0xff]
        %v348 = vld [vmem:[%s1 + $0x3d0] sm:$0xff]
        %v349 = vld [vmem:[%s1 + $0x3d8] sm:$0xff]
        %v350 = vld [vmem:[%s1 + $0x3e0] sm:$0xff]
        %v351 = vld [vmem:[%s1 + $0x3e8] sm:$0xff]
        %v352 = vld [vmem:[%s1 + $0x3f0] sm:$0xff]
        %v353 = vld [vmem:[%s1 + $0x3f8] sm:$0xff]
        %v354 = vld [vmem:[%s1 + $0x400] sm:$0xff]
        %v355 = vld [vmem:[%s1 + $0x408] sm:$0xff]
        %v356 = vld [vmem:[%s1 + $0x410] sm:$0xff]
        %v357 = vld [vmem:[%s1 + $0x418] sm:$0xff]
        %v358 = vld [vmem:[%s1 + $0x420] sm:$0xff]
        %v359 = vld [vmem:[%s1 + $0x428] sm:$0xff]
        %v360 = vld [vmem:[%s1 + $0x430] sm:$0xff]
        %v361 = vld [vmem:[%s1 + $0x438] sm:$0xff]
        %v362 = vld [vmem:[%s1 + $0x440] sm:$0xff]
        %v363 = vld [vmem:[%s1 + $0x448] sm:$0xff]
        %v364 = vld [vmem:[%s1 + $0x450] sm:$0xff]
        %v365 = vld [vmem:[%s1 + $0x458] sm:$0xff]
        %v366 = vld [vmem:[%s1 + $0x460] sm:$0xff]
        %v367 = vld [vmem:[%s1 + $0x468] sm:$0xff]
        %v368 = vld [vmem:[%s1 + $0x470] sm:$0xff]
        %v369 = vld [vmem:[%s1 + $0x478] sm:$0xff]
        %v370 = vld [vmem:[%s1 + $0x480] sm:$0xff]
        %v371 = vld [vmem:[%s1 + $0x488] sm:$0xff]
        %v372 = vld [vmem:[%s1 + $0x490] sm:$0xff]
        %v373 = vld [vmem:[%s1 + $0x498] sm:$0xff]
        %v374 = vld [vmem:[%s1 + $0x4a0] sm:$0xff]
        %v375 = vld [vmem:[%s1 + $0x4a8] sm:$0xff]
        %v376 = vld [vmem:[%s1 + $0x4b0] sm:$0xff]
        %v377 = vld [vmem:[%s1 + $0x4b8] sm:$0xff]
        %v378 = vld [vmem:[%s1 + $0x4c0] sm:$0xff]
        %v379 = vld [vmem:[%s1 + $0x4c8] sm:$0xff]
        %v380 = vld [vmem:[%s1 + $0x4d0] sm:$0xff]
        %v381 = vld [vmem:[%s1 + $0x4d8] sm:$0xff]
        %v382 = vld [vmem:[%s1 + $0x4e0] sm:$0xff]
        %v383 = vld [vmem:[%s1 + $0x4e8] sm:$0xff]
        %v384 = vld [vmem:[%s1 + $0x4f0] sm:$0xff]
        %v385 = vld [vmem:[%s1 + $0x4f8] sm:$0xff]
        %v386 = vld [vmem:[%s1 + $0x500] sm:$0xff]
        %v387 = vld [vmem:[%s1 + $0x508] sm:$0xff]
        %v388 = vld [vmem:[%s1 + $0x510] sm:$0xff]
        %v389 = vld [vmem:[%s1 + $0x518] sm:$0xff]
        %v390 = vld [vmem:[%s1 + $0x520] sm:$0xff]
        %v391 = vld [vmem:[%s1 + $0x528] sm:$0xff]
        %v392 = vld [vmem:[%s1 + $0x530] sm:$0xff]
        %v393 = vld [vmem:[%s1 + $0x538] sm:$0xff]
        %v394 = vld [vmem:[%s1 + $0x540] sm:$0xff]
        %v395 = vld [vmem:[%s1 + $0x548] sm:$0xff]
        %v396 = vld [vmem:[%s1 + $0x550] sm:$0xff]
        %v397 = vld [vmem:[%s1 + $0x558] sm:$0xff]
        %v398 = vld [vmem:[%s1 + $0x560] sm:$0xff]
        %v399 = vld [vmem:[%s1 + $0x568] sm:$0xff]
        %v400 = vld [vmem:[%s1 + $0x570] sm:$0xff]
        %v401 = vld [vmem:[%s1 + $0x578] sm:$0xff]
        %v402 = vld [vmem:[%s1 + $0x580] sm:$0xff]
        %v403 = vld [vmem:[%s1 + $0x588] sm:$0xff]
        %v404 = vld [vmem:[%s1 + $0x590] sm:$0xff]
        %v405 = vld [vmem:[%s1 + $0x598] sm:$0xff]
        %v406 = vld [vmem:[%s1 + $0x5a0] sm:$0xff]
        %v407 = vld [vmem:[%s1 + $0x5a8] sm:$0xff]
        %v408 = vld [vmem:[%s1 + $0x5b0] sm:$0xff]
        %v409 = vld [vmem:[%s1 + $0x5b8] sm:$0xff]
        %v410 = vld [vmem:[%s1 + $0x5c0] sm:$0xff]
        %v411 = vld [vmem:[%s1 + $0x5c8] sm:$0xff]
        %v412 = vld [vmem:[%s1 + $0x5d0] sm:$0xff]
        %v413 = vld [vmem:[%s1 + $0x5d8] sm:$0xff]
        %v414 = vld [vmem:[%s1 + $0x5e0] sm:$0xff]
        %v415 = vld [vmem:[%s1 + $0x5e8] sm:$0xff]
        %v416 = vld [vmem:[%s1 + $0x5f0] sm:$0xff]
        %v417 = vld [vmem:[%s1 + $0x5f8] sm:$0xff]
        %v418 = vld [vmem:[%s1 + $0x600] sm:$0xff]
        %v419 = vld [vmem:[%s1 + $0x608] sm:$0xff]
        %v420 = vld [vmem:[%s1 + $0x610] sm:$0xff]
        %v421 = vld [vmem:[%s1 + $0x618] sm:$0xff]
        %v422 = vld [vmem:[%s1 + $0x620] sm:$0xff]
        %v423 = vld [vmem:[%s1 + $0x628] sm:$0xff]
        %v424 = vld [vmem:[%s1 + $0x630] sm:$0xff]
        %v425 = vld [vmem:[%s1 + $0x638] sm:$0xff]
        %v426 = vld [vmem:[%s1 + $0x640] sm:$0xff]
        %v427 = vld [vmem:[%s1 + $0x648] sm:$0xff]
        %v428 = vld [vmem:[%s1 + $0x650] sm:$0xff]
        %v429 = vld [vmem:[%s1 + $0x658] sm:$0xff]
        %v430 = vld [vmem:[%s1 + $0x660] sm:$0xff]
        %v431 = vld [vmem:[%s1 + $0x668] sm:$0xff]
        %v432 = vld [vmem:[%s1 + $0x670] sm:$0xff]
        %v433 = vld [vmem:[%s1 + $0x678] sm:$0xff]
        %v434 = vld [vmem:[%s1 + $0x680] sm:$0xff]
        %v435 = vld [vmem:[%s1 + $0x688] sm:$0xff]
        %v436 = vld [vmem:[%s1 + $0x690] sm:$0xff]
        %v437 = vld [vmem:[%s1 + $0x698] sm:$0xff]
        %v438 = vld [vmem:[%s1 + $0x6a0] sm:$0xff]
        %v439 = vld [vmem:[%s1 + $0x6a8] sm:$0xff]
        %v440 = vld [vmem:[%s1 + $0x6b0] sm:$0xff]
        %v441 = vld [vmem:[%s1 + $0x6b8] sm:$0xff]
        %v442 = vld [vmem:[%s1 + $0x6c0] sm:$0xff]
        %v443 = vld [vmem:[%s1 + $0x6c8] sm:$0xff]
        %v444 = vld [vmem:[%s1 + $0x6d0] sm:$0xff]
        %v445 = vld [vmem:[%s1 + $0x6d8] sm:$0xff]
        %v446 = vld [vmem:[%s1 + $0x6e0] sm:$0xff]
        %v447 = vld [vmem:[%s1 + $0x6e8] sm:$0xff]
        %v448 = vld [vmem:[%s1 + $0x6f0] sm:$0xff]
        %v449 = vld [vmem:[%s1 + $0x6f8] sm:$0xff]
        %v450 = vld [vmem:[%s1 + $0x700] sm:$0xff]
        %v451 = vld [vmem:[%s1 + $0x708] sm:$0xff]
        %v452 = vld [vmem:[%s1 + $0x710] sm:$0xff]
        %v453 = vld [vmem:[%s1 + $0x718] sm:$0xff]
        %v454 = vld [vmem:[%s1 + $0x720] sm:$0xff]
        %v455 = vld [vmem:[%s1 + $0x728] sm:$0xff]
        %v456 = vld [vmem:[%s1 + $0x730] sm:$0xff]
        %v457 = vld [vmem:[%s1 + $0x738] sm:$0xff]
        %v458 = vld [vmem:[%s1 + $0x740] sm:$0xff]
        %v459 = vld [vmem:[%s1 + $0x748] sm:$0xff]
        %v460 = vld [vmem:[%s1 + $0x750] sm:$0xff]
        %v461 = vld [vmem:[%s1 + $0x758] sm:$0xff]
        %v462 = vld [vmem:[%s1 + $0x760] sm:$0xff]
        %v463 = vld [vmem:[%s1 + $0x768] sm:$0xff]
        %v464 = vld [vmem:[%s1 + $0x770] sm:$0xff]
        %v465 = vld [vmem:[%s1 + $0x778] sm:$0xff]
        %v466 = vld [vmem:[%s1 + $0x780] sm:$0xff]
        %v467 = vld [vmem:[%s1 + $0x788] sm:$0xff]
        %v468 = vld [vmem:[%s1 + $0x790] sm:$0xff]
        %v469 = vld [vmem:[%s1 + $0x798] sm:$0xff]
        %v470 = vld [vmem:[%s1 + $0x7a0] sm:$0xff]
        %v471 = vld [vmem:[%s1 + $0x7a8] sm:$0xff]
        %v472 = vld [vmem:[%s1 + $0x7b0] sm:$0xff]
        %v473 = vld [vmem:[%s1 + $0x7b8] sm:$0xff]
        %v474 = vld [vmem:[%s1 + $0x7c0] sm:$0xff]
        %v475 = vld [vmem:[%s1 + $0x7c8] sm:$0xff]
        %v476 = vld [vmem:[%s1 + $0x7d0] sm:$0xff]
        %v477 = vld [vmem:[%s1 + $0x7d8] sm:$0xff]
        %v478 = vld [vmem:[%s1 + $0x7e0] sm:$0xff]
        %v479 = vld [vmem:[%s1 + $0x7e8] sm:$0xff]
        %v480 = vld [vmem:[%s1 + $0x7f0] sm:$0xff]
        %v481 = vld [vmem:[%s1 + $0x7f8] sm:$0xff]
        %v482 = vld [vmem:[%s1 + $0x800] sm:$0xff]
        %v483 = vld [vmem:[%s1 + $0x808] sm:$0xff]
        %v484 = vld [vmem:[%s1 + $0x810] sm:$0xff]
        %v485 = vld [vmem:[%s1 + $0x818] sm:$0xff]
        %v486 = vld [vmem:[%s1 + $0x820] sm:$0xff]
        %v487 = vld [vmem:[%s1 + $0x828] sm:$0xff]
        %v488 = vld [vmem:[%s1 + $0x830] sm:$0xff]
        %v489 = vld [vmem:[%s1 + $0x838] sm:$0xff]
        %v490 = vld [vmem:[%s1 + $0x840] sm:$0xff]
        %v491 = vld [vmem:[%s1 + $0x848] sm:$0xff]
        %v492 = vld [vmem:[%s1 + $0x850] sm:$0xff]
        %v493 = vld [vmem:[%s1 + $0x858] sm:$0xff]
        %v494 = vld [vmem:[%s1 + $0x860] sm:$0xff]
        %v495 = vld [vmem:[%s1 + $0x868] sm:$0xff]
        %v496 = vld [vmem:[%s1 + $0x870] sm:$0xff]
        %v497 = vld [vmem:[%s1 + $0x878] sm:$0xff]
        %v498 = vld [vmem:[%s1 + $0x880] sm:$0xff]
        %v499 = vld [vmem:[%s1 + $0x888] sm:$0xff]
        %v500 = vld [vmem:[%s1 + $0x890] sm:$0xff]
        %v501 = vld [vmem:[%s1 + $0x898] sm:$0xff]
        %v502 = vld [vmem:[%s1 + $0x8a0] sm:$0xff]
        %v503 = vld [vmem:[%s1 + $0x8a8] sm:$0xff]
        %v504 = vld [vmem:[%s1 + $0x8b0] sm:$0xff]
        %v505 = vld [vmem:[%s1 + $0x8b8] sm:$0xff]
        %v506 = vld [vmem:[%s1 + $0x8c0] sm:$0xff]
        %v507 = vld [vmem:[%s1 + $0x8c8] sm:$0xff]
        %v508 = vld [vmem:[%s1 + $0x8d0] sm:$0xff]
        %v509 = vld [vmem:[%s1 + $0x8d8] sm:$0xff]
        %v510 = vld [vmem:[%s1 + $0x8e0] sm:$0xff]
        %v511 = vld [vmem:[%s1 + $0x8e8] sm:$0xff]
        %v512 = vld [vmem:[%s1 + $0x8f0] sm:$0xff]
        %v513 = vld [vmem:[%s1 + $0x8f8] sm:$0xff]
        %v514 = vld [vmem:[%s1 + $0x900] sm:$0xff]
        %v515 = vld [vmem:[%s1 + $0x908] sm:$0xff]
        %v516 = vld [vmem:[%s1 + $0x910] sm:$0xff]
        %v517 = vld [vmem:[%s1 + $0x918] sm:$0xff]
        %v518 = vld [vmem:[%s1 + $0x920] sm:$0xff]
        %v519 = vld [vmem:[%s1 + $0x928] sm:$0xff]
        %v520 = vld [vmem:[%s1 + $0x930] sm:$0xff]
        %v521 = vld [vmem:[%s1 + $0x938] sm:$0xff]
        %v522 = vld [vmem:[%s1 + $0x940] sm:$0xff]
        %v523 = vld [vmem:[%s1 + $0x948] sm:$0xff]
        %v524 = vld [vmem:[%s1 + $0x950] sm:$0xff]
        %v525 = vld [vmem:[%s1 + $0x958] sm:$0xff]
        %v526 = vld [vmem:[%s1 + $0x960] sm:$0xff]
        %v527 = vld [vmem:[%s1 + $0x968] sm:$0xff]
        %v528 = vld [vmem:[%s1 + $0x970] sm:$0xff]
        %v529 = vld [vmem:[%s1 + $0x978] sm:$0xff]
        %v530 = vld [vmem:[%s1 + $0x980] sm:$0xff]
        %v531 = vld [vmem:[%s1 + $0x988] sm:$0xff]
        %v532 = vld [vmem:[%s1 + $0x990] sm:$0xff]
        %v533 = vld [vmem:[%s1 + $0x998] sm:$0xff]
        %v534 = vld [vmem:[%s1 + $0x9a0] sm:$0xff]
        %v535 = vld [vmem:[%s1 + $0x9a8] sm:$0xff]
        %v536 = vld [vmem:[%s1 + $0x9b0] sm:$0xff]
        %v537 = vld [vmem:[%s1 + $0x9b8] sm:$0xff]
        %v538 = vld [vmem:[%s1 + $0x9c0] sm:$0xff]
        %v539 = vld [vmem:[%s1 + $0x9c8] sm:$0xff]
        %v540 = vld [vmem:[%s1 + $0x9d0] sm:$0xff]
        %v541 = vld [vmem:[%s1 + $0x9d8] sm:$0xff]
        %v542 = vld [vmem:[%s1 + $0x9e0] sm:$0xff]
        %v543 = vld [vmem:[%s1 + $0x9e8] sm:$0xff]
        %v544 = vld [vmem:[%s1 + $0x9f0] sm:$0xff]
        %v545 = vld [vmem:[%s1 + $0x9f8] sm:$0xff]
        %v546 = vld [vmem:[%s1 + $0xa00] sm:$0xff]
        %v547 = vld [vmem:[%s1 + $0xa08] sm:$0xff]
        %v548 = vld [vmem:[%s1 + $0xa10] sm:$0xff]
        %v549 = vld [vmem:[%s1 + $0xa18] sm:$0xff]
        %v550 = vld [vmem:[%s1 + $0xa20] sm:$0xff]
        %v551 = vld [vmem:[%s1 + $0xa28] sm:$0xff]
        %v552 = vld [vmem:[%s1 + $0xa30] sm:$0xff]
        %v553 = vld [vmem:[%s1 + $0xa38] sm:$0xff]
        %v554 = vld [vmem:[%s1 + $0xa40] sm:$0xff]
        %v555 = vld [vmem:[%s1 + $0xa48] sm:$0xff]
        %v556 = vld [vmem:[%s1 + $0xa50] sm:$0xff]
        %v557 = vld [vmem:[%s1 + $0xa58] sm:$0xff]
        %v558 = vld [vmem:[%s1 + $0xa60] sm:$0xff]
        %v559 = vld [vmem:[%s1 + $0xa68] sm:$0xff]
        %v560 = vld [vmem:[%s1 + $0xa70] sm:$0xff]
        %v561 = vld [vmem:[%s1 + $0xa78] sm:$0xff]
        %v562 = vld [vmem:[%s1 + $0xa80] sm:$0xff]
        %v563 = vld [vmem:[%s1 + $0xa88] sm:$0xff]
        %v564 = vld [vmem:[%s1 + $0xa90] sm:$0xff]
        %v565 = vld [vmem:[%s1 + $0xa98] sm:$0xff]
        %v566 = vld [vmem:[%s1 + $0xaa0] sm:$0xff]
        %v567 = vld [vmem:[%s1 + $0xaa8] sm:$0xff]
        %v568 = vld [vmem:[%s1 + $0xab0] sm:$0xff]
        %v569 = vld [vmem:[%s1 + $0xab8] sm:$0xff]
        %v570 = vld [vmem:[%s1 + $0xac0] sm:$0xff]
        %v571 = vld [vmem:[%s1 + $0xac8] sm:$0xff]
        %v572 = vld [vmem:[%s1 + $0xad0] sm:$0xff]
        %v573 = vld [vmem:[%s1 + $0xad8] sm:$0xff]
        %v574 = vld [vmem:[%s1 + $0xae0] sm:$0xff]
        %v575 = vld [vmem:[%s1 + $0xae8] sm:$0xff]
        %v576 = vld [vmem:[%s1 + $0xaf0] sm:$0xff]
        %v577 = vld [vmem:[%s1 + $0xaf8] sm:$0xff]
        %v578 = vld [vmem:[%s1 + $0xb00] sm:$0xff]
        %v579 = vld [vmem:[%s1 + $0xb08] sm:$0xff]
        %v580 = vld [vmem:[%s1 + $0xb10] sm:$0xff]
        %v581 = vld [vmem:[%s1 + $0xb18] sm:$0xff]
        %v582 = vld [vmem:[%s1 + $0xb20] sm:$0xff]
        %v583 = vld [vmem:[%s1 + $0xb28] sm:$0xff]
        %v584 = vld [vmem:[%s1 + $0xb30] sm:$0xff]
        %v585 = vld [vmem:[%s1 + $0xb38] sm:$0xff]
        %v586 = vld [vmem:[%s1 + $0xb40] sm:$0xff]
        %v587 = vld [vmem:[%s1 + $0xb48] sm:$0xff]
        %v588 = vld [vmem:[%s1 + $0xb50] sm:$0xff]
        %v589 = vld [vmem:[%s1 + $0xb58] sm:$0xff]
        %v590 = vld [vmem:[%s1 + $0xb60] sm:$0xff]
        %v591 = vld [vmem:[%s1 + $0xb68] sm:$0xff]
        %v592 = vld [vmem:[%s1 + $0xb70] sm:$0xff]
        %v593 = vld [vmem:[%s1 + $0xb78] sm:$0xff]
        %v594 = vld [vmem:[%s1 + $0xb80] sm:$0xff]
        %v595 = vld [vmem:[%s1 + $0xb88] sm:$0xff]
        %v596 = vld [vmem:[%s1 + $0xb90] sm:$0xff]
        %v597 = vld [vmem:[%s1 + $0xb98] sm:$0xff]
        %v598 = vld [vmem:[%s1 + $0xba0] sm:$0xff]
        %v599 = vld [vmem:[%s1 + $0xba8] sm:$0xff]
        %v600 = vld [vmem:[%s1 + $0xbb0] sm:$0xff]
        %v601 = vld [vmem:[%s1 + $0xbb8] sm:$0xff]
        %v602 = vld [vmem:[%s1 + $0xbc0] sm:$0xff]
        %v603 = vld [vmem:[%s1 + $0xbc8] sm:$0xff]
        %v604 = vld [vmem:[%s1 + $0xbd0] sm:$0xff]
        %v605 = vld [vmem:[%s1 + $0xbd8] sm:$0xff]
        %v606 = vld [vmem:[%s1 + $0xbe0] sm:$0xff]
        %v607 = vld [vmem:[%s1 + $0xbe8] sm:$0xff]
        %v608 = vld [vmem:[%s1 + $0xbf0] sm:$0xff]
        %v609 = vld [vmem:[%s1 + $0xbf8] sm:$0xff]
        %v610 = vld [vmem:[%s1 + $0xc00] sm:$0xff]
        %v611 = vld [vmem:[%s1 + $0xc08] sm:$0xff]
        %v612 = vld [vmem:[%s1 + $0xc10] sm:$0xff]
        %v613 = vld [vmem:[%s1 + $0xc18] sm:$0xff]
        %v614 = vld [vmem:[%s1 + $0xc20] sm:$0xff]
        %v615 = vld [vmem:[%s1 + $0xc28] sm:$0xff]
        %v616 = vld [vmem:[%s1 + $0xc30] sm:$0xff]
        %v617 = vld [vmem:[%s1 + $0xc38] sm:$0xff]
        %v618 = vld [vmem:[%s2] sm:$0xff]
        %v619 = vld [vmem:[%s2 + $0x8] sm:$0x3f]
        %v622 = vperm.slane %v618, 0
        %v623 = vperm.slane %v618, 1
        %v624 = vperm.slane %v618, 2
        %v625 = vperm.slane %v618, 3
        %v626 = vperm.slane %v618, 4
        %v627 = vperm.slane %v618, 5
        %v628 = vperm.slane %v618, 6
        %v629 = vperm.slane %v618, 7
        %v630 = vperm.slane %v619, 0
        %v631 = vperm.slane %v619, 1
        %v632 = vperm.slane %v619, 2
        %v633 = vperm.slane %v619, 3
        %v634 = vperm.slane %v619, 4
        %v635 = vperm.slane %v619, 5
        %v652 = vunpack.c.l.b16 %v224
        %v653 = vunpack.c.h.b16 %v224
        %v654 = vunpack.c.l.b16 %v225
        %v655 = vunpack.c.h.b16 %v225
        %v656 = vpack.c.b16 %v652, %v652
        %v657 = vpack.c.b16 %v653, %v653
        %v658 = vpack.c.b16 %v654, %v654
        %v659 = vpack.c.b16 %v655, %v655
        %v1055 = vunpack.c.l.b16 %v226
        %v1056 = vunpack.c.h.b16 %v226
        %v1057 = vunpack.c.l.b16 %v227
        %v1058 = vunpack.c.h.b16 %v227
        %v1059 = vunpack.c.l.b16 %v228
        %v1060 = vunpack.c.h.b16 %v228
        %v1061 = vunpack.c.l.b16 %v229
        %v1062 = vunpack.c.h.b16 %v229
        %v1063 = vunpack.c.l.b16 %v230
        %v1064 = vunpack.c.h.b16 %v230
        %v1065 = vunpack.c.l.b16 %v231
        %v1066 = vunpack.c.h.b16 %v231
        %v1067 = vunpack.c.l.b16 %v232
        %v1068 = vunpack.c.h.b16 %v232
        %v1069 = vunpack.c.l.b16 %v233
        %v1070 = vunpack.c.h.b16 %v233
        %v1071 = vunpack.c.l.b16 %v234
        %v1072 = vunpack.c.h.b16 %v234
        %v1073 = vunpack.c.l.b16 %v235
        %v1074 = vunpack.c.h.b16 %v235
        %v1075 = vunpack.c.l.b16 %v236
        %v1076 = vunpack.c.h.b16 %v236
        %v1077 = vunpack.c.l.b16 %v237
        %v1078 = vunpack.c.h.b16 %v237
        %v1079 = vunpack.c.l.b16 %v238
        %v1080 = vunpack.c.h.b16 %v238
        %v1081 = vunpack.c.l.b16 %v239
        %v1082 = vunpack.c.h.b16 %v239
        %v1083 = vunpack.c.l.b16 %v240
        %v1084 = vunpack.c.h.b16 %v240
        %v1085 = vunpack.c.l.b16 %v241
        %v1086 = vunpack.c.h.b16 %v241
        %v1087 = vunpack.c.l.b16 %v242
        %v1088 = vunpack.c.h.b16 %v242
        %v1089 = vunpack.c.l.b16 %v243
        %v1090 = vunpack.c.h.b16 %v243
        %v1091 = vunpack.c.l.b16 %v244
        %v1092 = vunpack.c.h.b16 %v244
        %v1093 = vunpack.c.l.b16 %v245
        %v1094 = vunpack.c.h.b16 %v245
        %v1095 = vunpack.c.l.b16 %v246
        %v1096 = vunpack.c.h.b16 %v246
        %v1097 = vunpack.c.l.b16 %v247
        %v1098 = vunpack.c.h.b16 %v247
        %v1099 = vunpack.c.l.b16 %v248
        %v1100 = vunpack.c.h.b16 %v248
        %v1101 = vunpack.c.l.b16 %v249
        %v1102 = vunpack.c.h.b16 %v249
        %v1103 = vunpack.c.l.b16 %v250
        %v1104 = vunpack.c.h.b16 %v250
        %v1105 = vunpack.c.l.b16 %v251
        %v1106 = vunpack.c.h.b16 %v251
        %v1107 = vunpack.c.l.b16 %v252
        %v1108 = vunpack.c.h.b16 %v252
        %v1109 = vunpack.c.l.b16 %v253
        %v1110 = vunpack.c.h.b16 %v253
        %v1111 = vunpack.c.l.b16 %v254
        %v1112 = vunpack.c.h.b16 %v254
        %v1113 = vunpack.c.l.b16 %v255
        %v1114 = vunpack.c.h.b16 %v255
        %v1115 = vunpack.c.l.b16 %v256
        %v1116 = vunpack.c.h.b16 %v256
        %v1117 = vunpack.c.l.b16 %v257
        %v1118 = vunpack.c.h.b16 %v257
        %v1119 = vunpack.c.l.b16 %v258
        %v1120 = vunpack.c.h.b16 %v258
        %v1121 = vunpack.c.l.b16 %v259
        %v1122 = vunpack.c.h.b16 %v259
        %v1123 = vunpack.c.l.b16 %v260
        %v1124 = vunpack.c.h.b16 %v260
        %v1125 = vunpack.c.l.b16 %v261
        %v1126 = vunpack.c.h.b16 %v261
        %v1127 = vunpack.c.l.b16 %v262
        %v1128 = vunpack.c.h.b16 %v262
        %v1129 = vunpack.c.l.b16 %v263
        %v1130 = vunpack.c.h.b16 %v263
        %v1131 = vunpack.c.l.b16 %v264
        %v1132 = vunpack.c.h.b16 %v264
        %v1133 = vunpack.c.l.b16 %v265
        %v1134 = vunpack.c.h.b16 %v265
        %v1135 = vunpack.c.l.b16 %v266
        %v1136 = vunpack.c.h.b16 %v266
        %v1137 = vunpack.c.l.b16 %v267
        %v1138 = vunpack.c.h.b16 %v267
        %v1139 = vunpack.c.l.b16 %v268
        %v1140 = vunpack.c.h.b16 %v268
        %v1141 = vunpack.c.l.b16 %v269
        %v1142 = vunpack.c.h.b16 %v269
        %v1143 = vunpack.c.l.b16 %v270
        %v1144 = vunpack.c.h.b16 %v270
        %v1145 = vunpack.c.l.b16 %v271
        %v1146 = vunpack.c.h.b16 %v271
        %v1147 = vunpack.c.l.b16 %v272
        %v1148 = vunpack.c.h.b16 %v272
        %v1149 = vunpack.c.l.b16 %v273
        %v1150 = vunpack.c.h.b16 %v273
        %v1151 = vunpack.c.l.b16 %v274
        %v1152 = vunpack.c.h.b16 %v274
        %v1153 = vunpack.c.l.b16 %v275
        %v1154 = vunpack.c.h.b16 %v275
        %v1155 = vunpack.c.l.b16 %v276
        %v1156 = vunpack.c.h.b16 %v276
        %v1157 = vunpack.c.l.b16 %v277
        %v1158 = vunpack.c.h.b16 %v277
        %v1159 = vunpack.c.l.b16 %v278
        %v1160 = vunpack.c.h.b16 %v278
        %v1161 = vunpack.c.l.b16 %v279
        %v1162 = vunpack.c.h.b16 %v279
        %v1163 = vunpack.c.l.b16 %v280
        %v1164 = vunpack.c.h.b16 %v280
        %v1165 = vunpack.c.l.b16 %v281
        %v1166 = vunpack.c.h.b16 %v281
        %v1167 = vunpack.c.l.b16 %v282
        %v1168 = vunpack.c.h.b16 %v282
        %v1169 = vunpack.c.l.b16 %v283
        %v1170 = vunpack.c.h.b16 %v283
        %v1171 = vunpack.c.l.b16 %v284
        %v1172 = vunpack.c.h.b16 %v284
        %v1173 = vunpack.c.l.b16 %v285
        %v1174 = vunpack.c.h.b16 %v285
        %v1175 = vunpack.c.l.b16 %v286
        %v1176 = vunpack.c.h.b16 %v286
        %v1177 = vunpack.c.l.b16 %v287
        %v1178 = vunpack.c.h.b16 %v287
        %v1179 = vunpack.c.l.b16 %v288
        %v1180 = vunpack.c.h.b16 %v288
        %v1181 = vunpack.c.l.b16 %v289
        %v1182 = vunpack.c.h.b16 %v289
        %v1183 = vunpack.c.l.b16 %v290
        %v1184 = vunpack.c.h.b16 %v290
        %v1185 = vunpack.c.l.b16 %v291
        %v1186 = vunpack.c.h.b16 %v291
        %v1187 = vunpack.c.l.b16 %v292
        %v1188 = vunpack.c.h.b16 %v292
        %v1189 = vunpack.c.l.b16 %v293
        %v1190 = vunpack.c.h.b16 %v293
        %v1191 = vunpack.c.l.b16 %v294
        %v1192 = vunpack.c.h.b16 %v294
        %v1193 = vunpack.c.l.b16 %v295
        %v1194 = vunpack.c.h.b16 %v295
        %v1195 = vunpack.c.l.b16 %v296
        %v1196 = vunpack.c.h.b16 %v296
        %v1197 = vunpack.c.l.b16 %v297
        %v1198 = vunpack.c.h.b16 %v297
        %v1199 = vunpack.c.l.b16 %v298
        %v1200 = vunpack.c.h.b16 %v298
        %v1201 = vunpack.c.l.b16 %v299
        %v1202 = vunpack.c.h.b16 %v299
        %v1203 = vunpack.c.l.b16 %v300
        %v1204 = vunpack.c.h.b16 %v300
        %v1205 = vunpack.c.l.b16 %v301
        %v1206 = vunpack.c.h.b16 %v301
        %v1207 = vunpack.c.l.b16 %v302
        %v1208 = vunpack.c.h.b16 %v302
        %v1209 = vunpack.c.l.b16 %v303
        %v1210 = vunpack.c.h.b16 %v303
        %v1211 = vunpack.c.l.b16 %v304
        %v1212 = vunpack.c.h.b16 %v304
        %v1213 = vunpack.c.l.b16 %v305
        %v1214 = vunpack.c.h.b16 %v305
        %v1215 = vunpack.c.l.b16 %v306
        %v1216 = vunpack.c.h.b16 %v306
        %v1217 = vunpack.c.l.b16 %v307
        %v1218 = vunpack.c.h.b16 %v307
        %v1219 = vunpack.c.l.b16 %v308
        %v1220 = vunpack.c.h.b16 %v308
        %v1221 = vunpack.c.l.b16 %v309
        %v1222 = vunpack.c.h.b16 %v309
        %v1223 = vunpack.c.l.b16 %v310
        %v1224 = vunpack.c.h.b16 %v310
        %v1225 = vunpack.c.l.b16 %v311
        %v1226 = vunpack.c.h.b16 %v311
        %v1227 = vunpack.c.l.b16 %v312
        %v1228 = vunpack.c.h.b16 %v312
        %v1229 = vunpack.c.l.b16 %v313
        %v1230 = vunpack.c.h.b16 %v313
        %v1231 = vunpack.c.l.b16 %v314
        %v1232 = vunpack.c.h.b16 %v314
        %v1233 = vunpack.c.l.b16 %v315
        %v1234 = vunpack.c.h.b16 %v315
        %v1235 = vunpack.c.l.b16 %v316
        %v1236 = vunpack.c.h.b16 %v316
        %v1237 = vunpack.c.l.b16 %v317
        %v1238 = vunpack.c.h.b16 %v317
        %v1239 = vunpack.c.l.b16 %v318
        %v1240 = vunpack.c.h.b16 %v318
        %v1241 = vunpack.c.l.b16 %v319
        %v1242 = vunpack.c.h.b16 %v319
        %v1243 = vunpack.c.l.b16 %v320
        %v1244 = vunpack.c.h.b16 %v320
        %v1245 = vunpack.c.l.b16 %v321
        %v1246 = vunpack.c.h.b16 %v321
        %v1247 = vunpack.c.l.b16 %v322
        %v1248 = vunpack.c.h.b16 %v322
        %v1249 = vunpack.c.l.b16 %v323
        %v1250 = vunpack.c.h.b16 %v323
        %v1251 = vunpack.c.l.b16 %v324
        %v1252 = vunpack.c.h.b16 %v324
        %v1253 = vunpack.c.l.b16 %v325
        %v1254 = vunpack.c.h.b16 %v325
        %v1255 = vunpack.c.l.b16 %v326
        %v1256 = vunpack.c.h.b16 %v326
        %v1257 = vunpack.c.l.b16 %v327
        %v1258 = vunpack.c.h.b16 %v327
        %v1259 = vunpack.c.l.b16 %v328
        %v1260 = vunpack.c.h.b16 %v328
        %v1261 = vunpack.c.l.b16 %v329
        %v1262 = vunpack.c.h.b16 %v329
        %v1263 = vunpack.c.l.b16 %v330
        %v1264 = vunpack.c.h.b16 %v330
        %v1265 = vunpack.c.l.b16 %v331
        %v1266 = vunpack.c.h.b16 %v331
        %v1267 = vunpack.c.l.b16 %v332
        %v1268 = vunpack.c.h.b16 %v332
        %v1269 = vunpack.c.l.b16 %v333
        %v1270 = vunpack.c.h.b16 %v333
        %v1271 = vunpack.c.l.b16 %v334
        %v1272 = vunpack.c.h.b16 %v334
        %v1273 = vunpack.c.l.b16 %v335
        %v1274 = vunpack.c.h.b16 %v335
        %v1275 = vunpack.c.l.b16 %v336
        %v1276 = vunpack.c.h.b16 %v336
        %v1277 = vunpack.c.l.b16 %v337
        %v1278 = vunpack.c.h.b16 %v337
        %v1279 = vunpack.c.l.b16 %v338
        %v1280 = vunpack.c.h.b16 %v338
        %v1281 = vunpack.c.l.b16 %v339
        %v1282 = vunpack.c.h.b16 %v339
        %v1283 = vunpack.c.l.b16 %v340
        %v1284 = vunpack.c.h.b16 %v340
        %v1285 = vunpack.c.l.b16 %v341
        %v1286 = vunpack.c.h.b16 %v341
        %v1287 = vunpack.c.l.b16 %v342
        %v1288 = vunpack.c.h.b16 %v342
        %v1289 = vunpack.c.l.b16 %v343
        %v1290 = vunpack.c.h.b16 %v343
        %v1291 = vunpack.c.l.b16 %v344
        %v1292 = vunpack.c.h.b16 %v344
        %v1293 = vunpack.c.l.b16 %v345
        %v1294 = vunpack.c.h.b16 %v345
        %v1295 = vunpack.c.l.b16 %v346
        %v1296 = vunpack.c.h.b16 %v346
        %v1297 = vunpack.c.l.b16 %v347
        %v1298 = vunpack.c.h.b16 %v347
        %v1299 = vunpack.c.l.b16 %v348
        %v1300 = vunpack.c.h.b16 %v348
        %v1301 = vunpack.c.l.b16 %v349
        %v1302 = vunpack.c.h.b16 %v349
        %v1303 = vunpack.c.l.b16 %v350
        %v1304 = vunpack.c.h.b16 %v350
        %v1305 = vunpack.c.l.b16 %v351
        %v1306 = vunpack.c.h.b16 %v351
        %v1307 = vunpack.c.l.b16 %v352
        %v1308 = vunpack.c.h.b16 %v352
        %v1309 = vunpack.c.l.b16 %v353
        %v1310 = vunpack.c.h.b16 %v353
        %v1311 = vunpack.c.l.b16 %v354
        %v1312 = vunpack.c.h.b16 %v354
        %v1313 = vunpack.c.l.b16 %v355
        %v1314 = vunpack.c.h.b16 %v355
        %v1315 = vunpack.c.l.b16 %v356
        %v1316 = vunpack.c.h.b16 %v356
        %v1317 = vunpack.c.l.b16 %v357
        %v1318 = vunpack.c.h.b16 %v357
        %v1319 = vunpack.c.l.b16 %v358
        %v1320 = vunpack.c.h.b16 %v358
        %v1321 = vunpack.c.l.b16 %v359
        %v1322 = vunpack.c.h.b16 %v359
        %v1323 = vunpack.c.l.b16 %v360
        %v1324 = vunpack.c.h.b16 %v360
        %v1325 = vunpack.c.l.b16 %v361
        %v1326 = vunpack.c.h.b16 %v361
        %v1327 = vunpack.c.l.b16 %v362
        %v1328 = vunpack.c.h.b16 %v362
        %v1329 = vunpack.c.l.b16 %v363
        %v1330 = vunpack.c.h.b16 %v363
        %v1331 = vunpack.c.l.b16 %v364
        %v1332 = vunpack.c.h.b16 %v364
        %v1333 = vunpack.c.l.b16 %v365
        %v1334 = vunpack.c.h.b16 %v365
        %v1335 = vunpack.c.l.b16 %v366
        %v1336 = vunpack.c.h.b16 %v366
        %v1337 = vunpack.c.l.b16 %v367
        %v1338 = vunpack.c.h.b16 %v367
        %v1339 = vunpack.c.l.b16 %v368
        %v1340 = vunpack.c.h.b16 %v368
        %v1341 = vunpack.c.l.b16 %v369
        %v1342 = vunpack.c.h.b16 %v369
        %v1343 = vunpack.c.l.b16 %v370
        %v1344 = vunpack.c.h.b16 %v370
        %v1345 = vunpack.c.l.b16 %v371
        %v1346 = vunpack.c.h.b16 %v371
        %v1347 = vunpack.c.l.b16 %v372
        %v1348 = vunpack.c.h.b16 %v372
        %v1349 = vunpack.c.l.b16 %v373
        %v1350 = vunpack.c.h.b16 %v373
        %v1351 = vunpack.c.l.b16 %v374
        %v1352 = vunpack.c.h.b16 %v374
        %v1353 = vunpack.c.l.b16 %v375
        %v1354 = vunpack.c.h.b16 %v375
        %v1355 = vunpack.c.l.b16 %v376
        %v1356 = vunpack.c.h.b16 %v376
        %v1357 = vunpack.c.l.b16 %v377
        %v1358 = vunpack.c.h.b16 %v377
        %v1359 = vunpack.c.l.b16 %v378
        %v1360 = vunpack.c.h.b16 %v378
        %v1361 = vunpack.c.l.b16 %v379
        %v1362 = vunpack.c.h.b16 %v379
        %v1363 = vunpack.c.l.b16 %v380
        %v1364 = vunpack.c.h.b16 %v380
        %v1365 = vunpack.c.l.b16 %v381
        %v1366 = vunpack.c.h.b16 %v381
        %v1367 = vunpack.c.l.b16 %v382
        %v1368 = vunpack.c.h.b16 %v382
        %v1369 = vunpack.c.l.b16 %v383
        %v1370 = vunpack.c.h.b16 %v383
        %v1371 = vunpack.c.l.b16 %v384
        %v1372 = vunpack.c.h.b16 %v384
        %v1373 = vunpack.c.l.b16 %v385
        %v1374 = vunpack.c.h.b16 %v385
        %v1375 = vunpack.c.l.b16 %v386
        %v1376 = vunpack.c.h.b16 %v386
        %v1377 = vunpack.c.l.b16 %v387
        %v1378 = vunpack.c.h.b16 %v387
        %v1379 = vunpack.c.l.b16 %v388
        %v1380 = vunpack.c.h.b16 %v388
        %v1381 = vunpack.c.l.b16 %v389
        %v1382 = vunpack.c.h.b16 %v389
        %v1383 = vunpack.c.l.b16 %v390
        %v1384 = vunpack.c.h.b16 %v390
        %v1385 = vunpack.c.l.b16 %v391
        %v1386 = vunpack.c.h.b16 %v391
        %v1387 = vunpack.c.l.b16 %v392
        %v1388 = vunpack.c.h.b16 %v392
        %v1389 = vunpack.c.l.b16 %v393
        %v1390 = vunpack.c.h.b16 %v393
        %v1391 = vunpack.c.l.b16 %v394
        %v1392 = vunpack.c.h.b16 %v394
        %v1393 = vunpack.c.l.b16 %v395
        %v1394 = vunpack.c.h.b16 %v395
        %v1395 = vunpack.c.l.b16 %v396
        %v1396 = vunpack.c.h.b16 %v396
        %v1397 = vunpack.c.l.b16 %v397
        %v1398 = vunpack.c.h.b16 %v397
        %v1399 = vunpack.c.l.b16 %v398
        %v1400 = vunpack.c.h.b16 %v398
        %v1401 = vunpack.c.l.b16 %v399
        %v1402 = vunpack.c.h.b16 %v399
        %v1403 = vunpack.c.l.b16 %v400
        %v1404 = vunpack.c.h.b16 %v400
        %v1405 = vunpack.c.l.b16 %v401
        %v1406 = vunpack.c.h.b16 %v401
        %v1407 = vunpack.c.l.b16 %v402
        %v1408 = vunpack.c.h.b16 %v402
        %v1409 = vunpack.c.l.b16 %v403
        %v1410 = vunpack.c.h.b16 %v403
        %v1411 = vunpack.c.l.b16 %v404
        %v1412 = vunpack.c.h.b16 %v404
        %v1413 = vunpack.c.l.b16 %v405
        %v1414 = vunpack.c.h.b16 %v405
        %v1415 = vunpack.c.l.b16 %v406
        %v1416 = vunpack.c.h.b16 %v406
        %v1417 = vunpack.c.l.b16 %v407
        %v1418 = vunpack.c.h.b16 %v407
        %v1419 = vunpack.c.l.b16 %v408
        %v1420 = vunpack.c.h.b16 %v408
        %v1421 = vunpack.c.l.b16 %v409
        %v1422 = vunpack.c.h.b16 %v409
        %v1423 = vunpack.c.l.b16 %v410
        %v1424 = vunpack.c.h.b16 %v410
        %v1425 = vunpack.c.l.b16 %v411
        %v1426 = vunpack.c.h.b16 %v411
        %v1427 = vunpack.c.l.b16 %v412
        %v1428 = vunpack.c.h.b16 %v412
        %v1429 = vunpack.c.l.b16 %v413
        %v1430 = vunpack.c.h.b16 %v413
        %v1431 = vunpack.c.l.b16 %v414
        %v1432 = vunpack.c.h.b16 %v414
        %v1433 = vunpack.c.l.b16 %v415
        %v1434 = vunpack.c.h.b16 %v415
        %v1435 = vunpack.c.l.b16 %v416
        %v1436 = vunpack.c.h.b16 %v416
        %v1437 = vunpack.c.l.b16 %v417
        %v1438 = vunpack.c.h.b16 %v417
        %v1439 = vunpack.c.l.b16 %v418
        %v1440 = vunpack.c.h.b16 %v418
        %v1441 = vunpack.c.l.b16 %v419
        %v1442 = vunpack.c.h.b16 %v419
        %v1443 = vunpack.c.l.b16 %v420
        %v1444 = vunpack.c.h.b16 %v420
        %v1445 = vunpack.c.l.b16 %v421
        %v1446 = vunpack.c.h.b16 %v421
        %v1447 = vunpack.c.l.b16 %v422
        %v1448 = vunpack.c.h.b16 %v422
        %v1449 = vunpack.c.l.b16 %v423
        %v1450 = vunpack.c.h.b16 %v423
        %v1451 = vunpack.c.l.b16 %v424
        %v1452 = vunpack.c.h.b16 %v424
        %v1453 = vunpack.c.l.b16 %v425
        %v1454 = vunpack.c.h.b16 %v425
        %v1455 = vunpack.c.l.b16 %v426
        %v1456 = vunpack.c.h.b16 %v426
        %v1457 = vunpack.c.l.b16 %v427
        %v1458 = vunpack.c.h.b16 %v427
        %v1459 = vunpack.c.l.b16 %v428
        %v1460 = vunpack.c.h.b16 %v428
        %v1461 = vunpack.c.l.b16 %v429
        %v1462 = vunpack.c.h.b16 %v429
        %v1463 = vunpack.c.l.b16 %v430
        %v1464 = vunpack.c.h.b16 %v430
        %v1465 = vunpack.c.l.b16 %v431
        %v1466 = vunpack.c.h.b16 %v431
        %v1467 = vunpack.c.l.b16 %v432
        %v1468 = vunpack.c.h.b16 %v432
        %v1469 = vunpack.c.l.b16 %v433
        %v1470 = vunpack.c.h.b16 %v433
        %v1471 = vunpack.c.l.b16 %v434
        %v1472 = vunpack.c.h.b16 %v434
        %v1473 = vunpack.c.l.b16 %v435
        %v1474 = vunpack.c.h.b16 %v435
        %v1475 = vunpack.c.l.b16 %v436
        %v1476 = vunpack.c.h.b16 %v436
        %v1477 = vunpack.c.l.b16 %v437
        %v1478 = vunpack.c.h.b16 %v437
        %v1479 = vunpack.c.l.b16 %v438
        %v1480 = vunpack.c.h.b16 %v438
        %v1481 = vunpack.c.l.b16 %v439
        %v1482 = vunpack.c.h.b16 %v439
        %v1483 = vunpack.c.l.b16 %v440
        %v1484 = vunpack.c.h.b16 %v440
        %v1485 = vunpack.c.l.b16 %v441
        %v1486 = vunpack.c.h.b16 %v441
        %v1487 = vunpack.c.l.b16 %v442
        %v1488 = vunpack.c.h.b16 %v442
        %v1489 = vunpack.c.l.b16 %v443
        %v1490 = vunpack.c.h.b16 %v443
        %v1491 = vunpack.c.l.b16 %v444
        %v1492 = vunpack.c.h.b16 %v444
        %v1493 = vunpack.c.l.b16 %v445
        %v1494 = vunpack.c.h.b16 %v445
        %v1495 = vunpack.c.l.b16 %v446
        %v1496 = vunpack.c.h.b16 %v446
        %v1497 = vunpack.c.l.b16 %v447
        %v1498 = vunpack.c.h.b16 %v447
        %v1499 = vunpack.c.l.b16 %v448
        %v1500 = vunpack.c.h.b16 %v448
        %v1501 = vunpack.c.l.b16 %v449
        %v1502 = vunpack.c.h.b16 %v449
        %v1503 = vunpack.c.l.b16 %v450
        %v1504 = vunpack.c.h.b16 %v450
        %v1505 = vunpack.c.l.b16 %v451
        %v1506 = vunpack.c.h.b16 %v451
        %v1507 = vunpack.c.l.b16 %v452
        %v1508 = vunpack.c.h.b16 %v452
        %v1509 = vunpack.c.l.b16 %v453
        %v1510 = vunpack.c.h.b16 %v453
        %v1511 = vunpack.c.l.b16 %v454
        %v1512 = vunpack.c.h.b16 %v454
        %v1513 = vunpack.c.l.b16 %v455
        %v1514 = vunpack.c.h.b16 %v455
        %v1515 = vunpack.c.l.b16 %v456
        %v1516 = vunpack.c.h.b16 %v456
        %v1517 = vunpack.c.l.b16 %v457
        %v1518 = vunpack.c.h.b16 %v457
        %v1519 = vunpack.c.l.b16 %v458
        %v1520 = vunpack.c.h.b16 %v458
        %v1521 = vunpack.c.l.b16 %v459
        %v1522 = vunpack.c.h.b16 %v459
        %v1523 = vunpack.c.l.b16 %v460
        %v1524 = vunpack.c.h.b16 %v460
        %v1525 = vunpack.c.l.b16 %v461
        %v1526 = vunpack.c.h.b16 %v461
        %v1527 = vunpack.c.l.b16 %v462
        %v1528 = vunpack.c.h.b16 %v462
        %v1529 = vunpack.c.l.b16 %v463
        %v1530 = vunpack.c.h.b16 %v463
        %v1531 = vunpack.c.l.b16 %v464
        %v1532 = vunpack.c.h.b16 %v464
        %v1533 = vunpack.c.l.b16 %v465
        %v1534 = vunpack.c.h.b16 %v465
        %v1535 = vunpack.c.l.b16 %v466
        %v1536 = vunpack.c.h.b16 %v466
        %v1537 = vunpack.c.l.b16 %v467
        %v1538 = vunpack.c.h.b16 %v467
        %v1539 = vunpack.c.l.b16 %v468
        %v1540 = vunpack.c.h.b16 %v468
        %v1541 = vunpack.c.l.b16 %v469
        %v1542 = vunpack.c.h.b16 %v469
        %v1543 = vunpack.c.l.b16 %v470
        %v1544 = vunpack.c.h.b16 %v470
        %v1545 = vunpack.c.l.b16 %v471
        %v1546 = vunpack.c.h.b16 %v471
        %v1547 = vunpack.c.l.b16 %v472
        %v1548 = vunpack.c.h.b16 %v472
        %v1549 = vunpack.c.l.b16 %v473
        %v1550 = vunpack.c.h.b16 %v473
        %v1551 = vunpack.c.l.b16 %v474
        %v1552 = vunpack.c.h.b16 %v474
        %v1553 = vunpack.c.l.b16 %v475
        %v1554 = vunpack.c.h.b16 %v475
        %v1555 = vunpack.c.l.b16 %v476
        %v1556 = vunpack.c.h.b16 %v476
        %v1557 = vunpack.c.l.b16 %v477
        %v1558 = vunpack.c.h.b16 %v477
        %v1559 = vunpack.c.l.b16 %v478
        %v1560 = vunpack.c.h.b16 %v478
        %v1561 = vunpack.c.l.b16 %v479
        %v1562 = vunpack.c.h.b16 %v479
        %v1563 = vunpack.c.l.b16 %v480
        %v1564 = vunpack.c.h.b16 %v480
        %v1565 = vunpack.c.l.b16 %v481
        %v1566 = vunpack.c.h.b16 %v481
        %v1567 = vunpack.c.l.b16 %v482
        %v1568 = vunpack.c.h.b16 %v482
        %v1569 = vunpack.c.l.b16 %v483
        %v1570 = vunpack.c.h.b16 %v483
        %v1571 = vunpack.c.l.b16 %v484
        %v1572 = vunpack.c.h.b16 %v484
        %v1573 = vunpack.c.l.b16 %v485
        %v1574 = vunpack.c.h.b16 %v485
        %v1575 = vunpack.c.l.b16 %v486
        %v1576 = vunpack.c.h.b16 %v486
        %v1577 = vunpack.c.l.b16 %v487
        %v1578 = vunpack.c.h.b16 %v487
        %v1579 = vunpack.c.l.b16 %v488
        %v1580 = vunpack.c.h.b16 %v488
        %v1581 = vunpack.c.l.b16 %v489
        %v1582 = vunpack.c.h.b16 %v489
        %v1583 = vunpack.c.l.b16 %v490
        %v1584 = vunpack.c.h.b16 %v490
        %v1585 = vunpack.c.l.b16 %v491
        %v1586 = vunpack.c.h.b16 %v491
        %v1587 = vunpack.c.l.b16 %v492
        %v1588 = vunpack.c.h.b16 %v492
        %v1589 = vunpack.c.l.b16 %v493
        %v1590 = vunpack.c.h.b16 %v493
        %v1591 = vunpack.c.l.b16 %v494
        %v1592 = vunpack.c.h.b16 %v494
        %v1593 = vunpack.c.l.b16 %v495
        %v1594 = vunpack.c.h.b16 %v495
        %v1595 = vunpack.c.l.b16 %v496
        %v1596 = vunpack.c.h.b16 %v496
        %v1597 = vunpack.c.l.b16 %v497
        %v1598 = vunpack.c.h.b16 %v497
        %v1599 = vunpack.c.l.b16 %v498
        %v1600 = vunpack.c.h.b16 %v498
        %v1601 = vunpack.c.l.b16 %v499
        %v1602 = vunpack.c.h.b16 %v499
        %v1603 = vunpack.c.l.b16 %v500
        %v1604 = vunpack.c.h.b16 %v500
        %v1605 = vunpack.c.l.b16 %v501
        %v1606 = vunpack.c.h.b16 %v501
        %v1607 = vunpack.c.l.b16 %v502
        %v1608 = vunpack.c.h.b16 %v502
        %v1609 = vunpack.c.l.b16 %v503
        %v1610 = vunpack.c.h.b16 %v503
        %v1611 = vunpack.c.l.b16 %v504
        %v1612 = vunpack.c.h.b16 %v504
        %v1613 = vunpack.c.l.b16 %v505
        %v1614 = vunpack.c.h.b16 %v505
        %v1615 = vunpack.c.l.b16 %v506
        %v1616 = vunpack.c.h.b16 %v506
        %v1617 = vunpack.c.l.b16 %v507
        %v1618 = vunpack.c.h.b16 %v507
        %v1619 = vunpack.c.l.b16 %v508
        %v1620 = vunpack.c.h.b16 %v508
        %v1621 = vunpack.c.l.b16 %v509
        %v1622 = vunpack.c.h.b16 %v509
        %v1623 = vunpack.c.l.b16 %v510
        %v1624 = vunpack.c.h.b16 %v510
        %v1625 = vunpack.c.l.b16 %v511
        %v1626 = vunpack.c.h.b16 %v511
        %v1627 = vunpack.c.l.b16 %v512
        %v1628 = vunpack.c.h.b16 %v512
        %v1629 = vunpack.c.l.b16 %v513
        %v1630 = vunpack.c.h.b16 %v513
        %v1631 = vunpack.c.l.b16 %v514
        %v1632 = vunpack.c.h.b16 %v514
        %v1633 = vunpack.c.l.b16 %v515
        %v1634 = vunpack.c.h.b16 %v515
        %v1635 = vunpack.c.l.b16 %v516
        %v1636 = vunpack.c.h.b16 %v516
        %v1637 = vunpack.c.l.b16 %v517
        %v1638 = vunpack.c.h.b16 %v517
        %v1639 = vunpack.c.l.b16 %v518
        %v1640 = vunpack.c.h.b16 %v518
        %v1641 = vunpack.c.l.b16 %v519
        %v1642 = vunpack.c.h.b16 %v519
        %v1643 = vunpack.c.l.b16 %v520
        %v1644 = vunpack.c.h.b16 %v520
        %v1645 = vunpack.c.l.b16 %v521
        %v1646 = vunpack.c.h.b16 %v521
        %v1647 = vunpack.c.l.b16 %v522
        %v1648 = vunpack.c.h.b16 %v522
        %v1649 = vunpack.c.l.b16 %v523
        %v1650 = vunpack.c.h.b16 %v523
        %v1651 = vunpack.c.l.b16 %v524
        %v1652 = vunpack.c.h.b16 %v524
        %v1653 = vunpack.c.l.b16 %v525
        %v1654 = vunpack.c.h.b16 %v525
        %v1655 = vunpack.c.l.b16 %v526
        %v1656 = vunpack.c.h.b16 %v526
        %v1657 = vunpack.c.l.b16 %v527
        %v1658 = vunpack.c.h.b16 %v527
        %v1659 = vunpack.c.l.b16 %v528
        %v1660 = vunpack.c.h.b16 %v528
        %v1661 = vunpack.c.l.b16 %v529
        %v1662 = vunpack.c.h.b16 %v529
        %v1663 = vunpack.c.l.b16 %v530
        %v1664 = vunpack.c.h.b16 %v530
        %v1665 = vunpack.c.l.b16 %v531
        %v1666 = vunpack.c.h.b16 %v531
        %v1667 = vunpack.c.l.b16 %v532
        %v1668 = vunpack.c.h.b16 %v532
        %v1669 = vunpack.c.l.b16 %v533
        %v1670 = vunpack.c.h.b16 %v533
        %v1671 = vunpack.c.l.b16 %v534
        %v1672 = vunpack.c.h.b16 %v534
        %v1673 = vunpack.c.l.b16 %v535
        %v1674 = vunpack.c.h.b16 %v535
        %v1675 = vunpack.c.l.b16 %v536
        %v1676 = vunpack.c.h.b16 %v536
        %v1677 = vunpack.c.l.b16 %v537
        %v1678 = vunpack.c.h.b16 %v537
        %v1679 = vunpack.c.l.b16 %v538
        %v1680 = vunpack.c.h.b16 %v538
        %v1681 = vunpack.c.l.b16 %v539
        %v1682 = vunpack.c.h.b16 %v539
        %v1683 = vunpack.c.l.b16 %v540
        %v1684 = vunpack.c.h.b16 %v540
        %v1685 = vunpack.c.l.b16 %v541
        %v1686 = vunpack.c.h.b16 %v541
        %v1687 = vunpack.c.l.b16 %v542
        %v1688 = vunpack.c.h.b16 %v542
        %v1689 = vunpack.c.l.b16 %v543
        %v1690 = vunpack.c.h.b16 %v543
        %v1691 = vunpack.c.l.b16 %v544
        %v1692 = vunpack.c.h.b16 %v544
        %v1693 = vunpack.c.l.b16 %v545
        %v1694 = vunpack.c.h.b16 %v545
        %v1695 = vunpack.c.l.b16 %v546
        %v1696 = vunpack.c.h.b16 %v546
        %v1697 = vunpack.c.l.b16 %v547
        %v1698 = vunpack.c.h.b16 %v547
        %v1699 = vunpack.c.l.b16 %v548
        %v1700 = vunpack.c.h.b16 %v548
        %v1701 = vunpack.c.l.b16 %v549
        %v1702 = vunpack.c.h.b16 %v549
        %v1703 = vunpack.c.l.b16 %v550
        %v1704 = vunpack.c.h.b16 %v550
        %v1705 = vunpack.c.l.b16 %v551
        %v1706 = vunpack.c.h.b16 %v551
        %v1707 = vunpack.c.l.b16 %v552
        %v1708 = vunpack.c.h.b16 %v552
        %v1709 = vunpack.c.l.b16 %v553
        %v1710 = vunpack.c.h.b16 %v553
        %v1711 = vunpack.c.l.b16 %v554
        %v1712 = vunpack.c.h.b16 %v554
        %v1713 = vunpack.c.l.b16 %v555
        %v1714 = vunpack.c.h.b16 %v555
        %v1715 = vunpack.c.l.b16 %v556
        %v1716 = vunpack.c.h.b16 %v556
        %v1717 = vunpack.c.l.b16 %v557
        %v1718 = vunpack.c.h.b16 %v557
        %v1719 = vunpack.c.l.b16 %v558
        %v1720 = vunpack.c.h.b16 %v558
        %v1721 = vunpack.c.l.b16 %v559
        %v1722 = vunpack.c.h.b16 %v559
        %v1723 = vunpack.c.l.b16 %v560
        %v1724 = vunpack.c.h.b16 %v560
        %v1725 = vunpack.c.l.b16 %v561
        %v1726 = vunpack.c.h.b16 %v561
        %v1727 = vunpack.c.l.b16 %v562
        %v1728 = vunpack.c.h.b16 %v562
        %v1729 = vunpack.c.l.b16 %v563
        %v1730 = vunpack.c.h.b16 %v563
        %v1731 = vunpack.c.l.b16 %v564
        %v1732 = vunpack.c.h.b16 %v564
        %v1733 = vunpack.c.l.b16 %v565
        %v1734 = vunpack.c.h.b16 %v565
        %v1735 = vunpack.c.l.b16 %v566
        %v1736 = vunpack.c.h.b16 %v566
        %v1737 = vunpack.c.l.b16 %v567
        %v1738 = vunpack.c.h.b16 %v567
        %v1739 = vunpack.c.l.b16 %v568
        %v1740 = vunpack.c.h.b16 %v568
        %v1741 = vunpack.c.l.b16 %v569
        %v1742 = vunpack.c.h.b16 %v569
        %v1743 = vunpack.c.l.b16 %v570
        %v1744 = vunpack.c.h.b16 %v570
        %v1745 = vunpack.c.l.b16 %v571
        %v1746 = vunpack.c.h.b16 %v571
        %v1747 = vunpack.c.l.b16 %v572
        %v1748 = vunpack.c.h.b16 %v572
        %v1749 = vunpack.c.l.b16 %v573
        %v1750 = vunpack.c.h.b16 %v573
        %v1751 = vunpack.c.l.b16 %v574
        %v1752 = vunpack.c.h.b16 %v574
        %v1753 = vunpack.c.l.b16 %v575
        %v1754 = vunpack.c.h.b16 %v575
        %v1755 = vunpack.c.l.b16 %v576
        %v1756 = vunpack.c.h.b16 %v576
        %v1757 = vunpack.c.l.b16 %v577
        %v1758 = vunpack.c.h.b16 %v577
        %v1759 = vunpack.c.l.b16 %v578
        %v1760 = vunpack.c.h.b16 %v578
        %v1761 = vunpack.c.l.b16 %v579
        %v1762 = vunpack.c.h.b16 %v579
        %v1763 = vunpack.c.l.b16 %v580
        %v1764 = vunpack.c.h.b16 %v580
        %v1765 = vunpack.c.l.b16 %v581
        %v1766 = vunpack.c.h.b16 %v581
        %v1767 = vunpack.c.l.b16 %v582
        %v1768 = vunpack.c.h.b16 %v582
        %v1769 = vunpack.c.l.b16 %v583
        %v1770 = vunpack.c.h.b16 %v583
        %v1771 = vunpack.c.l.b16 %v584
        %v1772 = vunpack.c.h.b16 %v584
        %v1773 = vunpack.c.l.b16 %v585
        %v1774 = vunpack.c.h.b16 %v585
        %v1775 = vunpack.c.l.b16 %v586
        %v1776 = vunpack.c.h.b16 %v586
        %v1777 = vunpack.c.l.b16 %v587
        %v1778 = vunpack.c.h.b16 %v587
        %v1779 = vunpack.c.l.b16 %v588
        %v1780 = vunpack.c.h.b16 %v588
        %v1781 = vunpack.c.l.b16 %v589
        %v1782 = vunpack.c.h.b16 %v589
        %v1783 = vunpack.c.l.b16 %v590
        %v1784 = vunpack.c.h.b16 %v590
        %v1785 = vunpack.c.l.b16 %v591
        %v1786 = vunpack.c.h.b16 %v591
        %v1787 = vunpack.c.l.b16 %v592
        %v1788 = vunpack.c.h.b16 %v592
        %v1789 = vunpack.c.l.b16 %v593
        %v1790 = vunpack.c.h.b16 %v593
        %v1791 = vunpack.c.l.b16 %v594
        %v1792 = vunpack.c.h.b16 %v594
        %v1793 = vunpack.c.l.b16 %v595
        %v1794 = vunpack.c.h.b16 %v595
        %v1795 = vunpack.c.l.b16 %v596
        %v1796 = vunpack.c.h.b16 %v596
        %v1797 = vunpack.c.l.b16 %v597
        %v1798 = vunpack.c.h.b16 %v597
        %v1799 = vunpack.c.l.b16 %v598
        %v1800 = vunpack.c.h.b16 %v598
        %v1801 = vunpack.c.l.b16 %v599
        %v1802 = vunpack.c.h.b16 %v599
        %v1803 = vunpack.c.l.b16 %v600
        %v1804 = vunpack.c.h.b16 %v600
        %v1805 = vunpack.c.l.b16 %v601
        %v1806 = vunpack.c.h.b16 %v601
        %v1807 = vunpack.c.l.b16 %v602
        %v1808 = vunpack.c.h.b16 %v602
        %v1809 = vunpack.c.l.b16 %v603
        %v1810 = vunpack.c.h.b16 %v603
        %v1811 = vunpack.c.l.b16 %v604
        %v1812 = vunpack.c.h.b16 %v604
        %v1813 = vunpack.c.l.b16 %v605
        %v1814 = vunpack.c.h.b16 %v605
        %v1815 = vunpack.c.l.b16 %v606
        %v1816 = vunpack.c.h.b16 %v606
        %v1817 = vunpack.c.l.b16 %v607
        %v1818 = vunpack.c.h.b16 %v607
        %v1819 = vunpack.c.l.b16 %v608
        %v1820 = vunpack.c.h.b16 %v608
        %v1821 = vunpack.c.l.b16 %v609
        %v1822 = vunpack.c.h.b16 %v609
        %v1823 = vunpack.c.l.b16 %v610
        %v1824 = vunpack.c.h.b16 %v610
        %v1825 = vunpack.c.l.b16 %v611
        %v1826 = vunpack.c.h.b16 %v611
        %v1827 = vunpack.c.l.b16 %v612
        %v1828 = vunpack.c.h.b16 %v612
        %v1829 = vunpack.c.l.b16 %v613
        %v1830 = vunpack.c.h.b16 %v613
        %v1831 = vunpack.c.l.b16 %v614
        %v1832 = vunpack.c.h.b16 %v614
        %v1833 = vunpack.c.l.b16 %v615
        %v1834 = vunpack.c.h.b16 %v615
        %v1835 = vunpack.c.l.b16 %v616
        %v1836 = vunpack.c.h.b16 %v616
        %v1837 = vunpack.c.l.b16 %v617
        %v1838 = vunpack.c.h.b16 %v617
        %v1839 = vpack.c.b16 %v1069, %v1055
        %v1840 = vpack.c.b16 %v1070, %v1056
        %v1841 = vpack.c.b16 %v1071, %v1057
        %v1842 = vpack.c.b16 %v1072, %v1058
        %v1843 = vpack.c.b16 %v1073, %v1059
        %v1844 = vpack.c.b16 %v1074, %v1060
        %v1845 = vpack.c.b16 %v1075, %v1061
        %v1846 = vpack.c.b16 %v1076, %v1062
        %v1847 = vpack.c.b16 %v1077, %v1063
        %v1848 = vpack.c.b16 %v1078, %v1064
        %v1849 = vpack.c.b16 %v1079, %v1065
        %v1850 = vpack.c.b16 %v1080, %v1066
        %v1851 = vpack.c.b16 %v1081, %v1067
        %v1852 = vpack.c.b16 %v1082, %v1068
        %v1853 = vpack.c.b16 %v1097, %v1083
        %v1854 = vpack.c.b16 %v1098, %v1084
        %v1855 = vpack.c.b16 %v1099, %v1085
        %v1856 = vpack.c.b16 %v1100, %v1086
        %v1857 = vpack.c.b16 %v1101, %v1087
        %v1858 = vpack.c.b16 %v1102, %v1088
        %v1859 = vpack.c.b16 %v1103, %v1089
        %v1860 = vpack.c.b16 %v1104, %v1090
        %v1861 = vpack.c.b16 %v1105, %v1091
        %v1862 = vpack.c.b16 %v1106, %v1092
        %v1863 = vpack.c.b16 %v1107, %v1093
        %v1864 = vpack.c.b16 %v1108, %v1094
        %v1865 = vpack.c.b16 %v1109, %v1095
        %v1866 = vpack.c.b16 %v1110, %v1096
        %v1867 = vpack.c.b16 %v1125, %v1111
        %v1868 = vpack.c.b16 %v1126, %v1112
        %v1869 = vpack.c.b16 %v1127, %v1113
        %v1870 = vpack.c.b16 %v1128, %v1114
        %v1871 = vpack.c.b16 %v1129, %v1115
        %v1872 = vpack.c.b16 %v1130, %v1116
        %v1873 = vpack.c.b16 %v1131, %v1117
        %v1874 = vpack.c.b16 %v1132, %v1118
        %v1875 = vpack.c.b16 %v1133, %v1119
        %v1876 = vpack.c.b16 %v1134, %v1120
        %v1877 = vpack.c.b16 %v1135, %v1121
        %v1878 = vpack.c.b16 %v1136, %v1122
        %v1879 = vpack.c.b16 %v1137, %v1123
        %v1880 = vpack.c.b16 %v1138, %v1124
        %v1881 = vpack.c.b16 %v1153, %v1139
        %v1882 = vpack.c.b16 %v1154, %v1140
        %v1883 = vpack.c.b16 %v1155, %v1141
        %v1884 = vpack.c.b16 %v1156, %v1142
        %v1885 = vpack.c.b16 %v1157, %v1143
        %v1886 = vpack.c.b16 %v1158, %v1144
        %v1887 = vpack.c.b16 %v1159, %v1145
        %v1888 = vpack.c.b16 %v1160, %v1146
        %v1889 = vpack.c.b16 %v1161, %v1147
        %v1890 = vpack.c.b16 %v1162, %v1148
        %v1891 = vpack.c.b16 %v1163, %v1149
        %v1892 = vpack.c.b16 %v1164, %v1150
        %v1893 = vpack.c.b16 %v1165, %v1151
        %v1894 = vpack.c.b16 %v1166, %v1152
        %v1895 = vpack.c.b16 %v1181, %v1167
        %v1896 = vpack.c.b16 %v1182, %v1168
        %v1897 = vpack.c.b16 %v1183, %v1169
        %v1898 = vpack.c.b16 %v1184, %v1170
        %v1899 = vpack.c.b16 %v1185, %v1171
        %v1900 = vpack.c.b16 %v1186, %v1172
        %v1901 = vpack.c.b16 %v1187, %v1173
        %v1902 = vpack.c.b16 %v1188, %v1174
        %v1903 = vpack.c.b16 %v1189, %v1175
        %v1904 = vpack.c.b16 %v1190, %v1176
        %v1905 = vpack.c.b16 %v1191, %v1177
        %v1906 = vpack.c.b16 %v1192, %v1178
        %v1907 = vpack.c.b16 %v1193, %v1179
        %v1908 = vpack.c.b16 %v1194, %v1180
        %v1909 = vpack.c.b16 %v1209, %v1195
        %v1910 = vpack.c.b16 %v1210, %v1196
        %v1911 = vpack.c.b16 %v1211, %v1197
        %v1912 = vpack.c.b16 %v1212, %v1198
        %v1913 = vpack.c.b16 %v1213, %v1199
        %v1914 = vpack.c.b16 %v1214, %v1200
        %v1915 = vpack.c.b16 %v1215, %v1201
        %v1916 = vpack.c.b16 %v1216, %v1202
        %v1917 = vpack.c.b16 %v1217, %v1203
        %v1918 = vpack.c.b16 %v1218, %v1204
        %v1919 = vpack.c.b16 %v1219, %v1205
        %v1920 = vpack.c.b16 %v1220, %v1206
        %v1921 = vpack.c.b16 %v1221, %v1207
        %v1922 = vpack.c.b16 %v1222, %v1208
        %v1923 = vpack.c.b16 %v1237, %v1223
        %v1924 = vpack.c.b16 %v1238, %v1224
        %v1925 = vpack.c.b16 %v1239, %v1225
        %v1926 = vpack.c.b16 %v1240, %v1226
        %v1927 = vpack.c.b16 %v1241, %v1227
        %v1928 = vpack.c.b16 %v1242, %v1228
        %v1929 = vpack.c.b16 %v1243, %v1229
        %v1930 = vpack.c.b16 %v1244, %v1230
        %v1931 = vpack.c.b16 %v1245, %v1231
        %v1932 = vpack.c.b16 %v1246, %v1232
        %v1933 = vpack.c.b16 %v1247, %v1233
        %v1934 = vpack.c.b16 %v1248, %v1234
        %v1935 = vpack.c.b16 %v1249, %v1235
        %v1936 = vpack.c.b16 %v1250, %v1236
        %v1937 = vpack.c.b16 %v1265, %v1251
        %v1938 = vpack.c.b16 %v1266, %v1252
        %v1939 = vpack.c.b16 %v1267, %v1253
        %v1940 = vpack.c.b16 %v1268, %v1254
        %v1941 = vpack.c.b16 %v1269, %v1255
        %v1942 = vpack.c.b16 %v1270, %v1256
        %v1943 = vpack.c.b16 %v1271, %v1257
        %v1944 = vpack.c.b16 %v1272, %v1258
        %v1945 = vpack.c.b16 %v1273, %v1259
        %v1946 = vpack.c.b16 %v1274, %v1260
        %v1947 = vpack.c.b16 %v1275, %v1261
        %v1948 = vpack.c.b16 %v1276, %v1262
        %v1949 = vpack.c.b16 %v1277, %v1263
        %v1950 = vpack.c.b16 %v1278, %v1264
        %v1951 = vpack.c.b16 %v1293, %v1279
        %v1952 = vpack.c.b16 %v1294, %v1280
        %v1953 = vpack.c.b16 %v1295, %v1281
        %v1954 = vpack.c.b16 %v1296, %v1282
        %v1955 = vpack.c.b16 %v1297, %v1283
        %v1956 = vpack.c.b16 %v1298, %v1284
        %v1957 = vpack.c.b16 %v1299, %v1285
        %v1958 = vpack.c.b16 %v1300, %v1286
        %v1959 = vpack.c.b16 %v1301, %v1287
        %v1960 = vpack.c.b16 %v1302, %v1288
        %v1961 = vpack.c.b16 %v1303, %v1289
        %v1962 = vpack.c.b16 %v1304, %v1290
        %v1963 = vpack.c.b16 %v1305, %v1291
        %v1964 = vpack.c.b16 %v1306, %v1292
        %v1965 = vpack.c.b16 %v1321, %v1307
        %v1966 = vpack.c.b16 %v1322, %v1308
        %v1967 = vpack.c.b16 %v1323, %v1309
        %v1968 = vpack.c.b16 %v1324, %v1310
        %v1969 = vpack.c.b16 %v1325, %v1311
        %v1970 = vpack.c.b16 %v1326, %v1312
        %v1971 = vpack.c.b16 %v1327, %v1313
        %v1972 = vpack.c.b16 %v1328, %v1314
        %v1973 = vpack.c.b16 %v1329, %v1315
        %v1974 = vpack.c.b16 %v1330, %v1316
        %v1975 = vpack.c.b16 %v1331, %v1317
        %v1976 = vpack.c.b16 %v1332, %v1318
        %v1977 = vpack.c.b16 %v1333, %v1319
        %v1978 = vpack.c.b16 %v1334, %v1320
        %v1979 = vpack.c.b16 %v1349, %v1335
        %v1980 = vpack.c.b16 %v1350, %v1336
        %v1981 = vpack.c.b16 %v1351, %v1337
        %v1982 = vpack.c.b16 %v1352, %v1338
        %v1983 = vpack.c.b16 %v1353, %v1339
        %v1984 = vpack.c.b16 %v1354, %v1340
        %v1985 = vpack.c.b16 %v1355, %v1341
        %v1986 = vpack.c.b16 %v1356, %v1342
        %v1987 = vpack.c.b16 %v1357, %v1343
        %v1988 = vpack.c.b16 %v1358, %v1344
        %v1989 = vpack.c.b16 %v1359, %v1345
        %v1990 = vpack.c.b16 %v1360, %v1346
        %v1991 = vpack.c.b16 %v1361, %v1347
        %v1992 = vpack.c.b16 %v1362, %v1348
        %v1993 = vpack.c.b16 %v1377, %v1363
        %v1994 = vpack.c.b16 %v1378, %v1364
        %v1995 = vpack.c.b16 %v1379, %v1365
        %v1996 = vpack.c.b16 %v1380, %v1366
        %v1997 = vpack.c.b16 %v1381, %v1367
        %v1998 = vpack.c.b16 %v1382, %v1368
        %v1999 = vpack.c.b16 %v1383, %v1369
        %v2000 = vpack.c.b16 %v1384, %v1370
        %v2001 = vpack.c.b16 %v1385, %v1371
        %v2002 = vpack.c.b16 %v1386, %v1372
        %v2003 = vpack.c.b16 %v1387, %v1373
        %v2004 = vpack.c.b16 %v1388, %v1374
        %v2005 = vpack.c.b16 %v1389, %v1375
        %v2006 = vpack.c.b16 %v1390, %v1376
        %v2007 = vpack.c.b16 %v1405, %v1391
        %v2008 = vpack.c.b16 %v1406, %v1392
        %v2009 = vpack.c.b16 %v1407, %v1393
        %v2010 = vpack.c.b16 %v1408, %v1394
        %v2011 = vpack.c.b16 %v1409, %v1395
        %v2012 = vpack.c.b16 %v1410, %v1396
        %v2013 = vpack.c.b16 %v1411, %v1397
        %v2014 = vpack.c.b16 %v1412, %v1398
        %v2015 = vpack.c.b16 %v1413, %v1399
        %v2016 = vpack.c.b16 %v1414, %v1400
        %v2017 = vpack.c.b16 %v1415, %v1401
        %v2018 = vpack.c.b16 %v1416, %v1402
        %v2019 = vpack.c.b16 %v1417, %v1403
        %v2020 = vpack.c.b16 %v1418, %v1404
        %v2021 = vpack.c.b16 %v1433, %v1419
        %v2022 = vpack.c.b16 %v1434, %v1420
        %v2023 = vpack.c.b16 %v1435, %v1421
        %v2024 = vpack.c.b16 %v1436, %v1422
        %v2025 = vpack.c.b16 %v1437, %v1423
        %v2026 = vpack.c.b16 %v1438, %v1424
        %v2027 = vpack.c.b16 %v1439, %v1425
        %v2028 = vpack.c.b16 %v1440, %v1426
        %v2029 = vpack.c.b16 %v1441, %v1427
        %v2030 = vpack.c.b16 %v1442, %v1428
        %v2031 = vpack.c.b16 %v1443, %v1429
        %v2032 = vpack.c.b16 %v1444, %v1430
        %v2033 = vpack.c.b16 %v1445, %v1431
        %v2034 = vpack.c.b16 %v1446, %v1432
        %v2035 = vpack.c.b16 %v1461, %v1447
        %v2036 = vpack.c.b16 %v1462, %v1448
        %v2037 = vpack.c.b16 %v1463, %v1449
        %v2038 = vpack.c.b16 %v1464, %v1450
        %v2039 = vpack.c.b16 %v1465, %v1451
        %v2040 = vpack.c.b16 %v1466, %v1452
        %v2041 = vpack.c.b16 %v1467, %v1453
        %v2042 = vpack.c.b16 %v1468, %v1454
        %v2043 = vpack.c.b16 %v1469, %v1455
        %v2044 = vpack.c.b16 %v1470, %v1456
        %v2045 = vpack.c.b16 %v1471, %v1457
        %v2046 = vpack.c.b16 %v1472, %v1458
        %v2047 = vpack.c.b16 %v1473, %v1459
        %v2048 = vpack.c.b16 %v1474, %v1460
        %v2049 = vpack.c.b16 %v1489, %v1475
        %v2050 = vpack.c.b16 %v1490, %v1476
        %v2051 = vpack.c.b16 %v1491, %v1477
        %v2052 = vpack.c.b16 %v1492, %v1478
        %v2053 = vpack.c.b16 %v1493, %v1479
        %v2054 = vpack.c.b16 %v1494, %v1480
        %v2055 = vpack.c.b16 %v1495, %v1481
        %v2056 = vpack.c.b16 %v1496, %v1482
        %v2057 = vpack.c.b16 %v1497, %v1483
        %v2058 = vpack.c.b16 %v1498, %v1484
        %v2059 = vpack.c.b16 %v1499, %v1485
        %v2060 = vpack.c.b16 %v1500, %v1486
        %v2061 = vpack.c.b16 %v1501, %v1487
        %v2062 = vpack.c.b16 %v1502, %v1488
        %v2063 = vpack.c.b16 %v1517, %v1503
        %v2064 = vpack.c.b16 %v1518, %v1504
        %v2065 = vpack.c.b16 %v1519, %v1505
        %v2066 = vpack.c.b16 %v1520, %v1506
        %v2067 = vpack.c.b16 %v1521, %v1507
        %v2068 = vpack.c.b16 %v1522, %v1508
        %v2069 = vpack.c.b16 %v1523, %v1509
        %v2070 = vpack.c.b16 %v1524, %v1510
        %v2071 = vpack.c.b16 %v1525, %v1511
        %v2072 = vpack.c.b16 %v1526, %v1512
        %v2073 = vpack.c.b16 %v1527, %v1513
        %v2074 = vpack.c.b16 %v1528, %v1514
        %v2075 = vpack.c.b16 %v1529, %v1515
        %v2076 = vpack.c.b16 %v1530, %v1516
        %v2077 = vpack.c.b16 %v1545, %v1531
        %v2078 = vpack.c.b16 %v1546, %v1532
        %v2079 = vpack.c.b16 %v1547, %v1533
        %v2080 = vpack.c.b16 %v1548, %v1534
        %v2081 = vpack.c.b16 %v1549, %v1535
        %v2082 = vpack.c.b16 %v1550, %v1536
        %v2083 = vpack.c.b16 %v1551, %v1537
        %v2084 = vpack.c.b16 %v1552, %v1538
        %v2085 = vpack.c.b16 %v1553, %v1539
        %v2086 = vpack.c.b16 %v1554, %v1540
        %v2087 = vpack.c.b16 %v1555, %v1541
        %v2088 = vpack.c.b16 %v1556, %v1542
        %v2089 = vpack.c.b16 %v1557, %v1543
        %v2090 = vpack.c.b16 %v1558, %v1544
        %v2091 = vpack.c.b16 %v1573, %v1559
        %v2092 = vpack.c.b16 %v1574, %v1560
        %v2093 = vpack.c.b16 %v1575, %v1561
        %v2094 = vpack.c.b16 %v1576, %v1562
        %v2095 = vpack.c.b16 %v1577, %v1563
        %v2096 = vpack.c.b16 %v1578, %v1564
        %v2097 = vpack.c.b16 %v1579, %v1565
        %v2098 = vpack.c.b16 %v1580, %v1566
        %v2099 = vpack.c.b16 %v1581, %v1567
        %v2100 = vpack.c.b16 %v1582, %v1568
        %v2101 = vpack.c.b16 %v1583, %v1569
        %v2102 = vpack.c.b16 %v1584, %v1570
        %v2103 = vpack.c.b16 %v1585, %v1571
        %v2104 = vpack.c.b16 %v1586, %v1572
        %v2105 = vpack.c.b16 %v1601, %v1587
        %v2106 = vpack.c.b16 %v1602, %v1588
        %v2107 = vpack.c.b16 %v1603, %v1589
        %v2108 = vpack.c.b16 %v1604, %v1590
        %v2109 = vpack.c.b16 %v1605, %v1591
        %v2110 = vpack.c.b16 %v1606, %v1592
        %v2111 = vpack.c.b16 %v1607, %v1593
        %v2112 = vpack.c.b16 %v1608, %v1594
        %v2113 = vpack.c.b16 %v1609, %v1595
        %v2114 = vpack.c.b16 %v1610, %v1596
        %v2115 = vpack.c.b16 %v1611, %v1597
        %v2116 = vpack.c.b16 %v1612, %v1598
        %v2117 = vpack.c.b16 %v1613, %v1599
        %v2118 = vpack.c.b16 %v1614, %v1600
        %v2119 = vpack.c.b16 %v1629, %v1615
        %v2120 = vpack.c.b16 %v1630, %v1616
        %v2121 = vpack.c.b16 %v1631, %v1617
        %v2122 = vpack.c.b16 %v1632, %v1618
        %v2123 = vpack.c.b16 %v1633, %v1619
        %v2124 = vpack.c.b16 %v1634, %v1620
        %v2125 = vpack.c.b16 %v1635, %v1621
        %v2126 = vpack.c.b16 %v1636, %v1622
        %v2127 = vpack.c.b16 %v1637, %v1623
        %v2128 = vpack.c.b16 %v1638, %v1624
        %v2129 = vpack.c.b16 %v1639, %v1625
        %v2130 = vpack.c.b16 %v1640, %v1626
        %v2131 = vpack.c.b16 %v1641, %v1627
        %v2132 = vpack.c.b16 %v1642, %v1628
        %v2133 = vpack.c.b16 %v1657, %v1643
        %v2134 = vpack.c.b16 %v1658, %v1644
        %v2135 = vpack.c.b16 %v1659, %v1645
        %v2136 = vpack.c.b16 %v1660, %v1646
        %v2137 = vpack.c.b16 %v1661, %v1647
        %v2138 = vpack.c.b16 %v1662, %v1648
        %v2139 = vpack.c.b16 %v1663, %v1649
        %v2140 = vpack.c.b16 %v1664, %v1650
        %v2141 = vpack.c.b16 %v1665, %v1651
        %v2142 = vpack.c.b16 %v1666, %v1652
        %v2143 = vpack.c.b16 %v1667, %v1653
        %v2144 = vpack.c.b16 %v1668, %v1654
        %v2145 = vpack.c.b16 %v1669, %v1655
        %v2146 = vpack.c.b16 %v1670, %v1656
        %v2147 = vpack.c.b16 %v1685, %v1671
        %v2148 = vpack.c.b16 %v1686, %v1672
        %v2149 = vpack.c.b16 %v1687, %v1673
        %v2150 = vpack.c.b16 %v1688, %v1674
        %v2151 = vpack.c.b16 %v1689, %v1675
        %v2152 = vpack.c.b16 %v1690, %v1676
        %v2153 = vpack.c.b16 %v1691, %v1677
        %v2154 = vpack.c.b16 %v1692, %v1678
        %v2155 = vpack.c.b16 %v1693, %v1679
        %v2156 = vpack.c.b16 %v1694, %v1680
        %v2157 = vpack.c.b16 %v1695, %v1681
        %v2158 = vpack.c.b16 %v1696, %v1682
        %v2159 = vpack.c.b16 %v1697, %v1683
        %v2160 = vpack.c.b16 %v1698, %v1684
        %v2161 = vpack.c.b16 %v1713, %v1699
        %v2162 = vpack.c.b16 %v1714, %v1700
        %v2163 = vpack.c.b16 %v1715, %v1701
        %v2164 = vpack.c.b16 %v1716, %v1702
        %v2165 = vpack.c.b16 %v1717, %v1703
        %v2166 = vpack.c.b16 %v1718, %v1704
        %v2167 = vpack.c.b16 %v1719, %v1705
        %v2168 = vpack.c.b16 %v1720, %v1706
        %v2169 = vpack.c.b16 %v1721, %v1707
        %v2170 = vpack.c.b16 %v1722, %v1708
        %v2171 = vpack.c.b16 %v1723, %v1709
        %v2172 = vpack.c.b16 %v1724, %v1710
        %v2173 = vpack.c.b16 %v1725, %v1711
        %v2174 = vpack.c.b16 %v1726, %v1712
        %v2175 = vpack.c.b16 %v1741, %v1727
        %v2176 = vpack.c.b16 %v1742, %v1728
        %v2177 = vpack.c.b16 %v1743, %v1729
        %v2178 = vpack.c.b16 %v1744, %v1730
        %v2179 = vpack.c.b16 %v1745, %v1731
        %v2180 = vpack.c.b16 %v1746, %v1732
        %v2181 = vpack.c.b16 %v1747, %v1733
        %v2182 = vpack.c.b16 %v1748, %v1734
        %v2183 = vpack.c.b16 %v1749, %v1735
        %v2184 = vpack.c.b16 %v1750, %v1736
        %v2185 = vpack.c.b16 %v1751, %v1737
        %v2186 = vpack.c.b16 %v1752, %v1738
        %v2187 = vpack.c.b16 %v1753, %v1739
        %v2188 = vpack.c.b16 %v1754, %v1740
        %v2189 = vpack.c.b16 %v1769, %v1755
        %v2190 = vpack.c.b16 %v1770, %v1756
        %v2191 = vpack.c.b16 %v1771, %v1757
        %v2192 = vpack.c.b16 %v1772, %v1758
        %v2193 = vpack.c.b16 %v1773, %v1759
        %v2194 = vpack.c.b16 %v1774, %v1760
        %v2195 = vpack.c.b16 %v1775, %v1761
        %v2196 = vpack.c.b16 %v1776, %v1762
        %v2197 = vpack.c.b16 %v1777, %v1763
        %v2198 = vpack.c.b16 %v1778, %v1764
        %v2199 = vpack.c.b16 %v1779, %v1765
        %v2200 = vpack.c.b16 %v1780, %v1766
        %v2201 = vpack.c.b16 %v1781, %v1767
        %v2202 = vpack.c.b16 %v1782, %v1768
        %v2203 = vpack.c.b16 %v1797, %v1783
        %v2204 = vpack.c.b16 %v1798, %v1784
        %v2205 = vpack.c.b16 %v1799, %v1785
        %v2206 = vpack.c.b16 %v1800, %v1786
        %v2207 = vpack.c.b16 %v1801, %v1787
        %v2208 = vpack.c.b16 %v1802, %v1788
        %v2209 = vpack.c.b16 %v1803, %v1789
        %v2210 = vpack.c.b16 %v1804, %v1790
        %v2211 = vpack.c.b16 %v1805, %v1791
        %v2212 = vpack.c.b16 %v1806, %v1792
        %v2213 = vpack.c.b16 %v1807, %v1793
        %v2214 = vpack.c.b16 %v1808, %v1794
        %v2215 = vpack.c.b16 %v1809, %v1795
        %v2216 = vpack.c.b16 %v1810, %v1796
        %v2217 = vpack.c.b16 %v1825, %v1811
        %v2218 = vpack.c.b16 %v1826, %v1812
        %v2219 = vpack.c.b16 %v1827, %v1813
        %v2220 = vpack.c.b16 %v1828, %v1814
        %v2221 = vpack.c.b16 %v1829, %v1815
        %v2222 = vpack.c.b16 %v1830, %v1816
        %v2223 = vpack.c.b16 %v1831, %v1817
        %v2224 = vpack.c.b16 %v1832, %v1818
        %v2225 = vpack.c.b16 %v1833, %v1819
        %v2226 = vpack.c.b16 %v1834, %v1820
        %v2227 = vpack.c.b16 %v1835, %v1821
        %v2228 = vpack.c.b16 %v1836, %v1822
        %v2229 = vpack.c.b16 %v1837, %v1823
        %v2230 = vpack.c.b16 %v1838, %v1824
        %vm2623 = vcmask 523264
        %v2625 = vsel %vm2623, %v659, 0
        %2627 = vmatpush.bf16.msra.mxu0 %v1937
        %2628 = vmatpush.bf16.msra.mxu0 %v1923
        %2629 = vmatpush.bf16.msra.mxu0 %v1909
        %2630 = vmatpush.bf16.msra.mxu0 %v1895
        %2631 = vmatpush.bf16.msra.mxu0 %v1881
        %2632 = vmatpush.bf16.msra.mxu0 %v1867
        %2633 = vmatpush.bf16.msra.mxu0 %v1853
        %2634 = vmatpush.bf16.msra.mxu0 %v1839
        %2635 = vmatmul.bf16.gmra.mxu0 %v656
        %v2636 = vpop.f32.mrf.mxu0
        %v2637 = vadd.f32 %v622, %v2636
        %v2638 = vpop.f32.mrf.mxu0
        %2639 = vdwg.mxu0
        %2640 = vmatpush.bf16.msra.mxu0 %v2049
        %2641 = vmatpush.bf16.msra.mxu0 %v2035
        %2642 = vmatpush.bf16.msra.mxu0 %v2021
        %2643 = vmatpush.bf16.msra.mxu0 %v2007
        %2644 = vmatpush.bf16.msra.mxu0 %v1993
        %2645 = vmatpush.bf16.msra.mxu0 %v1979
        %2646 = vmatpush.bf16.msra.mxu0 %v1965
        %2647 = vmatpush.bf16.msra.mxu0 %v1951
        %2648 = vmatmul.bf16.gmra.mxu0 %v657
        %v2649 = vpop.f32.mrf.mxu0
        %v2650 = vadd.f32 %v2637, %v2649
        %v2651 = vpop.f32.mrf.mxu0
        %2652 = vdwg.mxu0
        %2653 = vmatpush.bf16.msra.mxu0 %v2161
        %2654 = vmatpush.bf16.msra.mxu0 %v2147
        %2655 = vmatpush.bf16.msra.mxu0 %v2133
        %2656 = vmatpush.bf16.msra.mxu0 %v2119
        %2657 = vmatpush.bf16.msra.mxu0 %v2105
        %2658 = vmatpush.bf16.msra.mxu0 %v2091
        %2659 = vmatpush.bf16.msra.mxu0 %v2077
        %2660 = vmatpush.bf16.msra.mxu0 %v2063
        %2661 = vmatmul.bf16.gmra.mxu0 %v658
        %v2662 = vpop.f32.mrf.mxu0
        %v2663 = vadd.f32 %v2650, %v2662
        %v2664 = vpop.f32.mrf.mxu0
        %2665 = vdwg.mxu0
        %2666 = vmatpush.bf16.msra.mxu0 0
        %2667 = vmatpush.bf16.msra.mxu0 0
        %2668 = vmatpush.bf16.msra.mxu0 0
        %2669 = vmatpush.bf16.msra.mxu0 0
        %2670 = vmatpush.bf16.msra.mxu0 %v2217
        %2671 = vmatpush.bf16.msra.mxu0 %v2203
        %2672 = vmatpush.bf16.msra.mxu0 %v2189
        %2673 = vmatpush.bf16.msra.mxu0 %v2175
        %2674 = vmatmul.bf16.gmra.mxu0 %v2625
        %v2675 = vpop.f32.mrf.mxu0
        %v2676 = vadd.f32 %v2663, %v2675
        %v2677 = vpop.f32.mrf.mxu0
        %2678 = vdwg.mxu0
        %2679 = vmatpush.bf16.msra.mxu0 %v1938
        %2680 = vmatpush.bf16.msra.mxu0 %v1924
        %2681 = vmatpush.bf16.msra.mxu0 %v1910
        %2682 = vmatpush.bf16.msra.mxu0 %v1896
        %2683 = vmatpush.bf16.msra.mxu0 %v1882
        %2684 = vmatpush.bf16.msra.mxu0 %v1868
        %2685 = vmatpush.bf16.msra.mxu0 %v1854
        %2686 = vmatpush.bf16.msra.mxu0 %v1840
        %2687 = vmatmul.bf16.gmra.mxu0 %v656
        %v2688 = vpop.f32.mrf.mxu0
        %v2689 = vadd.f32 %v623, %v2688
        %v2690 = vpop.f32.mrf.mxu0
        %2691 = vdwg.mxu0
        %2692 = vmatpush.bf16.msra.mxu0 %v2050
        %2693 = vmatpush.bf16.msra.mxu0 %v2036
        %2694 = vmatpush.bf16.msra.mxu0 %v2022
        %2695 = vmatpush.bf16.msra.mxu0 %v2008
        %2696 = vmatpush.bf16.msra.mxu0 %v1994
        %2697 = vmatpush.bf16.msra.mxu0 %v1980
        %2698 = vmatpush.bf16.msra.mxu0 %v1966
        %2699 = vmatpush.bf16.msra.mxu0 %v1952
        %2700 = vmatmul.bf16.gmra.mxu0 %v657
        %v2701 = vpop.f32.mrf.mxu0
        %v2702 = vadd.f32 %v2689, %v2701
        %v2703 = vpop.f32.mrf.mxu0
        %2704 = vdwg.mxu0
        %2705 = vmatpush.bf16.msra.mxu0 %v2162
        %2706 = vmatpush.bf16.msra.mxu0 %v2148
        %2707 = vmatpush.bf16.msra.mxu0 %v2134
        %2708 = vmatpush.bf16.msra.mxu0 %v2120
        %2709 = vmatpush.bf16.msra.mxu0 %v2106
        %2710 = vmatpush.bf16.msra.mxu0 %v2092
        %2711 = vmatpush.bf16.msra.mxu0 %v2078
        %2712 = vmatpush.bf16.msra.mxu0 %v2064
        %2713 = vmatmul.bf16.gmra.mxu0 %v658
        %v2714 = vpop.f32.mrf.mxu0
        %v2715 = vadd.f32 %v2702, %v2714
        %v2716 = vpop.f32.mrf.mxu0
        %2717 = vdwg.mxu0
        %2718 = vmatpush.bf16.msra.mxu0 0
        %2719 = vmatpush.bf16.msra.mxu0 0
        %2720 = vmatpush.bf16.msra.mxu0 0
        %2721 = vmatpush.bf16.msra.mxu0 0
        %2722 = vmatpush.bf16.msra.mxu0 %v2218
        %2723 = vmatpush.bf16.msra.mxu0 %v2204
        %2724 = vmatpush.bf16.msra.mxu0 %v2190
        %2725 = vmatpush.bf16.msra.mxu0 %v2176
        %2726 = vmatmul.bf16.gmra.mxu0 %v2625
        %v2727 = vpop.f32.mrf.mxu0
        %v2728 = vadd.f32 %v2715, %v2727
        %v2729 = vpop.f32.mrf.mxu0
        %2730 = vdwg.mxu0
        %2731 = vmatpush.bf16.msra.mxu0 %v1939
        %2732 = vmatpush.bf16.msra.mxu0 %v1925
        %2733 = vmatpush.bf16.msra.mxu0 %v1911
        %2734 = vmatpush.bf16.msra.mxu0 %v1897
        %2735 = vmatpush.bf16.msra.mxu0 %v1883
        %2736 = vmatpush.bf16.msra.mxu0 %v1869
        %2737 = vmatpush.bf16.msra.mxu0 %v1855
        %2738 = vmatpush.bf16.msra.mxu0 %v1841
        %2739 = vmatmul.bf16.gmra.mxu0 %v656
        %v2740 = vpop.f32.mrf.mxu0
        %v2741 = vadd.f32 %v624, %v2740
        %v2742 = vpop.f32.mrf.mxu0
        %2743 = vdwg.mxu0
        %2744 = vmatpush.bf16.msra.mxu0 %v2051
        %2745 = vmatpush.bf16.msra.mxu0 %v2037
        %2746 = vmatpush.bf16.msra.mxu0 %v2023
        %2747 = vmatpush.bf16.msra.mxu0 %v2009
        %2748 = vmatpush.bf16.msra.mxu0 %v1995
        %2749 = vmatpush.bf16.msra.mxu0 %v1981
        %2750 = vmatpush.bf16.msra.mxu0 %v1967
        %2751 = vmatpush.bf16.msra.mxu0 %v1953
        %2752 = vmatmul.bf16.gmra.mxu0 %v657
        %v2753 = vpop.f32.mrf.mxu0
        %v2754 = vadd.f32 %v2741, %v2753
        %v2755 = vpop.f32.mrf.mxu0
        %2756 = vdwg.mxu0
        %2757 = vmatpush.bf16.msra.mxu0 %v2163
        %2758 = vmatpush.bf16.msra.mxu0 %v2149
        %2759 = vmatpush.bf16.msra.mxu0 %v2135
        %2760 = vmatpush.bf16.msra.mxu0 %v2121
        %2761 = vmatpush.bf16.msra.mxu0 %v2107
        %2762 = vmatpush.bf16.msra.mxu0 %v2093
        %2763 = vmatpush.bf16.msra.mxu0 %v2079
        %2764 = vmatpush.bf16.msra.mxu0 %v2065
        %2765 = vmatmul.bf16.gmra.mxu0 %v658
        %v2766 = vpop.f32.mrf.mxu0
        %v2767 = vadd.f32 %v2754, %v2766
        %v2768 = vpop.f32.mrf.mxu0
        %2769 = vdwg.mxu0
        %2770 = vmatpush.bf16.msra.mxu0 0
        %2771 = vmatpush.bf16.msra.mxu0 0
        %2772 = vmatpush.bf16.msra.mxu0 0
        %2773 = vmatpush.bf16.msra.mxu0 0
        %2774 = vmatpush.bf16.msra.mxu0 %v2219
        %2775 = vmatpush.bf16.msra.mxu0 %v2205
        %2776 = vmatpush.bf16.msra.mxu0 %v2191
        %2777 = vmatpush.bf16.msra.mxu0 %v2177
        %2778 = vmatmul.bf16.gmra.mxu0 %v2625
        %v2779 = vpop.f32.mrf.mxu0
        %v2780 = vadd.f32 %v2767, %v2779
        %v2781 = vpop.f32.mrf.mxu0
        %2782 = vdwg.mxu0
        %2783 = vmatpush.bf16.msra.mxu0 %v1940
        %2784 = vmatpush.bf16.msra.mxu0 %v1926
        %2785 = vmatpush.bf16.msra.mxu0 %v1912
        %2786 = vmatpush.bf16.msra.mxu0 %v1898
        %2787 = vmatpush.bf16.msra.mxu0 %v1884
        %2788 = vmatpush.bf16.msra.mxu0 %v1870
        %2789 = vmatpush.bf16.msra.mxu0 %v1856
        %2790 = vmatpush.bf16.msra.mxu0 %v1842
        %2791 = vmatmul.bf16.gmra.mxu0 %v656
        %v2792 = vpop.f32.mrf.mxu0
        %v2793 = vadd.f32 %v625, %v2792
        %v2794 = vpop.f32.mrf.mxu0
        %2795 = vdwg.mxu0
        %2796 = vmatpush.bf16.msra.mxu0 %v2052
        %2797 = vmatpush.bf16.msra.mxu0 %v2038
        %2798 = vmatpush.bf16.msra.mxu0 %v2024
        %2799 = vmatpush.bf16.msra.mxu0 %v2010
        %2800 = vmatpush.bf16.msra.mxu0 %v1996
        %2801 = vmatpush.bf16.msra.mxu0 %v1982
        %2802 = vmatpush.bf16.msra.mxu0 %v1968
        %2803 = vmatpush.bf16.msra.mxu0 %v1954
        %2804 = vmatmul.bf16.gmra.mxu0 %v657
        %v2805 = vpop.f32.mrf.mxu0
        %v2806 = vadd.f32 %v2793, %v2805
        %v2807 = vpop.f32.mrf.mxu0
        %2808 = vdwg.mxu0
        %2809 = vmatpush.bf16.msra.mxu0 %v2164
        %2810 = vmatpush.bf16.msra.mxu0 %v2150
        %2811 = vmatpush.bf16.msra.mxu0 %v2136
        %2812 = vmatpush.bf16.msra.mxu0 %v2122
        %2813 = vmatpush.bf16.msra.mxu0 %v2108
        %2814 = vmatpush.bf16.msra.mxu0 %v2094
        %2815 = vmatpush.bf16.msra.mxu0 %v2080
        %2816 = vmatpush.bf16.msra.mxu0 %v2066
        %2817 = vmatmul.bf16.gmra.mxu0 %v658
        %v2818 = vpop.f32.mrf.mxu0
        %v2819 = vadd.f32 %v2806, %v2818
        %v2820 = vpop.f32.mrf.mxu0
        %2821 = vdwg.mxu0
        %2822 = vmatpush.bf16.msra.mxu0 0
        %2823 = vmatpush.bf16.msra.mxu0 0
        %2824 = vmatpush.bf16.msra.mxu0 0
        %2825 = vmatpush.bf16.msra.mxu0 0
        %2826 = vmatpush.bf16.msra.mxu0 %v2220
        %2827 = vmatpush.bf16.msra.mxu0 %v2206
        %2828 = vmatpush.bf16.msra.mxu0 %v2192
        %2829 = vmatpush.bf16.msra.mxu0 %v2178
        %2830 = vmatmul.bf16.gmra.mxu0 %v2625
        %v2831 = vpop.f32.mrf.mxu0
        %v2832 = vadd.f32 %v2819, %v2831
        %v2833 = vpop.f32.mrf.mxu0
        %2834 = vdwg.mxu0
        %2835 = vmatpush.bf16.msra.mxu0 %v1941
        %2836 = vmatpush.bf16.msra.mxu0 %v1927
        %2837 = vmatpush.bf16.msra.mxu0 %v1913
        %2838 = vmatpush.bf16.msra.mxu0 %v1899
        %2839 = vmatpush.bf16.msra.mxu0 %v1885
        %2840 = vmatpush.bf16.msra.mxu0 %v1871
        %2841 = vmatpush.bf16.msra.mxu0 %v1857
        %2842 = vmatpush.bf16.msra.mxu0 %v1843
        %2843 = vmatmul.bf16.gmra.mxu0 %v656
        %v2844 = vpop.f32.mrf.mxu0
        %v2845 = vadd.f32 %v626, %v2844
        %v2846 = vpop.f32.mrf.mxu0
        %2847 = vdwg.mxu0
        %2848 = vmatpush.bf16.msra.mxu0 %v2053
        %2849 = vmatpush.bf16.msra.mxu0 %v2039
        %2850 = vmatpush.bf16.msra.mxu0 %v2025
        %2851 = vmatpush.bf16.msra.mxu0 %v2011
        %2852 = vmatpush.bf16.msra.mxu0 %v1997
        %2853 = vmatpush.bf16.msra.mxu0 %v1983
        %2854 = vmatpush.bf16.msra.mxu0 %v1969
        %2855 = vmatpush.bf16.msra.mxu0 %v1955
        %2856 = vmatmul.bf16.gmra.mxu0 %v657
        %v2857 = vpop.f32.mrf.mxu0
        %v2858 = vadd.f32 %v2845, %v2857
        %v2859 = vpop.f32.mrf.mxu0
        %2860 = vdwg.mxu0
        %2861 = vmatpush.bf16.msra.mxu0 %v2165
        %2862 = vmatpush.bf16.msra.mxu0 %v2151
        %2863 = vmatpush.bf16.msra.mxu0 %v2137
        %2864 = vmatpush.bf16.msra.mxu0 %v2123
        %2865 = vmatpush.bf16.msra.mxu0 %v2109
        %2866 = vmatpush.bf16.msra.mxu0 %v2095
        %2867 = vmatpush.bf16.msra.mxu0 %v2081
        %2868 = vmatpush.bf16.msra.mxu0 %v2067
        %2869 = vmatmul.bf16.gmra.mxu0 %v658
        %v2870 = vpop.f32.mrf.mxu0
        %v2871 = vadd.f32 %v2858, %v2870
        %v2872 = vpop.f32.mrf.mxu0
        %2873 = vdwg.mxu0
        %2874 = vmatpush.bf16.msra.mxu0 0
        %2875 = vmatpush.bf16.msra.mxu0 0
        %2876 = vmatpush.bf16.msra.mxu0 0
        %2877 = vmatpush.bf16.msra.mxu0 0
        %2878 = vmatpush.bf16.msra.mxu0 %v2221
        %2879 = vmatpush.bf16.msra.mxu0 %v2207
        %2880 = vmatpush.bf16.msra.mxu0 %v2193
        %2881 = vmatpush.bf16.msra.mxu0 %v2179
        %2882 = vmatmul.bf16.gmra.mxu0 %v2625
        %v2883 = vpop.f32.mrf.mxu0
        %v2884 = vadd.f32 %v2871, %v2883
        %v2885 = vpop.f32.mrf.mxu0
        %2886 = vdwg.mxu0
        %2887 = vmatpush.bf16.msra.mxu0 %v1942
        %2888 = vmatpush.bf16.msra.mxu0 %v1928
        %2889 = vmatpush.bf16.msra.mxu0 %v1914
        %2890 = vmatpush.bf16.msra.mxu0 %v1900
        %2891 = vmatpush.bf16.msra.mxu0 %v1886
        %2892 = vmatpush.bf16.msra.mxu0 %v1872
        %2893 = vmatpush.bf16.msra.mxu0 %v1858
        %2894 = vmatpush.bf16.msra.mxu0 %v1844
        %2895 = vmatmul.bf16.gmra.mxu0 %v656
        %v2896 = vpop.f32.mrf.mxu0
        %v2897 = vadd.f32 %v627, %v2896
        %v2898 = vpop.f32.mrf.mxu0
        %2899 = vdwg.mxu0
        %2900 = vmatpush.bf16.msra.mxu0 %v2054
        %2901 = vmatpush.bf16.msra.mxu0 %v2040
        %2902 = vmatpush.bf16.msra.mxu0 %v2026
        %2903 = vmatpush.bf16.msra.mxu0 %v2012
        %2904 = vmatpush.bf16.msra.mxu0 %v1998
        %2905 = vmatpush.bf16.msra.mxu0 %v1984
        %2906 = vmatpush.bf16.msra.mxu0 %v1970
        %2907 = vmatpush.bf16.msra.mxu0 %v1956
        %2908 = vmatmul.bf16.gmra.mxu0 %v657
        %v2909 = vpop.f32.mrf.mxu0
        %v2910 = vadd.f32 %v2897, %v2909
        %v2911 = vpop.f32.mrf.mxu0
        %2912 = vdwg.mxu0
        %2913 = vmatpush.bf16.msra.mxu0 %v2166
        %2914 = vmatpush.bf16.msra.mxu0 %v2152
        %2915 = vmatpush.bf16.msra.mxu0 %v2138
        %2916 = vmatpush.bf16.msra.mxu0 %v2124
        %2917 = vmatpush.bf16.msra.mxu0 %v2110
        %2918 = vmatpush.bf16.msra.mxu0 %v2096
        %2919 = vmatpush.bf16.msra.mxu0 %v2082
        %2920 = vmatpush.bf16.msra.mxu0 %v2068
        %2921 = vmatmul.bf16.gmra.mxu0 %v658
        %v2922 = vpop.f32.mrf.mxu0
        %v2923 = vadd.f32 %v2910, %v2922
        %v2924 = vpop.f32.mrf.mxu0
        %2925 = vdwg.mxu0
        %2926 = vmatpush.bf16.msra.mxu0 0
        %2927 = vmatpush.bf16.msra.mxu0 0
        %2928 = vmatpush.bf16.msra.mxu0 0
        %2929 = vmatpush.bf16.msra.mxu0 0
        %2930 = vmatpush.bf16.msra.mxu0 %v2222
        %2931 = vmatpush.bf16.msra.mxu0 %v2208
        %2932 = vmatpush.bf16.msra.mxu0 %v2194
        %2933 = vmatpush.bf16.msra.mxu0 %v2180
        %2934 = vmatmul.bf16.gmra.mxu0 %v2625
        %v2935 = vpop.f32.mrf.mxu0
        %v2936 = vadd.f32 %v2923, %v2935
        %v2937 = vpop.f32.mrf.mxu0
        %2938 = vdwg.mxu0
        %2939 = vmatpush.bf16.msra.mxu0 %v1943
        %2940 = vmatpush.bf16.msra.mxu0 %v1929
        %2941 = vmatpush.bf16.msra.mxu0 %v1915
        %2942 = vmatpush.bf16.msra.mxu0 %v1901
        %2943 = vmatpush.bf16.msra.mxu0 %v1887
        %2944 = vmatpush.bf16.msra.mxu0 %v1873
        %2945 = vmatpush.bf16.msra.mxu0 %v1859
        %2946 = vmatpush.bf16.msra.mxu0 %v1845
        %2947 = vmatmul.bf16.gmra.mxu0 %v656
        %v2948 = vpop.f32.mrf.mxu0
        %v2949 = vadd.f32 %v628, %v2948
        %v2950 = vpop.f32.mrf.mxu0
        %2951 = vdwg.mxu0
        %2952 = vmatpush.bf16.msra.mxu0 %v2055
        %2953 = vmatpush.bf16.msra.mxu0 %v2041
        %2954 = vmatpush.bf16.msra.mxu0 %v2027
        %2955 = vmatpush.bf16.msra.mxu0 %v2013
        %2956 = vmatpush.bf16.msra.mxu0 %v1999
        %2957 = vmatpush.bf16.msra.mxu0 %v1985
        %2958 = vmatpush.bf16.msra.mxu0 %v1971
        %2959 = vmatpush.bf16.msra.mxu0 %v1957
        %2960 = vmatmul.bf16.gmra.mxu0 %v657
        %v2961 = vpop.f32.mrf.mxu0
        %v2962 = vadd.f32 %v2949, %v2961
        %v2963 = vpop.f32.mrf.mxu0
        %2964 = vdwg.mxu0
        %2965 = vmatpush.bf16.msra.mxu0 %v2167
        %2966 = vmatpush.bf16.msra.mxu0 %v2153
        %2967 = vmatpush.bf16.msra.mxu0 %v2139
        %2968 = vmatpush.bf16.msra.mxu0 %v2125
        %2969 = vmatpush.bf16.msra.mxu0 %v2111
        %2970 = vmatpush.bf16.msra.mxu0 %v2097
        %2971 = vmatpush.bf16.msra.mxu0 %v2083
        %2972 = vmatpush.bf16.msra.mxu0 %v2069
        %2973 = vmatmul.bf16.gmra.mxu0 %v658
        %v2974 = vpop.f32.mrf.mxu0
        %v2975 = vadd.f32 %v2962, %v2974
        %v2976 = vpop.f32.mrf.mxu0
        %2977 = vdwg.mxu0
        %2978 = vmatpush.bf16.msra.mxu0 0
        %2979 = vmatpush.bf16.msra.mxu0 0
        %2980 = vmatpush.bf16.msra.mxu0 0
        %2981 = vmatpush.bf16.msra.mxu0 0
        %2982 = vmatpush.bf16.msra.mxu0 %v2223
        %2983 = vmatpush.bf16.msra.mxu0 %v2209
        %2984 = vmatpush.bf16.msra.mxu0 %v2195
        %2985 = vmatpush.bf16.msra.mxu0 %v2181
        %2986 = vmatmul.bf16.gmra.mxu0 %v2625
        %v2987 = vpop.f32.mrf.mxu0
        %v2988 = vadd.f32 %v2975, %v2987
        %v2989 = vpop.f32.mrf.mxu0
        %2990 = vdwg.mxu0
        %2991 = vmatpush.bf16.msra.mxu0 %v1944
        %2992 = vmatpush.bf16.msra.mxu0 %v1930
        %2993 = vmatpush.bf16.msra.mxu0 %v1916
        %2994 = vmatpush.bf16.msra.mxu0 %v1902
        %2995 = vmatpush.bf16.msra.mxu0 %v1888
        %2996 = vmatpush.bf16.msra.mxu0 %v1874
        %2997 = vmatpush.bf16.msra.mxu0 %v1860
        %2998 = vmatpush.bf16.msra.mxu0 %v1846
        %2999 = vmatmul.bf16.gmra.mxu0 %v656
        %v3000 = vpop.f32.mrf.mxu0
        %v3001 = vadd.f32 %v629, %v3000
        %v3002 = vpop.f32.mrf.mxu0
        %3003 = vdwg.mxu0
        %3004 = vmatpush.bf16.msra.mxu0 %v2056
        %3005 = vmatpush.bf16.msra.mxu0 %v2042
        %3006 = vmatpush.bf16.msra.mxu0 %v2028
        %3007 = vmatpush.bf16.msra.mxu0 %v2014
        %3008 = vmatpush.bf16.msra.mxu0 %v2000
        %3009 = vmatpush.bf16.msra.mxu0 %v1986
        %3010 = vmatpush.bf16.msra.mxu0 %v1972
        %3011 = vmatpush.bf16.msra.mxu0 %v1958
        %3012 = vmatmul.bf16.gmra.mxu0 %v657
        %v3013 = vpop.f32.mrf.mxu0
        %v3014 = vadd.f32 %v3001, %v3013
        %v3015 = vpop.f32.mrf.mxu0
        %3016 = vdwg.mxu0
        %3017 = vmatpush.bf16.msra.mxu0 %v2168
        %3018 = vmatpush.bf16.msra.mxu0 %v2154
        %3019 = vmatpush.bf16.msra.mxu0 %v2140
        %3020 = vmatpush.bf16.msra.mxu0 %v2126
        %3021 = vmatpush.bf16.msra.mxu0 %v2112
        %3022 = vmatpush.bf16.msra.mxu0 %v2098
        %3023 = vmatpush.bf16.msra.mxu0 %v2084
        %3024 = vmatpush.bf16.msra.mxu0 %v2070
        %3025 = vmatmul.bf16.gmra.mxu0 %v658
        %v3026 = vpop.f32.mrf.mxu0
        %v3027 = vadd.f32 %v3014, %v3026
        %v3028 = vpop.f32.mrf.mxu0
        %3029 = vdwg.mxu0
        %3030 = vmatpush.bf16.msra.mxu0 0
        %3031 = vmatpush.bf16.msra.mxu0 0
        %3032 = vmatpush.bf16.msra.mxu0 0
        %3033 = vmatpush.bf16.msra.mxu0 0
        %3034 = vmatpush.bf16.msra.mxu0 %v2224
        %3035 = vmatpush.bf16.msra.mxu0 %v2210
        %3036 = vmatpush.bf16.msra.mxu0 %v2196
        %3037 = vmatpush.bf16.msra.mxu0 %v2182
        %3038 = vmatmul.bf16.gmra.mxu0 %v2625
        %v3039 = vpop.f32.mrf.mxu0
        %v3040 = vadd.f32 %v3027, %v3039
        %v3041 = vpop.f32.mrf.mxu0
        %3042 = vdwg.mxu0
        %3043 = vmatpush.bf16.msra.mxu0 %v1945
        %3044 = vmatpush.bf16.msra.mxu0 %v1931
        %3045 = vmatpush.bf16.msra.mxu0 %v1917
        %3046 = vmatpush.bf16.msra.mxu0 %v1903
        %3047 = vmatpush.bf16.msra.mxu0 %v1889
        %3048 = vmatpush.bf16.msra.mxu0 %v1875
        %3049 = vmatpush.bf16.msra.mxu0 %v1861
        %3050 = vmatpush.bf16.msra.mxu0 %v1847
        %3051 = vmatmul.bf16.gmra.mxu0 %v656
        %v3052 = vpop.f32.mrf.mxu0
        %v3053 = vadd.f32 %v630, %v3052
        %v3054 = vpop.f32.mrf.mxu0
        %3055 = vdwg.mxu0
        %3056 = vmatpush.bf16.msra.mxu0 %v2057
        %3057 = vmatpush.bf16.msra.mxu0 %v2043
        %3058 = vmatpush.bf16.msra.mxu0 %v2029
        %3059 = vmatpush.bf16.msra.mxu0 %v2015
        %3060 = vmatpush.bf16.msra.mxu0 %v2001
        %3061 = vmatpush.bf16.msra.mxu0 %v1987
        %3062 = vmatpush.bf16.msra.mxu0 %v1973
        %3063 = vmatpush.bf16.msra.mxu0 %v1959
        %3064 = vmatmul.bf16.gmra.mxu0 %v657
        %v3065 = vpop.f32.mrf.mxu0
        %v3066 = vadd.f32 %v3053, %v3065
        %v3067 = vpop.f32.mrf.mxu0
        %3068 = vdwg.mxu0
        %3069 = vmatpush.bf16.msra.mxu0 %v2169
        %3070 = vmatpush.bf16.msra.mxu0 %v2155
        %3071 = vmatpush.bf16.msra.mxu0 %v2141
        %3072 = vmatpush.bf16.msra.mxu0 %v2127
        %3073 = vmatpush.bf16.msra.mxu0 %v2113
        %3074 = vmatpush.bf16.msra.mxu0 %v2099
        %3075 = vmatpush.bf16.msra.mxu0 %v2085
        %3076 = vmatpush.bf16.msra.mxu0 %v2071
        %3077 = vmatmul.bf16.gmra.mxu0 %v658
        %v3078 = vpop.f32.mrf.mxu0
        %v3079 = vadd.f32 %v3066, %v3078
        %v3080 = vpop.f32.mrf.mxu0
        %3081 = vdwg.mxu0
        %3082 = vmatpush.bf16.msra.mxu0 0
        %3083 = vmatpush.bf16.msra.mxu0 0
        %3084 = vmatpush.bf16.msra.mxu0 0
        %3085 = vmatpush.bf16.msra.mxu0 0
        %3086 = vmatpush.bf16.msra.mxu0 %v2225
        %3087 = vmatpush.bf16.msra.mxu0 %v2211
        %3088 = vmatpush.bf16.msra.mxu0 %v2197
        %3089 = vmatpush.bf16.msra.mxu0 %v2183
        %3090 = vmatmul.bf16.gmra.mxu0 %v2625
        %v3091 = vpop.f32.mrf.mxu0
        %v3092 = vadd.f32 %v3079, %v3091
        %v3093 = vpop.f32.mrf.mxu0
        %3094 = vdwg.mxu0
        %3095 = vmatpush.bf16.msra.mxu0 %v1946
        %3096 = vmatpush.bf16.msra.mxu0 %v1932
        %3097 = vmatpush.bf16.msra.mxu0 %v1918
        %3098 = vmatpush.bf16.msra.mxu0 %v1904
        %3099 = vmatpush.bf16.msra.mxu0 %v1890
        %3100 = vmatpush.bf16.msra.mxu0 %v1876
        %3101 = vmatpush.bf16.msra.mxu0 %v1862
        %3102 = vmatpush.bf16.msra.mxu0 %v1848
        %3103 = vmatmul.bf16.gmra.mxu0 %v656
        %v3104 = vpop.f32.mrf.mxu0
        %v3105 = vadd.f32 %v631, %v3104
        %v3106 = vpop.f32.mrf.mxu0
        %3107 = vdwg.mxu0
        %3108 = vmatpush.bf16.msra.mxu0 %v2058
        %3109 = vmatpush.bf16.msra.mxu0 %v2044
        %3110 = vmatpush.bf16.msra.mxu0 %v2030
        %3111 = vmatpush.bf16.msra.mxu0 %v2016
        %3112 = vmatpush.bf16.msra.mxu0 %v2002
        %3113 = vmatpush.bf16.msra.mxu0 %v1988
        %3114 = vmatpush.bf16.msra.mxu0 %v1974
        %3115 = vmatpush.bf16.msra.mxu0 %v1960
        %3116 = vmatmul.bf16.gmra.mxu0 %v657
        %v3117 = vpop.f32.mrf.mxu0
        %v3118 = vadd.f32 %v3105, %v3117
        %v3119 = vpop.f32.mrf.mxu0
        %3120 = vdwg.mxu0
        %3121 = vmatpush.bf16.msra.mxu0 %v2170
        %3122 = vmatpush.bf16.msra.mxu0 %v2156
        %3123 = vmatpush.bf16.msra.mxu0 %v2142
        %3124 = vmatpush.bf16.msra.mxu0 %v2128
        %3125 = vmatpush.bf16.msra.mxu0 %v2114
        %3126 = vmatpush.bf16.msra.mxu0 %v2100
        %3127 = vmatpush.bf16.msra.mxu0 %v2086
        %3128 = vmatpush.bf16.msra.mxu0 %v2072
        %3129 = vmatmul.bf16.gmra.mxu0 %v658
        %v3130 = vpop.f32.mrf.mxu0
        %v3131 = vadd.f32 %v3118, %v3130
        %v3132 = vpop.f32.mrf.mxu0
        %3133 = vdwg.mxu0
        %3134 = vmatpush.bf16.msra.mxu0 0
        %3135 = vmatpush.bf16.msra.mxu0 0
        %3136 = vmatpush.bf16.msra.mxu0 0
        %3137 = vmatpush.bf16.msra.mxu0 0
        %3138 = vmatpush.bf16.msra.mxu0 %v2226
        %3139 = vmatpush.bf16.msra.mxu0 %v2212
        %3140 = vmatpush.bf16.msra.mxu0 %v2198
        %3141 = vmatpush.bf16.msra.mxu0 %v2184
        %3142 = vmatmul.bf16.gmra.mxu0 %v2625
        %v3143 = vpop.f32.mrf.mxu0
        %v3144 = vadd.f32 %v3131, %v3143
        %v3145 = vpop.f32.mrf.mxu0
        %3146 = vdwg.mxu0
        %3147 = vmatpush.bf16.msra.mxu0 %v1947
        %3148 = vmatpush.bf16.msra.mxu0 %v1933
        %3149 = vmatpush.bf16.msra.mxu0 %v1919
        %3150 = vmatpush.bf16.msra.mxu0 %v1905
        %3151 = vmatpush.bf16.msra.mxu0 %v1891
        %3152 = vmatpush.bf16.msra.mxu0 %v1877
        %3153 = vmatpush.bf16.msra.mxu0 %v1863
        %3154 = vmatpush.bf16.msra.mxu0 %v1849
        %3155 = vmatmul.bf16.gmra.mxu0 %v656
        %v3156 = vpop.f32.mrf.mxu0
        %v3157 = vadd.f32 %v632, %v3156
        %v3158 = vpop.f32.mrf.mxu0
        %3159 = vdwg.mxu0
        %3160 = vmatpush.bf16.msra.mxu0 %v2059
        %3161 = vmatpush.bf16.msra.mxu0 %v2045
        %3162 = vmatpush.bf16.msra.mxu0 %v2031
        %3163 = vmatpush.bf16.msra.mxu0 %v2017
        %3164 = vmatpush.bf16.msra.mxu0 %v2003
        %3165 = vmatpush.bf16.msra.mxu0 %v1989
        %3166 = vmatpush.bf16.msra.mxu0 %v1975
        %3167 = vmatpush.bf16.msra.mxu0 %v1961
        %3168 = vmatmul.bf16.gmra.mxu0 %v657
        %v3169 = vpop.f32.mrf.mxu0
        %v3170 = vadd.f32 %v3157, %v3169
        %v3171 = vpop.f32.mrf.mxu0
        %3172 = vdwg.mxu0
        %3173 = vmatpush.bf16.msra.mxu0 %v2171
        %3174 = vmatpush.bf16.msra.mxu0 %v2157
        %3175 = vmatpush.bf16.msra.mxu0 %v2143
        %3176 = vmatpush.bf16.msra.mxu0 %v2129
        %3177 = vmatpush.bf16.msra.mxu0 %v2115
        %3178 = vmatpush.bf16.msra.mxu0 %v2101
        %3179 = vmatpush.bf16.msra.mxu0 %v2087
        %3180 = vmatpush.bf16.msra.mxu0 %v2073
        %3181 = vmatmul.bf16.gmra.mxu0 %v658
        %v3182 = vpop.f32.mrf.mxu0
        %v3183 = vadd.f32 %v3170, %v3182
        %v3184 = vpop.f32.mrf.mxu0
        %3185 = vdwg.mxu0
        %3186 = vmatpush.bf16.msra.mxu0 0
        %3187 = vmatpush.bf16.msra.mxu0 0
        %3188 = vmatpush.bf16.msra.mxu0 0
        %3189 = vmatpush.bf16.msra.mxu0 0
        %3190 = vmatpush.bf16.msra.mxu0 %v2227
        %3191 = vmatpush.bf16.msra.mxu0 %v2213
        %3192 = vmatpush.bf16.msra.mxu0 %v2199
        %3193 = vmatpush.bf16.msra.mxu0 %v2185
        %3194 = vmatmul.bf16.gmra.mxu0 %v2625
        %v3195 = vpop.f32.mrf.mxu0
        %v3196 = vadd.f32 %v3183, %v3195
        %v3197 = vpop.f32.mrf.mxu0
        %3198 = vdwg.mxu0
        %3199 = vmatpush.bf16.msra.mxu0 %v1948
        %3200 = vmatpush.bf16.msra.mxu0 %v1934
        %3201 = vmatpush.bf16.msra.mxu0 %v1920
        %3202 = vmatpush.bf16.msra.mxu0 %v1906
        %3203 = vmatpush.bf16.msra.mxu0 %v1892
        %3204 = vmatpush.bf16.msra.mxu0 %v1878
        %3205 = vmatpush.bf16.msra.mxu0 %v1864
        %3206 = vmatpush.bf16.msra.mxu0 %v1850
        %3207 = vmatmul.bf16.gmra.mxu0 %v656
        %v3208 = vpop.f32.mrf.mxu0
        %v3209 = vadd.f32 %v633, %v3208
        %v3210 = vpop.f32.mrf.mxu0
        %3211 = vdwg.mxu0
        %3212 = vmatpush.bf16.msra.mxu0 %v2060
        %3213 = vmatpush.bf16.msra.mxu0 %v2046
        %3214 = vmatpush.bf16.msra.mxu0 %v2032
        %3215 = vmatpush.bf16.msra.mxu0 %v2018
        %3216 = vmatpush.bf16.msra.mxu0 %v2004
        %3217 = vmatpush.bf16.msra.mxu0 %v1990
        %3218 = vmatpush.bf16.msra.mxu0 %v1976
        %3219 = vmatpush.bf16.msra.mxu0 %v1962
        %3220 = vmatmul.bf16.gmra.mxu0 %v657
        %v3221 = vpop.f32.mrf.mxu0
        %v3222 = vadd.f32 %v3209, %v3221
        %v3223 = vpop.f32.mrf.mxu0
        %3224 = vdwg.mxu0
        %3225 = vmatpush.bf16.msra.mxu0 %v2172
        %3226 = vmatpush.bf16.msra.mxu0 %v2158
        %3227 = vmatpush.bf16.msra.mxu0 %v2144
        %3228 = vmatpush.bf16.msra.mxu0 %v2130
        %3229 = vmatpush.bf16.msra.mxu0 %v2116
        %3230 = vmatpush.bf16.msra.mxu0 %v2102
        %3231 = vmatpush.bf16.msra.mxu0 %v2088
        %3232 = vmatpush.bf16.msra.mxu0 %v2074
        %3233 = vmatmul.bf16.gmra.mxu0 %v658
        %v3234 = vpop.f32.mrf.mxu0
        %v3235 = vadd.f32 %v3222, %v3234
        %v3236 = vpop.f32.mrf.mxu0
        %3237 = vdwg.mxu0
        %3238 = vmatpush.bf16.msra.mxu0 0
        %3239 = vmatpush.bf16.msra.mxu0 0
        %3240 = vmatpush.bf16.msra.mxu0 0
        %3241 = vmatpush.bf16.msra.mxu0 0
        %3242 = vmatpush.bf16.msra.mxu0 %v2228
        %3243 = vmatpush.bf16.msra.mxu0 %v2214
        %3244 = vmatpush.bf16.msra.mxu0 %v2200
        %3245 = vmatpush.bf16.msra.mxu0 %v2186
        %3246 = vmatmul.bf16.gmra.mxu0 %v2625
        %v3247 = vpop.f32.mrf.mxu0
        %v3248 = vadd.f32 %v3235, %v3247
        %v3249 = vpop.f32.mrf.mxu0
        %3250 = vdwg.mxu0
        %3251 = vmatpush.bf16.msra.mxu0 %v1949
        %3252 = vmatpush.bf16.msra.mxu0 %v1935
        %3253 = vmatpush.bf16.msra.mxu0 %v1921
        %3254 = vmatpush.bf16.msra.mxu0 %v1907
        %3255 = vmatpush.bf16.msra.mxu0 %v1893
        %3256 = vmatpush.bf16.msra.mxu0 %v1879
        %3257 = vmatpush.bf16.msra.mxu0 %v1865
        %3258 = vmatpush.bf16.msra.mxu0 %v1851
        %3259 = vmatmul.bf16.gmra.mxu0 %v656
        %v3260 = vpop.f32.mrf.mxu0
        %v3261 = vadd.f32 %v634, %v3260
        %v3262 = vpop.f32.mrf.mxu0
        %3263 = vdwg.mxu0
        %3264 = vmatpush.bf16.msra.mxu0 %v2061
        %3265 = vmatpush.bf16.msra.mxu0 %v2047
        %3266 = vmatpush.bf16.msra.mxu0 %v2033
        %3267 = vmatpush.bf16.msra.mxu0 %v2019
        %3268 = vmatpush.bf16.msra.mxu0 %v2005
        %3269 = vmatpush.bf16.msra.mxu0 %v1991
        %3270 = vmatpush.bf16.msra.mxu0 %v1977
        %3271 = vmatpush.bf16.msra.mxu0 %v1963
        %3272 = vmatmul.bf16.gmra.mxu0 %v657
        %v3273 = vpop.f32.mrf.mxu0
        %v3274 = vadd.f32 %v3261, %v3273
        %v3275 = vpop.f32.mrf.mxu0
        %3276 = vdwg.mxu0
        %3277 = vmatpush.bf16.msra.mxu0 %v2173
        %3278 = vmatpush.bf16.msra.mxu0 %v2159
        %3279 = vmatpush.bf16.msra.mxu0 %v2145
        %3280 = vmatpush.bf16.msra.mxu0 %v2131
        %3281 = vmatpush.bf16.msra.mxu0 %v2117
        %3282 = vmatpush.bf16.msra.mxu0 %v2103
        %3283 = vmatpush.bf16.msra.mxu0 %v2089
        %3284 = vmatpush.bf16.msra.mxu0 %v2075
        %3285 = vmatmul.bf16.gmra.mxu0 %v658
        %v3286 = vpop.f32.mrf.mxu0
        %v3287 = vadd.f32 %v3274, %v3286
        %v3288 = vpop.f32.mrf.mxu0
        %3289 = vdwg.mxu0
        %3290 = vmatpush.bf16.msra.mxu0 0
        %3291 = vmatpush.bf16.msra.mxu0 0
        %3292 = vmatpush.bf16.msra.mxu0 0
        %3293 = vmatpush.bf16.msra.mxu0 0
        %3294 = vmatpush.bf16.msra.mxu0 %v2229
        %3295 = vmatpush.bf16.msra.mxu0 %v2215
        %3296 = vmatpush.bf16.msra.mxu0 %v2201
        %3297 = vmatpush.bf16.msra.mxu0 %v2187
        %3298 = vmatmul.bf16.gmra.mxu0 %v2625
        %v3299 = vpop.f32.mrf.mxu0
        %v3300 = vadd.f32 %v3287, %v3299
        %v3301 = vpop.f32.mrf.mxu0
        %3302 = vdwg.mxu0
        %3303 = vmatpush.bf16.msra.mxu0 %v1950
        %3304 = vmatpush.bf16.msra.mxu0 %v1936
        %3305 = vmatpush.bf16.msra.mxu0 %v1922
        %3306 = vmatpush.bf16.msra.mxu0 %v1908
        %3307 = vmatpush.bf16.msra.mxu0 %v1894
        %3308 = vmatpush.bf16.msra.mxu0 %v1880
        %3309 = vmatpush.bf16.msra.mxu0 %v1866
        %3310 = vmatpush.bf16.msra.mxu0 %v1852
        %3311 = vmatmul.bf16.gmra.mxu0 %v656
        %v3312 = vpop.f32.mrf.mxu0
        %v3313 = vadd.f32 %v635, %v3312
        %v3314 = vpop.f32.mrf.mxu0
        %3315 = vdwg.mxu0
        %3316 = vmatpush.bf16.msra.mxu0 %v2062
        %3317 = vmatpush.bf16.msra.mxu0 %v2048
        %3318 = vmatpush.bf16.msra.mxu0 %v2034
        %3319 = vmatpush.bf16.msra.mxu0 %v2020
        %3320 = vmatpush.bf16.msra.mxu0 %v2006
        %3321 = vmatpush.bf16.msra.mxu0 %v1992
        %3322 = vmatpush.bf16.msra.mxu0 %v1978
        %3323 = vmatpush.bf16.msra.mxu0 %v1964
        %3324 = vmatmul.bf16.gmra.mxu0 %v657
        %v3325 = vpop.f32.mrf.mxu0
        %v3326 = vadd.f32 %v3313, %v3325
        %v3327 = vpop.f32.mrf.mxu0
        %3328 = vdwg.mxu0
        %3329 = vmatpush.bf16.msra.mxu0 %v2174
        %3330 = vmatpush.bf16.msra.mxu0 %v2160
        %3331 = vmatpush.bf16.msra.mxu0 %v2146
        %3332 = vmatpush.bf16.msra.mxu0 %v2132
        %3333 = vmatpush.bf16.msra.mxu0 %v2118
        %3334 = vmatpush.bf16.msra.mxu0 %v2104
        %3335 = vmatpush.bf16.msra.mxu0 %v2090
        %3336 = vmatpush.bf16.msra.mxu0 %v2076
        %3337 = vmatmul.bf16.gmra.mxu0 %v658
        %v3338 = vpop.f32.mrf.mxu0
        %v3339 = vadd.f32 %v3326, %v3338
        %v3340 = vpop.f32.mrf.mxu0
        %3341 = vdwg.mxu0
        %3342 = vmatpush.bf16.msra.mxu0 0
        %3343 = vmatpush.bf16.msra.mxu0 0
        %3344 = vmatpush.bf16.msra.mxu0 0
        %3345 = vmatpush.bf16.msra.mxu0 0
        %3346 = vmatpush.bf16.msra.mxu0 %v2230
        %3347 = vmatpush.bf16.msra.mxu0 %v2216
        %3348 = vmatpush.bf16.msra.mxu0 %v2202
        %3349 = vmatpush.bf16.msra.mxu0 %v2188
        %3350 = vmatmul.bf16.gmra.mxu0 %v2625
        %v3351 = vpop.f32.mrf.mxu0
        %v3352 = vadd.f32 %v3339, %v3351
        %v3353 = vpop.f32.mrf.mxu0
        %3354 = vdwg.mxu0
        %vm3355 = vcmp.gt.f32.partialorder %v2676, 0.0
        %vm3356 = vcmp.gt.f32.partialorder %v2728, 0.0
        %vm3357 = vcmp.gt.f32.partialorder %v2780, 0.0
        %vm3358 = vcmp.gt.f32.partialorder %v2832, 0.0
        %vm3359 = vcmp.gt.f32.partialorder %v2884, 0.0
        %vm3360 = vcmp.gt.f32.partialorder %v2936, 0.0
        %vm3361 = vcmp.gt.f32.partialorder %v2988, 0.0
        %vm3362 = vcmp.gt.f32.partialorder %v3040, 0.0
        %vm3363 = vcmp.gt.f32.partialorder %v3092, 0.0
        %vm3364 = vcmp.gt.f32.partialorder %v3144, 0.0
        %vm3365 = vcmp.gt.f32.partialorder %v3196, 0.0
        %vm3366 = vcmp.gt.f32.partialorder %v3248, 0.0
        %vm3367 = vcmp.gt.f32.partialorder %v3300, 0.0
        %vm3368 = vcmp.gt.f32.partialorder %v3352, 0.0
        %v3369 = vmul.f32 %v2676, 0.01
        %v3370 = vmul.f32 %v2728, 0.01
        %v3371 = vmul.f32 %v2780, 0.01
        %v3372 = vmul.f32 %v2832, 0.01
        %v3373 = vmul.f32 %v2884, 0.01
        %v3374 = vmul.f32 %v2936, 0.01
        %v3375 = vmul.f32 %v2988, 0.01
        %v3376 = vmul.f32 %v3040, 0.01
        %v3377 = vmul.f32 %v3092, 0.01
        %v3378 = vmul.f32 %v3144, 0.01
        %v3379 = vmul.f32 %v3196, 0.01
        %v3380 = vmul.f32 %v3248, 0.01
        %v3381 = vmul.f32 %v3300, 0.01
        %v3382 = vmul.f32 %v3352, 0.01
        %v3383 = vsel %vm3355, %v2676, %v3369
        %v3384 = vsel %vm3356, %v2728, %v3370
        %v3385 = vsel %vm3357, %v2780, %v3371
        %v3386 = vsel %vm3358, %v2832, %v3372
        %v3387 = vsel %vm3359, %v2884, %v3373
        %v3388 = vsel %vm3360, %v2936, %v3374
        %v3389 = vsel %vm3361, %v2988, %v3375
        %v3390 = vsel %vm3362, %v3040, %v3376
        %v3391 = vsel %vm3363, %v3092, %v3377
        %v3392 = vsel %vm3364, %v3144, %v3378
        %v3393 = vsel %vm3365, %v3196, %v3379
        %v3394 = vsel %vm3366, %v3248, %v3380
        %v3395 = vsel %vm3367, %v3300, %v3381
        %v3396 = vsel %vm3368, %v3352, %v3382
        %v3397 = vpack.c.bf16 %v3383, %v3383
        %v3398 = vpack.c.bf16 %v3384, %v3384
        %v3399 = vpack.c.bf16 %v3385, %v3385
        %v3400 = vpack.c.bf16 %v3386, %v3386
        %v3401 = vpack.c.bf16 %v3387, %v3387
        %v3402 = vpack.c.bf16 %v3388, %v3388
        %v3403 = vpack.c.bf16 %v3389, %v3389
        %v3404 = vpack.c.bf16 %v3390, %v3390
        %v3405 = vpack.c.bf16 %v3391, %v3391
        %v3406 = vpack.c.bf16 %v3392, %v3392
        %v3407 = vpack.c.bf16 %v3393, %v3393
        %v3408 = vpack.c.bf16 %v3394, %v3394
        %v3409 = vpack.c.bf16 %v3395, %v3395
        %v3410 = vpack.c.bf16 %v3396, %v3396
        %v3411 = vld [vmem:[%s3] sm:$0xff]
        %v3412 = vld [vmem:[%s3 + $0x8] sm:$0xff]
        %v3413 = vld [vmem:[%s3 + $0x10] sm:$0xff]
        %v3414 = vld [vmem:[%s3 + $0x18] sm:$0xff]
        %v3415 = vld [vmem:[%s3 + $0x20] sm:$0xff]
        %v3416 = vld [vmem:[%s3 + $0x28] sm:$0xff]
        %v3417 = vld [vmem:[%s3 + $0x30] sm:$0xff]
        %v3418 = vld [vmem:[%s3 + $0x38] sm:$0xff]
        %v3419 = vld [vmem:[%s3 + $0x40] sm:$0xff]
        %v3420 = vld [vmem:[%s3 + $0x48] sm:$0xff]
        %v3421 = vld [vmem:[%s3 + $0x50] sm:$0xff]
        %v3422 = vld [vmem:[%s3 + $0x58] sm:$0xff]
        %v3423 = vld [vmem:[%s3 + $0x60] sm:$0xff]
        %v3424 = vld [vmem:[%s3 + $0x68] sm:$0xff]
        %v3425 = vld [vmem:[%s3 + $0x70] sm:$0xff]
        %v3426 = vld [vmem:[%s3 + $0x78] sm:$0xff]
        %v3427 = vld [vmem:[%s3 + $0x80] sm:$0xff]
        %v3428 = vld [vmem:[%s3 + $0x88] sm:$0xff]
        %v3429 = vld [vmem:[%s3 + $0x90] sm:$0xff]
        %v3430 = vld [vmem:[%s3 + $0x98] sm:$0xff]
        %v3431 = vld [vmem:[%s3 + $0xa0] sm:$0xff]
        %v3432 = vld [vmem:[%s3 + $0xa8] sm:$0xff]
        %v3433 = vld [vmem:[%s3 + $0xb0] sm:$0xff]
        %v3434 = vld [vmem:[%s3 + $0xb8] sm:$0xff]
        %v3435 = vld [vmem:[%s3 + $0xc0] sm:$0xff]
        %v3436 = vld [vmem:[%s3 + $0xc8] sm:$0xff]
        %v3437 = vld [vmem:[%s3 + $0xd0] sm:$0xff]
        %v3438 = vld [vmem:[%s3 + $0xd8] sm:$0xff]
        %v3439 = vld [vmem:[%s3 + $0xe0] sm:$0xff]
        %v3440 = vld [vmem:[%s3 + $0xe8] sm:$0xff]
        %v3441 = vld [vmem:[%s3 + $0xf0] sm:$0xff]
        %v3442 = vld [vmem:[%s3 + $0xf8] sm:$0xff]
        %v3443 = vld [vmem:[%s3 + $0x100] sm:$0xff]
        %v3444 = vld [vmem:[%s3 + $0x108] sm:$0xff]
        %v3445 = vld [vmem:[%s3 + $0x110] sm:$0xff]
        %v3446 = vld [vmem:[%s3 + $0x118] sm:$0xff]
        %v3447 = vld [vmem:[%s3 + $0x120] sm:$0xff]
        %v3448 = vld [vmem:[%s3 + $0x128] sm:$0xff]
        %v3449 = vld [vmem:[%s3 + $0x130] sm:$0xff]
        %v3450 = vld [vmem:[%s3 + $0x138] sm:$0xff]
        %v3451 = vld [vmem:[%s3 + $0x140] sm:$0xff]
        %v3452 = vld [vmem:[%s3 + $0x148] sm:$0xff]
        %v3453 = vld [vmem:[%s3 + $0x150] sm:$0xff]
        %v3454 = vld [vmem:[%s3 + $0x158] sm:$0xff]
        %v3455 = vld [vmem:[%s3 + $0x160] sm:$0xff]
        %v3456 = vld [vmem:[%s3 + $0x168] sm:$0xff]
        %v3457 = vld [vmem:[%s3 + $0x170] sm:$0xff]
        %v3458 = vld [vmem:[%s3 + $0x178] sm:$0xff]
        %v3459 = vld [vmem:[%s3 + $0x180] sm:$0xff]
        %v3460 = vld [vmem:[%s3 + $0x188] sm:$0xff]
        %v3461 = vld [vmem:[%s3 + $0x190] sm:$0xff]
        %v3462 = vld [vmem:[%s3 + $0x198] sm:$0xff]
        %v3463 = vld [vmem:[%s3 + $0x1a0] sm:$0xff]
        %v3464 = vld [vmem:[%s3 + $0x1a8] sm:$0xff]
        %v3465 = vld [vmem:[%s3 + $0x1b0] sm:$0xff]
        %v3466 = vld [vmem:[%s3 + $0x1b8] sm:$0xff]
        %v3467 = vld [vmem:[%s3 + $0x1c0] sm:$0xff]
        %v3468 = vld [vmem:[%s3 + $0x1c8] sm:$0xff]
        %v3469 = vld [vmem:[%s3 + $0x1d0] sm:$0xff]
        %v3470 = vld [vmem:[%s3 + $0x1d8] sm:$0xff]
        %v3471 = vld [vmem:[%s3 + $0x1e0] sm:$0xff]
        %v3472 = vld [vmem:[%s3 + $0x1e8] sm:$0xff]
        %v3473 = vld [vmem:[%s3 + $0x1f0] sm:$0xff]
        %v3474 = vld [vmem:[%s3 + $0x1f8] sm:$0xff]
        %v3475 = vld [vmem:[%s3 + $0x200] sm:$0xff]
        %v3476 = vld [vmem:[%s3 + $0x208] sm:$0xff]
        %v3477 = vld [vmem:[%s3 + $0x210] sm:$0xff]
        %v3478 = vld [vmem:[%s3 + $0x218] sm:$0xff]
        %v3479 = vld [vmem:[%s3 + $0x220] sm:$0xff]
        %v3480 = vld [vmem:[%s3 + $0x228] sm:$0xff]
        %v3481 = vld [vmem:[%s3 + $0x230] sm:$0xff]
        %v3482 = vld [vmem:[%s3 + $0x238] sm:$0xff]
        %v3483 = vld [vmem:[%s3 + $0x240] sm:$0xff]
        %v3484 = vld [vmem:[%s3 + $0x248] sm:$0xff]
        %v3485 = vld [vmem:[%s3 + $0x250] sm:$0xff]
        %v3486 = vld [vmem:[%s3 + $0x258] sm:$0xff]
        %v3487 = vld [vmem:[%s3 + $0x260] sm:$0xff]
        %v3488 = vld [vmem:[%s3 + $0x268] sm:$0xff]
        %v3489 = vld [vmem:[%s3 + $0x270] sm:$0xff]
        %v3490 = vld [vmem:[%s3 + $0x278] sm:$0xff]
        %v3491 = vld [vmem:[%s3 + $0x280] sm:$0xff]
        %v3492 = vld [vmem:[%s3 + $0x288] sm:$0xff]
        %v3493 = vld [vmem:[%s3 + $0x290] sm:$0xff]
        %v3494 = vld [vmem:[%s3 + $0x298] sm:$0xff]
        %v3495 = vld [vmem:[%s3 + $0x2a0] sm:$0xff]
        %v3496 = vld [vmem:[%s3 + $0x2a8] sm:$0xff]
        %v3497 = vld [vmem:[%s3 + $0x2b0] sm:$0xff]
        %v3498 = vld [vmem:[%s3 + $0x2b8] sm:$0xff]
        %v3499 = vld [vmem:[%s3 + $0x2c0] sm:$0xff]
        %v3500 = vld [vmem:[%s3 + $0x2c8] sm:$0xff]
        %v3501 = vld [vmem:[%s3 + $0x2d0] sm:$0xff]
        %v3502 = vld [vmem:[%s3 + $0x2d8] sm:$0xff]
        %v3503 = vld [vmem:[%s3 + $0x2e0] sm:$0xff]
        %v3504 = vld [vmem:[%s3 + $0x2e8] sm:$0xff]
        %v3505 = vld [vmem:[%s3 + $0x2f0] sm:$0xff]
        %v3506 = vld [vmem:[%s3 + $0x2f8] sm:$0xff]
        %v3507 = vld [vmem:[%s3 + $0x300] sm:$0xff]
        %v3508 = vld [vmem:[%s3 + $0x308] sm:$0xff]
        %v3509 = vld [vmem:[%s3 + $0x310] sm:$0xff]
        %v3510 = vld [vmem:[%s3 + $0x318] sm:$0xff]
        %v3511 = vld [vmem:[%s3 + $0x320] sm:$0xff]
        %v3512 = vld [vmem:[%s3 + $0x328] sm:$0xff]
        %v3513 = vld [vmem:[%s3 + $0x330] sm:$0xff]
        %v3514 = vld [vmem:[%s3 + $0x338] sm:$0xff]
        %v3515 = vld [vmem:[%s3 + $0x340] sm:$0xff]
        %v3516 = vld [vmem:[%s3 + $0x348] sm:$0xff]
        %v3517 = vld [vmem:[%s3 + $0x350] sm:$0xff]
        %v3518 = vld [vmem:[%s3 + $0x358] sm:$0xff]
        %v3519 = vld [vmem:[%s3 + $0x360] sm:$0xff]
        %v3520 = vld [vmem:[%s3 + $0x368] sm:$0xff]
        %v3521 = vld [vmem:[%s3 + $0x370] sm:$0xff]
        %v3522 = vld [vmem:[%s3 + $0x378] sm:$0xff]
        %v3523 = vld [vmem:[%s3 + $0x380] sm:$0xff]
        %v3524 = vld [vmem:[%s3 + $0x388] sm:$0xff]
        %v3525 = vld [vmem:[%s3 + $0x390] sm:$0xff]
        %v3526 = vld [vmem:[%s3 + $0x398] sm:$0xff]
        %v3527 = vld [vmem:[%s3 + $0x3a0] sm:$0xff]
        %v3528 = vld [vmem:[%s3 + $0x3a8] sm:$0xff]
        %v3529 = vld [vmem:[%s3 + $0x3b0] sm:$0xff]
        %v3530 = vld [vmem:[%s3 + $0x3b8] sm:$0xff]
        %v3531 = vld [vmem:[%s3 + $0x3c0] sm:$0xff]
        %v3532 = vld [vmem:[%s3 + $0x3c8] sm:$0xff]
        %v3533 = vld [vmem:[%s3 + $0x3d0] sm:$0xff]
        %v3534 = vld [vmem:[%s3 + $0x3d8] sm:$0xff]
        %v3535 = vld [vmem:[%s3 + $0x3e0] sm:$0xff]
        %v3536 = vld [vmem:[%s3 + $0x3e8] sm:$0xff]
        %v3537 = vld [vmem:[%s3 + $0x3f0] sm:$0xff]
        %v3538 = vld [vmem:[%s3 + $0x3f8] sm:$0xff]
        %v3539 = vld [vmem:[%s3 + $0x400] sm:$0xff]
        %v3540 = vld [vmem:[%s3 + $0x408] sm:$0xff]
        %v3541 = vld [vmem:[%s3 + $0x410] sm:$0xff]
        %v3542 = vld [vmem:[%s3 + $0x418] sm:$0xff]
        %v3543 = vld [vmem:[%s3 + $0x420] sm:$0xff]
        %v3544 = vld [vmem:[%s3 + $0x428] sm:$0xff]
        %v3545 = vld [vmem:[%s3 + $0x430] sm:$0xff]
        %v3546 = vld [vmem:[%s3 + $0x438] sm:$0xff]
        %v3547 = vld [vmem:[%s3 + $0x440] sm:$0xff]
        %v3548 = vld [vmem:[%s3 + $0x448] sm:$0xff]
        %v3549 = vld [vmem:[%s3 + $0x450] sm:$0xff]
        %v3550 = vld [vmem:[%s3 + $0x458] sm:$0xff]
        %v3551 = vld [vmem:[%s3 + $0x460] sm:$0xff]
        %v3552 = vld [vmem:[%s3 + $0x468] sm:$0xff]
        %v3553 = vld [vmem:[%s3 + $0x470] sm:$0xff]
        %v3554 = vld [vmem:[%s3 + $0x478] sm:$0xff]
        %v3555 = vld [vmem:[%s3 + $0x480] sm:$0xff]
        %v3556 = vld [vmem:[%s3 + $0x488] sm:$0xff]
        %v3557 = vld [vmem:[%s3 + $0x490] sm:$0xff]
        %v3558 = vld [vmem:[%s3 + $0x498] sm:$0xff]
        %v3559 = vld [vmem:[%s3 + $0x4a0] sm:$0xff]
        %v3560 = vld [vmem:[%s3 + $0x4a8] sm:$0xff]
        %v3561 = vld [vmem:[%s3 + $0x4b0] sm:$0xff]
        %v3562 = vld [vmem:[%s3 + $0x4b8] sm:$0xff]
        %v3563 = vld [vmem:[%s3 + $0x4c0] sm:$0xff]
        %v3564 = vld [vmem:[%s3 + $0x4c8] sm:$0xff]
        %v3565 = vld [vmem:[%s3 + $0x4d0] sm:$0xff]
        %v3566 = vld [vmem:[%s3 + $0x4d8] sm:$0xff]
        %v3567 = vld [vmem:[%s3 + $0x4e0] sm:$0xff]
        %v3568 = vld [vmem:[%s3 + $0x4e8] sm:$0xff]
        %v3569 = vld [vmem:[%s3 + $0x4f0] sm:$0xff]
        %v3570 = vld [vmem:[%s3 + $0x4f8] sm:$0xff]
        %v3571 = vld [vmem:[%s3 + $0x500] sm:$0xff]
        %v3572 = vld [vmem:[%s3 + $0x508] sm:$0xff]
        %v3573 = vld [vmem:[%s3 + $0x510] sm:$0xff]
        %v3574 = vld [vmem:[%s3 + $0x518] sm:$0xff]
        %v3575 = vld [vmem:[%s3 + $0x520] sm:$0xff]
        %v3576 = vld [vmem:[%s3 + $0x528] sm:$0xff]
        %v3577 = vld [vmem:[%s3 + $0x530] sm:$0xff]
        %v3578 = vld [vmem:[%s3 + $0x538] sm:$0xff]
        %v3579 = vld [vmem:[%s3 + $0x540] sm:$0xff]
        %v3580 = vld [vmem:[%s3 + $0x548] sm:$0xff]
        %v3581 = vld [vmem:[%s3 + $0x550] sm:$0xff]
        %v3582 = vld [vmem:[%s3 + $0x558] sm:$0xff]
        %v3583 = vld [vmem:[%s3 + $0x560] sm:$0xff]
        %v3584 = vld [vmem:[%s3 + $0x568] sm:$0xff]
        %v3585 = vld [vmem:[%s3 + $0x570] sm:$0xff]
        %v3586 = vld [vmem:[%s3 + $0x578] sm:$0xff]
        %v3587 = vld [vmem:[%s3 + $0x580] sm:$0xff]
        %v3588 = vld [vmem:[%s3 + $0x588] sm:$0xff]
        %v3589 = vld [vmem:[%s3 + $0x590] sm:$0xff]
        %v3590 = vld [vmem:[%s3 + $0x598] sm:$0xff]
        %v3591 = vld [vmem:[%s3 + $0x5a0] sm:$0xff]
        %v3592 = vld [vmem:[%s3 + $0x5a8] sm:$0xff]
        %v3593 = vld [vmem:[%s3 + $0x5b0] sm:$0xff]
        %v3594 = vld [vmem:[%s3 + $0x5b8] sm:$0xff]
        %v3595 = vld [vmem:[%s3 + $0x5c0] sm:$0xff]
        %v3596 = vld [vmem:[%s3 + $0x5c8] sm:$0xff]
        %v3597 = vld [vmem:[%s3 + $0x5d0] sm:$0xff]
        %v3598 = vld [vmem:[%s3 + $0x5d8] sm:$0xff]
        %v3599 = vld [vmem:[%s3 + $0x5e0] sm:$0xff]
        %v3600 = vld [vmem:[%s3 + $0x5e8] sm:$0xff]
        %v3601 = vld [vmem:[%s3 + $0x5f0] sm:$0xff]
        %v3602 = vld [vmem:[%s3 + $0x5f8] sm:$0xff]
        %v3603 = vld [vmem:[%s3 + $0x600] sm:$0xff]
        %v3604 = vld [vmem:[%s3 + $0x608] sm:$0xff]
        %v3605 = vld [vmem:[%s3 + $0x610] sm:$0xff]
        %v3606 = vld [vmem:[%s3 + $0x618] sm:$0xff]
        %v3607 = vld [vmem:[%s3 + $0x620] sm:$0xff]
        %v3608 = vld [vmem:[%s3 + $0x628] sm:$0xff]
        %v3609 = vld [vmem:[%s3 + $0x630] sm:$0xff]
        %v3610 = vld [vmem:[%s3 + $0x638] sm:$0xff]
        %v3611 = vld [vmem:[%s3 + $0x640] sm:$0xff]
        %v3612 = vld [vmem:[%s3 + $0x648] sm:$0xff]
        %v3613 = vld [vmem:[%s3 + $0x650] sm:$0xff]
        %v3614 = vld [vmem:[%s3 + $0x658] sm:$0xff]
        %v3615 = vld [vmem:[%s3 + $0x660] sm:$0xff]
        %v3616 = vld [vmem:[%s3 + $0x668] sm:$0xff]
        %v3617 = vld [vmem:[%s3 + $0x670] sm:$0xff]
        %v3618 = vld [vmem:[%s3 + $0x678] sm:$0xff]
        %v3619 = vld [vmem:[%s3 + $0x680] sm:$0xff]
        %v3620 = vld [vmem:[%s3 + $0x688] sm:$0xff]
        %v3621 = vld [vmem:[%s3 + $0x690] sm:$0xff]
        %v3622 = vld [vmem:[%s3 + $0x698] sm:$0xff]
        %v3623 = vld [vmem:[%s3 + $0x6a0] sm:$0xff]
        %v3624 = vld [vmem:[%s3 + $0x6a8] sm:$0xff]
        %v3625 = vld [vmem:[%s3 + $0x6b0] sm:$0xff]
        %v3626 = vld [vmem:[%s3 + $0x6b8] sm:$0xff]
        %v3627 = vld [vmem:[%s3 + $0x6c0] sm:$0xff]
        %v3628 = vld [vmem:[%s3 + $0x6c8] sm:$0xff]
        %v3629 = vld [vmem:[%s3 + $0x6d0] sm:$0xff]
        %v3630 = vld [vmem:[%s3 + $0x6d8] sm:$0xff]
        %v3631 = vld [vmem:[%s3 + $0x6e0] sm:$0xff]
        %v3632 = vld [vmem:[%s3 + $0x6e8] sm:$0xff]
        %v3633 = vld [vmem:[%s3 + $0x6f0] sm:$0xff]
        %v3634 = vld [vmem:[%s3 + $0x6f8] sm:$0xff]
        %v3635 = vld [vmem:[%s3 + $0x700] sm:$0xff]
        %v3636 = vld [vmem:[%s3 + $0x708] sm:$0xff]
        %v3637 = vld [vmem:[%s3 + $0x710] sm:$0xff]
        %v3638 = vld [vmem:[%s3 + $0x718] sm:$0xff]
        %v3639 = vld [vmem:[%s3 + $0x720] sm:$0xff]
        %v3640 = vld [vmem:[%s3 + $0x728] sm:$0xff]
        %v3641 = vld [vmem:[%s3 + $0x730] sm:$0xff]
        %v3642 = vld [vmem:[%s3 + $0x738] sm:$0xff]
        %v3643 = vld [vmem:[%s3 + $0x740] sm:$0xff]
        %v3644 = vld [vmem:[%s3 + $0x748] sm:$0xff]
        %v3645 = vld [vmem:[%s3 + $0x750] sm:$0xff]
        %v3646 = vld [vmem:[%s3 + $0x758] sm:$0xff]
        %v3647 = vld [vmem:[%s3 + $0x760] sm:$0xff]
        %v3648 = vld [vmem:[%s3 + $0x768] sm:$0xff]
        %v3649 = vld [vmem:[%s3 + $0x770] sm:$0xff]
        %v3650 = vld [vmem:[%s3 + $0x778] sm:$0xff]
        %v3651 = vld [vmem:[%s3 + $0x780] sm:$0xff]
        %v3652 = vld [vmem:[%s3 + $0x788] sm:$0xff]
        %v3653 = vld [vmem:[%s3 + $0x790] sm:$0xff]
        %v3654 = vld [vmem:[%s3 + $0x798] sm:$0xff]
        %v3655 = vld [vmem:[%s3 + $0x7a0] sm:$0xff]
        %v3656 = vld [vmem:[%s3 + $0x7a8] sm:$0xff]
        %v3657 = vld [vmem:[%s3 + $0x7b0] sm:$0xff]
        %v3658 = vld [vmem:[%s3 + $0x7b8] sm:$0xff]
        %v3659 = vld [vmem:[%s3 + $0x7c0] sm:$0xff]
        %v3660 = vld [vmem:[%s3 + $0x7c8] sm:$0xff]
        %v3661 = vld [vmem:[%s3 + $0x7d0] sm:$0xff]
        %v3662 = vld [vmem:[%s3 + $0x7d8] sm:$0xff]
        %v3663 = vld [vmem:[%s3 + $0x7e0] sm:$0xff]
        %v3664 = vld [vmem:[%s3 + $0x7e8] sm:$0xff]
        %v3665 = vld [vmem:[%s3 + $0x7f0] sm:$0xff]
        %v3666 = vld [vmem:[%s3 + $0x7f8] sm:$0xff]
        %v3667 = vld [vmem:[%s3 + $0x800] sm:$0xff]
        %v3668 = vld [vmem:[%s3 + $0x808] sm:$0xff]
        %v3669 = vld [vmem:[%s3 + $0x810] sm:$0xff]
        %v3670 = vld [vmem:[%s3 + $0x818] sm:$0xff]
        %v3671 = vld [vmem:[%s3 + $0x820] sm:$0xff]
        %v3672 = vld [vmem:[%s3 + $0x828] sm:$0xff]
        %v3673 = vld [vmem:[%s3 + $0x830] sm:$0xff]
        %v3674 = vld [vmem:[%s3 + $0x838] sm:$0xff]
        %v3675 = vld [vmem:[%s3 + $0x840] sm:$0xff]
        %v3676 = vld [vmem:[%s3 + $0x848] sm:$0xff]
        %v3677 = vld [vmem:[%s3 + $0x850] sm:$0xff]
        %v3678 = vld [vmem:[%s3 + $0x858] sm:$0xff]
        %v3679 = vld [vmem:[%s3 + $0x860] sm:$0xff]
        %v3680 = vld [vmem:[%s3 + $0x868] sm:$0xff]
        %v3681 = vld [vmem:[%s3 + $0x870] sm:$0xff]
        %v3682 = vld [vmem:[%s3 + $0x878] sm:$0xff]
        %v3683 = vld [vmem:[%s3 + $0x880] sm:$0xff]
        %v3684 = vld [vmem:[%s3 + $0x888] sm:$0xff]
        %v3685 = vld [vmem:[%s3 + $0x890] sm:$0xff]
        %v3686 = vld [vmem:[%s3 + $0x898] sm:$0xff]
        %v3687 = vld [vmem:[%s3 + $0x8a0] sm:$0xff]
        %v3688 = vld [vmem:[%s3 + $0x8a8] sm:$0xff]
        %v3689 = vld [vmem:[%s3 + $0x8b0] sm:$0xff]
        %v3690 = vld [vmem:[%s3 + $0x8b8] sm:$0xff]
        %v3691 = vld [vmem:[%s3 + $0x8c0] sm:$0xff]
        %v3692 = vld [vmem:[%s3 + $0x8c8] sm:$0xff]
        %v3693 = vld [vmem:[%s3 + $0x8d0] sm:$0xff]
        %v3694 = vld [vmem:[%s3 + $0x8d8] sm:$0xff]
        %v3695 = vld [vmem:[%s3 + $0x8e0] sm:$0xff]
        %v3696 = vld [vmem:[%s3 + $0x8e8] sm:$0xff]
        %v3697 = vld [vmem:[%s3 + $0x8f0] sm:$0xff]
        %v3698 = vld [vmem:[%s3 + $0x8f8] sm:$0xff]
        %v3699 = vld [vmem:[%s3 + $0x900] sm:$0xff]
        %v3700 = vld [vmem:[%s3 + $0x908] sm:$0xff]
        %v3701 = vld [vmem:[%s3 + $0x910] sm:$0xff]
        %v3702 = vld [vmem:[%s3 + $0x918] sm:$0xff]
        %v3703 = vld [vmem:[%s3 + $0x920] sm:$0xff]
        %v3704 = vld [vmem:[%s3 + $0x928] sm:$0xff]
        %v3705 = vld [vmem:[%s3 + $0x930] sm:$0xff]
        %v3706 = vld [vmem:[%s3 + $0x938] sm:$0xff]
        %v3707 = vld [vmem:[%s3 + $0x940] sm:$0xff]
        %v3708 = vld [vmem:[%s3 + $0x948] sm:$0xff]
        %v3709 = vld [vmem:[%s3 + $0x950] sm:$0xff]
        %v3710 = vld [vmem:[%s3 + $0x958] sm:$0xff]
        %v3711 = vld [vmem:[%s3 + $0x960] sm:$0xff]
        %v3712 = vld [vmem:[%s3 + $0x968] sm:$0xff]
        %v3713 = vld [vmem:[%s3 + $0x970] sm:$0xff]
        %v3714 = vld [vmem:[%s3 + $0x978] sm:$0xff]
        %v3715 = vld [vmem:[%s3 + $0x980] sm:$0xff]
        %v3716 = vld [vmem:[%s3 + $0x988] sm:$0xff]
        %v3717 = vld [vmem:[%s3 + $0x990] sm:$0xff]
        %v3718 = vld [vmem:[%s3 + $0x998] sm:$0xff]
        %v3719 = vld [vmem:[%s3 + $0x9a0] sm:$0xff]
        %v3720 = vld [vmem:[%s3 + $0x9a8] sm:$0xff]
        %v3721 = vld [vmem:[%s3 + $0x9b0] sm:$0xff]
        %v3722 = vld [vmem:[%s3 + $0x9b8] sm:$0xff]
        %v3723 = vld [vmem:[%s3 + $0x9c0] sm:$0xff]
        %v3724 = vld [vmem:[%s3 + $0x9c8] sm:$0xff]
        %v3725 = vld [vmem:[%s3 + $0x9d0] sm:$0xff]
        %v3726 = vld [vmem:[%s3 + $0x9d8] sm:$0xff]
        %v3727 = vld [vmem:[%s3 + $0x9e0] sm:$0xff]
        %v3728 = vld [vmem:[%s3 + $0x9e8] sm:$0xff]
        %v3729 = vld [vmem:[%s3 + $0x9f0] sm:$0xff]
        %v3730 = vld [vmem:[%s3 + $0x9f8] sm:$0xff]
        %v3731 = vld [vmem:[%s3 + $0xa00] sm:$0xff]
        %v3732 = vld [vmem:[%s3 + $0xa08] sm:$0xff]
        %v3733 = vld [vmem:[%s3 + $0xa10] sm:$0xff]
        %v3734 = vld [vmem:[%s3 + $0xa18] sm:$0xff]
        %v3735 = vld [vmem:[%s3 + $0xa20] sm:$0xff]
        %v3736 = vld [vmem:[%s3 + $0xa28] sm:$0xff]
        %v3737 = vld [vmem:[%s3 + $0xa30] sm:$0xff]
        %v3738 = vld [vmem:[%s3 + $0xa38] sm:$0xff]
        %v3739 = vld [vmem:[%s3 + $0xa40] sm:$0xff]
        %v3740 = vld [vmem:[%s3 + $0xa48] sm:$0xff]
        %v3741 = vld [vmem:[%s3 + $0xa50] sm:$0xff]
        %v3742 = vld [vmem:[%s3 + $0xa58] sm:$0xff]
        %v3743 = vld [vmem:[%s3 + $0xa60] sm:$0xff]
        %v3744 = vld [vmem:[%s3 + $0xa68] sm:$0xff]
        %v3745 = vld [vmem:[%s3 + $0xa70] sm:$0xff]
        %v3746 = vld [vmem:[%s3 + $0xa78] sm:$0xff]
        %v3747 = vld [vmem:[%s3 + $0xa80] sm:$0xff]
        %v3748 = vld [vmem:[%s3 + $0xa88] sm:$0xff]
        %v3749 = vld [vmem:[%s3 + $0xa90] sm:$0xff]
        %v3750 = vld [vmem:[%s3 + $0xa98] sm:$0xff]
        %v3751 = vld [vmem:[%s3 + $0xaa0] sm:$0xff]
        %v3752 = vld [vmem:[%s3 + $0xaa8] sm:$0xff]
        %v3753 = vld [vmem:[%s3 + $0xab0] sm:$0xff]
        %v3754 = vld [vmem:[%s3 + $0xab8] sm:$0xff]
        %v3755 = vld [vmem:[%s3 + $0xac0] sm:$0xff]
        %v3756 = vld [vmem:[%s3 + $0xac8] sm:$0xff]
        %v3757 = vld [vmem:[%s3 + $0xad0] sm:$0xff]
        %v3758 = vld [vmem:[%s3 + $0xad8] sm:$0xff]
        %v3759 = vld [vmem:[%s3 + $0xae0] sm:$0xff]
        %v3760 = vld [vmem:[%s3 + $0xae8] sm:$0xff]
        %v3761 = vld [vmem:[%s3 + $0xaf0] sm:$0xff]
        %v3762 = vld [vmem:[%s3 + $0xaf8] sm:$0xff]
        %v3763 = vld [vmem:[%s3 + $0xb00] sm:$0xff]
        %v3764 = vld [vmem:[%s3 + $0xb08] sm:$0xff]
        %v3765 = vld [vmem:[%s3 + $0xb10] sm:$0xff]
        %v3766 = vld [vmem:[%s3 + $0xb18] sm:$0xff]
        %v3767 = vld [vmem:[%s3 + $0xb20] sm:$0xff]
        %v3768 = vld [vmem:[%s3 + $0xb28] sm:$0xff]
        %v3769 = vld [vmem:[%s3 + $0xb30] sm:$0xff]
        %v3770 = vld [vmem:[%s3 + $0xb38] sm:$0xff]
        %v3771 = vld [vmem:[%s3 + $0xb40] sm:$0xff]
        %v3772 = vld [vmem:[%s3 + $0xb48] sm:$0xff]
        %v3773 = vld [vmem:[%s3 + $0xb50] sm:$0xff]
        %v3774 = vld [vmem:[%s3 + $0xb58] sm:$0xff]
        %v3775 = vld [vmem:[%s3 + $0xb60] sm:$0xff]
        %v3776 = vld [vmem:[%s3 + $0xb68] sm:$0xff]
        %v3777 = vld [vmem:[%s3 + $0xb70] sm:$0xff]
        %v3778 = vld [vmem:[%s3 + $0xb78] sm:$0xff]
        %v3779 = vld [vmem:[%s3 + $0xb80] sm:$0xff]
        %v3780 = vld [vmem:[%s3 + $0xb88] sm:$0xff]
        %v3781 = vld [vmem:[%s3 + $0xb90] sm:$0xff]
        %v3782 = vld [vmem:[%s3 + $0xb98] sm:$0xff]
        %v3783 = vld [vmem:[%s3 + $0xba0] sm:$0xff]
        %v3784 = vld [vmem:[%s3 + $0xba8] sm:$0xff]
        %v3785 = vld [vmem:[%s3 + $0xbb0] sm:$0xff]
        %v3786 = vld [vmem:[%s3 + $0xbb8] sm:$0xff]
        %v3787 = vld [vmem:[%s3 + $0xbc0] sm:$0xff]
        %v3788 = vld [vmem:[%s3 + $0xbc8] sm:$0xff]
        %v3789 = vld [vmem:[%s3 + $0xbd0] sm:$0xff]
        %v3790 = vld [vmem:[%s3 + $0xbd8] sm:$0xff]
        %v3791 = vld [vmem:[%s3 + $0xbe0] sm:$0xff]
        %v3792 = vld [vmem:[%s3 + $0xbe8] sm:$0xff]
        %v3793 = vld [vmem:[%s3 + $0xbf0] sm:$0xff]
        %v3794 = vld [vmem:[%s3 + $0xbf8] sm:$0xff]
        %v3795 = vld [vmem:[%s3 + $0xc00] sm:$0xff]
        %v3796 = vld [vmem:[%s3 + $0xc08] sm:$0xff]
        %v3797 = vld [vmem:[%s3 + $0xc10] sm:$0xff]
        %v3798 = vld [vmem:[%s3 + $0xc18] sm:$0xff]
        %v3799 = vld [vmem:[%s3 + $0xc20] sm:$0xff]
        %v3800 = vld [vmem:[%s3 + $0xc28] sm:$0xff]
        %v3801 = vld [vmem:[%s3 + $0xc30] sm:$0xff]
        %v3802 = vld [vmem:[%s3 + $0xc38] sm:$0xff]
        %v3803 = vld [vmem:[%s3 + $0xc40] sm:$0xff]
        %v3804 = vld [vmem:[%s3 + $0xc48] sm:$0xff]
        %v3805 = vld [vmem:[%s3 + $0xc50] sm:$0xff]
        %v3806 = vld [vmem:[%s3 + $0xc58] sm:$0xff]
        %v3807 = vld [vmem:[%s3 + $0xc60] sm:$0xff]
        %v3808 = vld [vmem:[%s3 + $0xc68] sm:$0xff]
        %v3809 = vld [vmem:[%s3 + $0xc70] sm:$0xff]
        %v3810 = vld [vmem:[%s3 + $0xc78] sm:$0xff]
        %v3811 = vld [vmem:[%s3 + $0xc80] sm:$0xff]
        %v3812 = vld [vmem:[%s3 + $0xc88] sm:$0xff]
        %v3813 = vld [vmem:[%s3 + $0xc90] sm:$0xff]
        %v3814 = vld [vmem:[%s3 + $0xc98] sm:$0xff]
        %v3815 = vld [vmem:[%s3 + $0xca0] sm:$0xff]
        %v3816 = vld [vmem:[%s3 + $0xca8] sm:$0xff]
        %v3817 = vld [vmem:[%s3 + $0xcb0] sm:$0xff]
        %v3818 = vld [vmem:[%s3 + $0xcb8] sm:$0xff]
        %v3819 = vld [vmem:[%s3 + $0xcc0] sm:$0xff]
        %v3820 = vld [vmem:[%s3 + $0xcc8] sm:$0xff]
        %v3821 = vld [vmem:[%s3 + $0xcd0] sm:$0xff]
        %v3822 = vld [vmem:[%s3 + $0xcd8] sm:$0xff]
        %v3823 = vld [vmem:[%s3 + $0xce0] sm:$0xff]
        %v3824 = vld [vmem:[%s3 + $0xce8] sm:$0xff]
        %v3825 = vld [vmem:[%s3 + $0xcf0] sm:$0xff]
        %v3826 = vld [vmem:[%s3 + $0xcf8] sm:$0xff]
        %v3827 = vld [vmem:[%s3 + $0xd00] sm:$0xff]
        %v3828 = vld [vmem:[%s3 + $0xd08] sm:$0xff]
        %v3829 = vld [vmem:[%s3 + $0xd10] sm:$0xff]
        %v3830 = vld [vmem:[%s3 + $0xd18] sm:$0xff]
        %v3831 = vld [vmem:[%s3 + $0xd20] sm:$0xff]
        %v3832 = vld [vmem:[%s3 + $0xd28] sm:$0xff]
        %v3833 = vld [vmem:[%s3 + $0xd30] sm:$0xff]
        %v3834 = vld [vmem:[%s3 + $0xd38] sm:$0xff]
        %v3835 = vld [vmem:[%s3 + $0xd40] sm:$0xff]
        %v3836 = vld [vmem:[%s3 + $0xd48] sm:$0xff]
        %v3837 = vld [vmem:[%s3 + $0xd50] sm:$0xff]
        %v3838 = vld [vmem:[%s3 + $0xd58] sm:$0xff]
        %v3839 = vld [vmem:[%s3 + $0xd60] sm:$0xff]
        %v3840 = vld [vmem:[%s3 + $0xd68] sm:$0xff]
        %v3841 = vld [vmem:[%s3 + $0xd70] sm:$0xff]
        %v3842 = vld [vmem:[%s3 + $0xd78] sm:$0xff]
        %v3843 = vld [vmem:[%s3 + $0xd80] sm:$0xff]
        %v3844 = vld [vmem:[%s3 + $0xd88] sm:$0xff]
        %v3845 = vld [vmem:[%s3 + $0xd90] sm:$0xff]
        %v3846 = vld [vmem:[%s3 + $0xd98] sm:$0xff]
        %v3847 = vld [vmem:[%s3 + $0xda0] sm:$0xff]
        %v3848 = vld [vmem:[%s3 + $0xda8] sm:$0xff]
        %v3849 = vld [vmem:[%s3 + $0xdb0] sm:$0xff]
        %v3850 = vld [vmem:[%s3 + $0xdb8] sm:$0xff]
        %v3851 = vld [vmem:[%s3 + $0xdc0] sm:$0xff]
        %v3852 = vld [vmem:[%s3 + $0xdc8] sm:$0xff]
        %v3853 = vld [vmem:[%s3 + $0xdd0] sm:$0xff]
        %v3854 = vld [vmem:[%s3 + $0xdd8] sm:$0xff]
        %v3855 = vld [vmem:[%s3 + $0xde0] sm:$0xff]
        %v3856 = vld [vmem:[%s3 + $0xde8] sm:$0xff]
        %v3857 = vld [vmem:[%s3 + $0xdf0] sm:$0xff]
        %v3858 = vld [vmem:[%s3 + $0xdf8] sm:$0xff]
        %v3859 = vld [vmem:[%s4] sm:$0xf]
        %v3861 = vperm.slane %v3859, 0
        %v3862 = vperm.slane %v3859, 1
        %v3863 = vperm.slane %v3859, 2
        %v3864 = vperm.slane %v3859, 3
        %v4317 = vunpack.c.l.b16 %v3411
        %v4318 = vunpack.c.h.b16 %v3411
        %v4319 = vunpack.c.l.b16 %v3412
        %v4320 = vunpack.c.h.b16 %v3412
        %v4321 = vunpack.c.l.b16 %v3413
        %v4322 = vunpack.c.h.b16 %v3413
        %v4323 = vunpack.c.l.b16 %v3414
        %v4324 = vunpack.c.h.b16 %v3414
        %v4325 = vunpack.c.l.b16 %v3415
        %v4326 = vunpack.c.h.b16 %v3415
        %v4327 = vunpack.c.l.b16 %v3416
        %v4328 = vunpack.c.h.b16 %v3416
        %v4329 = vunpack.c.l.b16 %v3417
        %v4330 = vunpack.c.h.b16 %v3417
        %v4331 = vunpack.c.l.b16 %v3418
        %v4332 = vunpack.c.h.b16 %v3418
        %v4333 = vunpack.c.l.b16 %v3419
        %v4334 = vunpack.c.h.b16 %v3419
        %v4335 = vunpack.c.l.b16 %v3420
        %v4336 = vunpack.c.h.b16 %v3420
        %v4337 = vunpack.c.l.b16 %v3421
        %v4338 = vunpack.c.h.b16 %v3421
        %v4339 = vunpack.c.l.b16 %v3422
        %v4340 = vunpack.c.h.b16 %v3422
        %v4341 = vunpack.c.l.b16 %v3423
        %v4342 = vunpack.c.h.b16 %v3423
        %v4343 = vunpack.c.l.b16 %v3424
        %v4344 = vunpack.c.h.b16 %v3424
        %v4345 = vunpack.c.l.b16 %v3425
        %v4346 = vunpack.c.h.b16 %v3425
        %v4347 = vunpack.c.l.b16 %v3426
        %v4348 = vunpack.c.h.b16 %v3426
        %v4349 = vunpack.c.l.b16 %v3427
        %v4350 = vunpack.c.h.b16 %v3427
        %v4351 = vunpack.c.l.b16 %v3428
        %v4352 = vunpack.c.h.b16 %v3428
        %v4353 = vunpack.c.l.b16 %v3429
        %v4354 = vunpack.c.h.b16 %v3429
        %v4355 = vunpack.c.l.b16 %v3430
        %v4356 = vunpack.c.h.b16 %v3430
        %v4357 = vunpack.c.l.b16 %v3431
        %v4358 = vunpack.c.h.b16 %v3431
        %v4359 = vunpack.c.l.b16 %v3432
        %v4360 = vunpack.c.h.b16 %v3432
        %v4361 = vunpack.c.l.b16 %v3433
        %v4362 = vunpack.c.h.b16 %v3433
        %v4363 = vunpack.c.l.b16 %v3434
        %v4364 = vunpack.c.h.b16 %v3434
        %v4365 = vunpack.c.l.b16 %v3435
        %v4366 = vunpack.c.h.b16 %v3435
        %v4367 = vunpack.c.l.b16 %v3436
        %v4368 = vunpack.c.h.b16 %v3436
        %v4369 = vunpack.c.l.b16 %v3437
        %v4370 = vunpack.c.h.b16 %v3437
        %v4371 = vunpack.c.l.b16 %v3438
        %v4372 = vunpack.c.h.b16 %v3438
        %v4373 = vunpack.c.l.b16 %v3439
        %v4374 = vunpack.c.h.b16 %v3439
        %v4375 = vunpack.c.l.b16 %v3440
        %v4376 = vunpack.c.h.b16 %v3440
        %v4377 = vunpack.c.l.b16 %v3441
        %v4378 = vunpack.c.h.b16 %v3441
        %v4379 = vunpack.c.l.b16 %v3442
        %v4380 = vunpack.c.h.b16 %v3442
        %v4381 = vunpack.c.l.b16 %v3443
        %v4382 = vunpack.c.h.b16 %v3443
        %v4383 = vunpack.c.l.b16 %v3444
        %v4384 = vunpack.c.h.b16 %v3444
        %v4385 = vunpack.c.l.b16 %v3445
        %v4386 = vunpack.c.h.b16 %v3445
        %v4387 = vunpack.c.l.b16 %v3446
        %v4388 = vunpack.c.h.b16 %v3446
        %v4389 = vunpack.c.l.b16 %v3447
        %v4390 = vunpack.c.h.b16 %v3447
        %v4391 = vunpack.c.l.b16 %v3448
        %v4392 = vunpack.c.h.b16 %v3448
        %v4393 = vunpack.c.l.b16 %v3449
        %v4394 = vunpack.c.h.b16 %v3449
        %v4395 = vunpack.c.l.b16 %v3450
        %v4396 = vunpack.c.h.b16 %v3450
        %v4397 = vunpack.c.l.b16 %v3451
        %v4398 = vunpack.c.h.b16 %v3451
        %v4399 = vunpack.c.l.b16 %v3452
        %v4400 = vunpack.c.h.b16 %v3452
        %v4401 = vunpack.c.l.b16 %v3453
        %v4402 = vunpack.c.h.b16 %v3453
        %v4403 = vunpack.c.l.b16 %v3454
        %v4404 = vunpack.c.h.b16 %v3454
        %v4405 = vunpack.c.l.b16 %v3455
        %v4406 = vunpack.c.h.b16 %v3455
        %v4407 = vunpack.c.l.b16 %v3456
        %v4408 = vunpack.c.h.b16 %v3456
        %v4409 = vunpack.c.l.b16 %v3457
        %v4410 = vunpack.c.h.b16 %v3457
        %v4411 = vunpack.c.l.b16 %v3458
        %v4412 = vunpack.c.h.b16 %v3458
        %v4413 = vunpack.c.l.b16 %v3459
        %v4414 = vunpack.c.h.b16 %v3459
        %v4415 = vunpack.c.l.b16 %v3460
        %v4416 = vunpack.c.h.b16 %v3460
        %v4417 = vunpack.c.l.b16 %v3461
        %v4418 = vunpack.c.h.b16 %v3461
        %v4419 = vunpack.c.l.b16 %v3462
        %v4420 = vunpack.c.h.b16 %v3462
        %v4421 = vunpack.c.l.b16 %v3463
        %v4422 = vunpack.c.h.b16 %v3463
        %v4423 = vunpack.c.l.b16 %v3464
        %v4424 = vunpack.c.h.b16 %v3464
        %v4425 = vunpack.c.l.b16 %v3465
        %v4426 = vunpack.c.h.b16 %v3465
        %v4427 = vunpack.c.l.b16 %v3466
        %v4428 = vunpack.c.h.b16 %v3466
        %v4429 = vunpack.c.l.b16 %v3467
        %v4430 = vunpack.c.h.b16 %v3467
        %v4431 = vunpack.c.l.b16 %v3468
        %v4432 = vunpack.c.h.b16 %v3468
        %v4433 = vunpack.c.l.b16 %v3469
        %v4434 = vunpack.c.h.b16 %v3469
        %v4435 = vunpack.c.l.b16 %v3470
        %v4436 = vunpack.c.h.b16 %v3470
        %v4437 = vunpack.c.l.b16 %v3471
        %v4438 = vunpack.c.h.b16 %v3471
        %v4439 = vunpack.c.l.b16 %v3472
        %v4440 = vunpack.c.h.b16 %v3472
        %v4441 = vunpack.c.l.b16 %v3473
        %v4442 = vunpack.c.h.b16 %v3473
        %v4443 = vunpack.c.l.b16 %v3474
        %v4444 = vunpack.c.h.b16 %v3474
        %v4445 = vunpack.c.l.b16 %v3475
        %v4446 = vunpack.c.h.b16 %v3475
        %v4447 = vunpack.c.l.b16 %v3476
        %v4448 = vunpack.c.h.b16 %v3476
        %v4449 = vunpack.c.l.b16 %v3477
        %v4450 = vunpack.c.h.b16 %v3477
        %v4451 = vunpack.c.l.b16 %v3478
        %v4452 = vunpack.c.h.b16 %v3478
        %v4453 = vunpack.c.l.b16 %v3479
        %v4454 = vunpack.c.h.b16 %v3479
        %v4455 = vunpack.c.l.b16 %v3480
        %v4456 = vunpack.c.h.b16 %v3480
        %v4457 = vunpack.c.l.b16 %v3481
        %v4458 = vunpack.c.h.b16 %v3481
        %v4459 = vunpack.c.l.b16 %v3482
        %v4460 = vunpack.c.h.b16 %v3482
        %v4461 = vunpack.c.l.b16 %v3483
        %v4462 = vunpack.c.h.b16 %v3483
        %v4463 = vunpack.c.l.b16 %v3484
        %v4464 = vunpack.c.h.b16 %v3484
        %v4465 = vunpack.c.l.b16 %v3485
        %v4466 = vunpack.c.h.b16 %v3485
        %v4467 = vunpack.c.l.b16 %v3486
        %v4468 = vunpack.c.h.b16 %v3486
        %v4469 = vunpack.c.l.b16 %v3487
        %v4470 = vunpack.c.h.b16 %v3487
        %v4471 = vunpack.c.l.b16 %v3488
        %v4472 = vunpack.c.h.b16 %v3488
        %v4473 = vunpack.c.l.b16 %v3489
        %v4474 = vunpack.c.h.b16 %v3489
        %v4475 = vunpack.c.l.b16 %v3490
        %v4476 = vunpack.c.h.b16 %v3490
        %v4477 = vunpack.c.l.b16 %v3491
        %v4478 = vunpack.c.h.b16 %v3491
        %v4479 = vunpack.c.l.b16 %v3492
        %v4480 = vunpack.c.h.b16 %v3492
        %v4481 = vunpack.c.l.b16 %v3493
        %v4482 = vunpack.c.h.b16 %v3493
        %v4483 = vunpack.c.l.b16 %v3494
        %v4484 = vunpack.c.h.b16 %v3494
        %v4485 = vunpack.c.l.b16 %v3495
        %v4486 = vunpack.c.h.b16 %v3495
        %v4487 = vunpack.c.l.b16 %v3496
        %v4488 = vunpack.c.h.b16 %v3496
        %v4489 = vunpack.c.l.b16 %v3497
        %v4490 = vunpack.c.h.b16 %v3497
        %v4491 = vunpack.c.l.b16 %v3498
        %v4492 = vunpack.c.h.b16 %v3498
        %v4493 = vunpack.c.l.b16 %v3499
        %v4494 = vunpack.c.h.b16 %v3499
        %v4495 = vunpack.c.l.b16 %v3500
        %v4496 = vunpack.c.h.b16 %v3500
        %v4497 = vunpack.c.l.b16 %v3501
        %v4498 = vunpack.c.h.b16 %v3501
        %v4499 = vunpack.c.l.b16 %v3502
        %v4500 = vunpack.c.h.b16 %v3502
        %v4501 = vunpack.c.l.b16 %v3503
        %v4502 = vunpack.c.h.b16 %v3503
        %v4503 = vunpack.c.l.b16 %v3504
        %v4504 = vunpack.c.h.b16 %v3504
        %v4505 = vunpack.c.l.b16 %v3505
        %v4506 = vunpack.c.h.b16 %v3505
        %v4507 = vunpack.c.l.b16 %v3506
        %v4508 = vunpack.c.h.b16 %v3506
        %v4509 = vunpack.c.l.b16 %v3507
        %v4510 = vunpack.c.h.b16 %v3507
        %v4511 = vunpack.c.l.b16 %v3508
        %v4512 = vunpack.c.h.b16 %v3508
        %v4513 = vunpack.c.l.b16 %v3509
        %v4514 = vunpack.c.h.b16 %v3509
        %v4515 = vunpack.c.l.b16 %v3510
        %v4516 = vunpack.c.h.b16 %v3510
        %v4517 = vunpack.c.l.b16 %v3511
        %v4518 = vunpack.c.h.b16 %v3511
        %v4519 = vunpack.c.l.b16 %v3512
        %v4520 = vunpack.c.h.b16 %v3512
        %v4521 = vunpack.c.l.b16 %v3513
        %v4522 = vunpack.c.h.b16 %v3513
        %v4523 = vunpack.c.l.b16 %v3514
        %v4524 = vunpack.c.h.b16 %v3514
        %v4525 = vunpack.c.l.b16 %v3515
        %v4526 = vunpack.c.h.b16 %v3515
        %v4527 = vunpack.c.l.b16 %v3516
        %v4528 = vunpack.c.h.b16 %v3516
        %v4529 = vunpack.c.l.b16 %v3517
        %v4530 = vunpack.c.h.b16 %v3517
        %v4531 = vunpack.c.l.b16 %v3518
        %v4532 = vunpack.c.h.b16 %v3518
        %v4533 = vunpack.c.l.b16 %v3519
        %v4534 = vunpack.c.h.b16 %v3519
        %v4535 = vunpack.c.l.b16 %v3520
        %v4536 = vunpack.c.h.b16 %v3520
        %v4537 = vunpack.c.l.b16 %v3521
        %v4538 = vunpack.c.h.b16 %v3521
        %v4539 = vunpack.c.l.b16 %v3522
        %v4540 = vunpack.c.h.b16 %v3522
        %v4541 = vunpack.c.l.b16 %v3523
        %v4542 = vunpack.c.h.b16 %v3523
        %v4543 = vunpack.c.l.b16 %v3524
        %v4544 = vunpack.c.h.b16 %v3524
        %v4545 = vunpack.c.l.b16 %v3525
        %v4546 = vunpack.c.h.b16 %v3525
        %v4547 = vunpack.c.l.b16 %v3526
        %v4548 = vunpack.c.h.b16 %v3526
        %v4549 = vunpack.c.l.b16 %v3527
        %v4550 = vunpack.c.h.b16 %v3527
        %v4551 = vunpack.c.l.b16 %v3528
        %v4552 = vunpack.c.h.b16 %v3528
        %v4553 = vunpack.c.l.b16 %v3529
        %v4554 = vunpack.c.h.b16 %v3529
        %v4555 = vunpack.c.l.b16 %v3530
        %v4556 = vunpack.c.h.b16 %v3530
        %v4557 = vunpack.c.l.b16 %v3531
        %v4558 = vunpack.c.h.b16 %v3531
        %v4559 = vunpack.c.l.b16 %v3532
        %v4560 = vunpack.c.h.b16 %v3532
        %v4561 = vunpack.c.l.b16 %v3533
        %v4562 = vunpack.c.h.b16 %v3533
        %v4563 = vunpack.c.l.b16 %v3534
        %v4564 = vunpack.c.h.b16 %v3534
        %v4565 = vunpack.c.l.b16 %v3535
        %v4566 = vunpack.c.h.b16 %v3535
        %v4567 = vunpack.c.l.b16 %v3536
        %v4568 = vunpack.c.h.b16 %v3536
        %v4569 = vunpack.c.l.b16 %v3537
        %v4570 = vunpack.c.h.b16 %v3537
        %v4571 = vunpack.c.l.b16 %v3538
        %v4572 = vunpack.c.h.b16 %v3538
        %v4573 = vunpack.c.l.b16 %v3539
        %v4574 = vunpack.c.h.b16 %v3539
        %v4575 = vunpack.c.l.b16 %v3540
        %v4576 = vunpack.c.h.b16 %v3540
        %v4577 = vunpack.c.l.b16 %v3541
        %v4578 = vunpack.c.h.b16 %v3541
        %v4579 = vunpack.c.l.b16 %v3542
        %v4580 = vunpack.c.h.b16 %v3542
        %v4581 = vunpack.c.l.b16 %v3543
        %v4582 = vunpack.c.h.b16 %v3543
        %v4583 = vunpack.c.l.b16 %v3544
        %v4584 = vunpack.c.h.b16 %v3544
        %v4585 = vunpack.c.l.b16 %v3545
        %v4586 = vunpack.c.h.b16 %v3545
        %v4587 = vunpack.c.l.b16 %v3546
        %v4588 = vunpack.c.h.b16 %v3546
        %v4589 = vunpack.c.l.b16 %v3547
        %v4590 = vunpack.c.h.b16 %v3547
        %v4591 = vunpack.c.l.b16 %v3548
        %v4592 = vunpack.c.h.b16 %v3548
        %v4593 = vunpack.c.l.b16 %v3549
        %v4594 = vunpack.c.h.b16 %v3549
        %v4595 = vunpack.c.l.b16 %v3550
        %v4596 = vunpack.c.h.b16 %v3550
        %v4597 = vunpack.c.l.b16 %v3551
        %v4598 = vunpack.c.h.b16 %v3551
        %v4599 = vunpack.c.l.b16 %v3552
        %v4600 = vunpack.c.h.b16 %v3552
        %v4601 = vunpack.c.l.b16 %v3553
        %v4602 = vunpack.c.h.b16 %v3553
        %v4603 = vunpack.c.l.b16 %v3554
        %v4604 = vunpack.c.h.b16 %v3554
        %v4605 = vunpack.c.l.b16 %v3555
        %v4606 = vunpack.c.h.b16 %v3555
        %v4607 = vunpack.c.l.b16 %v3556
        %v4608 = vunpack.c.h.b16 %v3556
        %v4609 = vunpack.c.l.b16 %v3557
        %v4610 = vunpack.c.h.b16 %v3557
        %v4611 = vunpack.c.l.b16 %v3558
        %v4612 = vunpack.c.h.b16 %v3558
        %v4613 = vunpack.c.l.b16 %v3559
        %v4614 = vunpack.c.h.b16 %v3559
        %v4615 = vunpack.c.l.b16 %v3560
        %v4616 = vunpack.c.h.b16 %v3560
        %v4617 = vunpack.c.l.b16 %v3561
        %v4618 = vunpack.c.h.b16 %v3561
        %v4619 = vunpack.c.l.b16 %v3562
        %v4620 = vunpack.c.h.b16 %v3562
        %v4621 = vunpack.c.l.b16 %v3563
        %v4622 = vunpack.c.h.b16 %v3563
        %v4623 = vunpack.c.l.b16 %v3564
        %v4624 = vunpack.c.h.b16 %v3564
        %v4625 = vunpack.c.l.b16 %v3565
        %v4626 = vunpack.c.h.b16 %v3565
        %v4627 = vunpack.c.l.b16 %v3566
        %v4628 = vunpack.c.h.b16 %v3566
        %v4629 = vunpack.c.l.b16 %v3567
        %v4630 = vunpack.c.h.b16 %v3567
        %v4631 = vunpack.c.l.b16 %v3568
        %v4632 = vunpack.c.h.b16 %v3568
        %v4633 = vunpack.c.l.b16 %v3569
        %v4634 = vunpack.c.h.b16 %v3569
        %v4635 = vunpack.c.l.b16 %v3570
        %v4636 = vunpack.c.h.b16 %v3570
        %v4637 = vunpack.c.l.b16 %v3571
        %v4638 = vunpack.c.h.b16 %v3571
        %v4639 = vunpack.c.l.b16 %v3572
        %v4640 = vunpack.c.h.b16 %v3572
        %v4641 = vunpack.c.l.b16 %v3573
        %v4642 = vunpack.c.h.b16 %v3573
        %v4643 = vunpack.c.l.b16 %v3574
        %v4644 = vunpack.c.h.b16 %v3574
        %v4645 = vunpack.c.l.b16 %v3575
        %v4646 = vunpack.c.h.b16 %v3575
        %v4647 = vunpack.c.l.b16 %v3576
        %v4648 = vunpack.c.h.b16 %v3576
        %v4649 = vunpack.c.l.b16 %v3577
        %v4650 = vunpack.c.h.b16 %v3577
        %v4651 = vunpack.c.l.b16 %v3578
        %v4652 = vunpack.c.h.b16 %v3578
        %v4653 = vunpack.c.l.b16 %v3579
        %v4654 = vunpack.c.h.b16 %v3579
        %v4655 = vunpack.c.l.b16 %v3580
        %v4656 = vunpack.c.h.b16 %v3580
        %v4657 = vunpack.c.l.b16 %v3581
        %v4658 = vunpack.c.h.b16 %v3581
        %v4659 = vunpack.c.l.b16 %v3582
        %v4660 = vunpack.c.h.b16 %v3582
        %v4661 = vunpack.c.l.b16 %v3583
        %v4662 = vunpack.c.h.b16 %v3583
        %v4663 = vunpack.c.l.b16 %v3584
        %v4664 = vunpack.c.h.b16 %v3584
        %v4665 = vunpack.c.l.b16 %v3585
        %v4666 = vunpack.c.h.b16 %v3585
        %v4667 = vunpack.c.l.b16 %v3586
        %v4668 = vunpack.c.h.b16 %v3586
        %v4669 = vunpack.c.l.b16 %v3587
        %v4670 = vunpack.c.h.b16 %v3587
        %v4671 = vunpack.c.l.b16 %v3588
        %v4672 = vunpack.c.h.b16 %v3588
        %v4673 = vunpack.c.l.b16 %v3589
        %v4674 = vunpack.c.h.b16 %v3589
        %v4675 = vunpack.c.l.b16 %v3590
        %v4676 = vunpack.c.h.b16 %v3590
        %v4677 = vunpack.c.l.b16 %v3591
        %v4678 = vunpack.c.h.b16 %v3591
        %v4679 = vunpack.c.l.b16 %v3592
        %v4680 = vunpack.c.h.b16 %v3592
        %v4681 = vunpack.c.l.b16 %v3593
        %v4682 = vunpack.c.h.b16 %v3593
        %v4683 = vunpack.c.l.b16 %v3594
        %v4684 = vunpack.c.h.b16 %v3594
        %v4685 = vunpack.c.l.b16 %v3595
        %v4686 = vunpack.c.h.b16 %v3595
        %v4687 = vunpack.c.l.b16 %v3596
        %v4688 = vunpack.c.h.b16 %v3596
        %v4689 = vunpack.c.l.b16 %v3597
        %v4690 = vunpack.c.h.b16 %v3597
        %v4691 = vunpack.c.l.b16 %v3598
        %v4692 = vunpack.c.h.b16 %v3598
        %v4693 = vunpack.c.l.b16 %v3599
        %v4694 = vunpack.c.h.b16 %v3599
        %v4695 = vunpack.c.l.b16 %v3600
        %v4696 = vunpack.c.h.b16 %v3600
        %v4697 = vunpack.c.l.b16 %v3601
        %v4698 = vunpack.c.h.b16 %v3601
        %v4699 = vunpack.c.l.b16 %v3602
        %v4700 = vunpack.c.h.b16 %v3602
        %v4701 = vunpack.c.l.b16 %v3603
        %v4702 = vunpack.c.h.b16 %v3603
        %v4703 = vunpack.c.l.b16 %v3604
        %v4704 = vunpack.c.h.b16 %v3604
        %v4705 = vunpack.c.l.b16 %v3605
        %v4706 = vunpack.c.h.b16 %v3605
        %v4707 = vunpack.c.l.b16 %v3606
        %v4708 = vunpack.c.h.b16 %v3606
        %v4709 = vunpack.c.l.b16 %v3607
        %v4710 = vunpack.c.h.b16 %v3607
        %v4711 = vunpack.c.l.b16 %v3608
        %v4712 = vunpack.c.h.b16 %v3608
        %v4713 = vunpack.c.l.b16 %v3609
        %v4714 = vunpack.c.h.b16 %v3609
        %v4715 = vunpack.c.l.b16 %v3610
        %v4716 = vunpack.c.h.b16 %v3610
        %v4717 = vunpack.c.l.b16 %v3611
        %v4718 = vunpack.c.h.b16 %v3611
        %v4719 = vunpack.c.l.b16 %v3612
        %v4720 = vunpack.c.h.b16 %v3612
        %v4721 = vunpack.c.l.b16 %v3613
        %v4722 = vunpack.c.h.b16 %v3613
        %v4723 = vunpack.c.l.b16 %v3614
        %v4724 = vunpack.c.h.b16 %v3614
        %v4725 = vunpack.c.l.b16 %v3615
        %v4726 = vunpack.c.h.b16 %v3615
        %v4727 = vunpack.c.l.b16 %v3616
        %v4728 = vunpack.c.h.b16 %v3616
        %v4729 = vunpack.c.l.b16 %v3617
        %v4730 = vunpack.c.h.b16 %v3617
        %v4731 = vunpack.c.l.b16 %v3618
        %v4732 = vunpack.c.h.b16 %v3618
        %v4733 = vunpack.c.l.b16 %v3619
        %v4734 = vunpack.c.h.b16 %v3619
        %v4735 = vunpack.c.l.b16 %v3620
        %v4736 = vunpack.c.h.b16 %v3620
        %v4737 = vunpack.c.l.b16 %v3621
        %v4738 = vunpack.c.h.b16 %v3621
        %v4739 = vunpack.c.l.b16 %v3622
        %v4740 = vunpack.c.h.b16 %v3622
        %v4741 = vunpack.c.l.b16 %v3623
        %v4742 = vunpack.c.h.b16 %v3623
        %v4743 = vunpack.c.l.b16 %v3624
        %v4744 = vunpack.c.h.b16 %v3624
        %v4745 = vunpack.c.l.b16 %v3625
        %v4746 = vunpack.c.h.b16 %v3625
        %v4747 = vunpack.c.l.b16 %v3626
        %v4748 = vunpack.c.h.b16 %v3626
        %v4749 = vunpack.c.l.b16 %v3627
        %v4750 = vunpack.c.h.b16 %v3627
        %v4751 = vunpack.c.l.b16 %v3628
        %v4752 = vunpack.c.h.b16 %v3628
        %v4753 = vunpack.c.l.b16 %v3629
        %v4754 = vunpack.c.h.b16 %v3629
        %v4755 = vunpack.c.l.b16 %v3630
        %v4756 = vunpack.c.h.b16 %v3630
        %v4757 = vunpack.c.l.b16 %v3631
        %v4758 = vunpack.c.h.b16 %v3631
        %v4759 = vunpack.c.l.b16 %v3632
        %v4760 = vunpack.c.h.b16 %v3632
        %v4761 = vunpack.c.l.b16 %v3633
        %v4762 = vunpack.c.h.b16 %v3633
        %v4763 = vunpack.c.l.b16 %v3634
        %v4764 = vunpack.c.h.b16 %v3634
        %v4765 = vunpack.c.l.b16 %v3635
        %v4766 = vunpack.c.h.b16 %v3635
        %v4767 = vunpack.c.l.b16 %v3636
        %v4768 = vunpack.c.h.b16 %v3636
        %v4769 = vunpack.c.l.b16 %v3637
        %v4770 = vunpack.c.h.b16 %v3637
        %v4771 = vunpack.c.l.b16 %v3638
        %v4772 = vunpack.c.h.b16 %v3638
        %v4773 = vunpack.c.l.b16 %v3639
        %v4774 = vunpack.c.h.b16 %v3639
        %v4775 = vunpack.c.l.b16 %v3640
        %v4776 = vunpack.c.h.b16 %v3640
        %v4777 = vunpack.c.l.b16 %v3641
        %v4778 = vunpack.c.h.b16 %v3641
        %v4779 = vunpack.c.l.b16 %v3642
        %v4780 = vunpack.c.h.b16 %v3642
        %v4781 = vunpack.c.l.b16 %v3643
        %v4782 = vunpack.c.h.b16 %v3643
        %v4783 = vunpack.c.l.b16 %v3644
        %v4784 = vunpack.c.h.b16 %v3644
        %v4785 = vunpack.c.l.b16 %v3645
        %v4786 = vunpack.c.h.b16 %v3645
        %v4787 = vunpack.c.l.b16 %v3646
        %v4788 = vunpack.c.h.b16 %v3646
        %v4789 = vunpack.c.l.b16 %v3647
        %v4790 = vunpack.c.h.b16 %v3647
        %v4791 = vunpack.c.l.b16 %v3648
        %v4792 = vunpack.c.h.b16 %v3648
        %v4793 = vunpack.c.l.b16 %v3649
        %v4794 = vunpack.c.h.b16 %v3649
        %v4795 = vunpack.c.l.b16 %v3650
        %v4796 = vunpack.c.h.b16 %v3650
        %v4797 = vunpack.c.l.b16 %v3651
        %v4798 = vunpack.c.h.b16 %v3651
        %v4799 = vunpack.c.l.b16 %v3652
        %v4800 = vunpack.c.h.b16 %v3652
        %v4801 = vunpack.c.l.b16 %v3653
        %v4802 = vunpack.c.h.b16 %v3653
        %v4803 = vunpack.c.l.b16 %v3654
        %v4804 = vunpack.c.h.b16 %v3654
        %v4805 = vunpack.c.l.b16 %v3655
        %v4806 = vunpack.c.h.b16 %v3655
        %v4807 = vunpack.c.l.b16 %v3656
        %v4808 = vunpack.c.h.b16 %v3656
        %v4809 = vunpack.c.l.b16 %v3657
        %v4810 = vunpack.c.h.b16 %v3657
        %v4811 = vunpack.c.l.b16 %v3658
        %v4812 = vunpack.c.h.b16 %v3658
        %v4813 = vunpack.c.l.b16 %v3659
        %v4814 = vunpack.c.h.b16 %v3659
        %v4815 = vunpack.c.l.b16 %v3660
        %v4816 = vunpack.c.h.b16 %v3660
        %v4817 = vunpack.c.l.b16 %v3661
        %v4818 = vunpack.c.h.b16 %v3661
        %v4819 = vunpack.c.l.b16 %v3662
        %v4820 = vunpack.c.h.b16 %v3662
        %v4821 = vunpack.c.l.b16 %v3663
        %v4822 = vunpack.c.h.b16 %v3663
        %v4823 = vunpack.c.l.b16 %v3664
        %v4824 = vunpack.c.h.b16 %v3664
        %v4825 = vunpack.c.l.b16 %v3665
        %v4826 = vunpack.c.h.b16 %v3665
        %v4827 = vunpack.c.l.b16 %v3666
        %v4828 = vunpack.c.h.b16 %v3666
        %v4829 = vunpack.c.l.b16 %v3667
        %v4830 = vunpack.c.h.b16 %v3667
        %v4831 = vunpack.c.l.b16 %v3668
        %v4832 = vunpack.c.h.b16 %v3668
        %v4833 = vunpack.c.l.b16 %v3669
        %v4834 = vunpack.c.h.b16 %v3669
        %v4835 = vunpack.c.l.b16 %v3670
        %v4836 = vunpack.c.h.b16 %v3670
        %v4837 = vunpack.c.l.b16 %v3671
        %v4838 = vunpack.c.h.b16 %v3671
        %v4839 = vunpack.c.l.b16 %v3672
        %v4840 = vunpack.c.h.b16 %v3672
        %v4841 = vunpack.c.l.b16 %v3673
        %v4842 = vunpack.c.h.b16 %v3673
        %v4843 = vunpack.c.l.b16 %v3674
        %v4844 = vunpack.c.h.b16 %v3674
        %v4845 = vunpack.c.l.b16 %v3675
        %v4846 = vunpack.c.h.b16 %v3675
        %v4847 = vunpack.c.l.b16 %v3676
        %v4848 = vunpack.c.h.b16 %v3676
        %v4849 = vunpack.c.l.b16 %v3677
        %v4850 = vunpack.c.h.b16 %v3677
        %v4851 = vunpack.c.l.b16 %v3678
        %v4852 = vunpack.c.h.b16 %v3678
        %v4853 = vunpack.c.l.b16 %v3679
        %v4854 = vunpack.c.h.b16 %v3679
        %v4855 = vunpack.c.l.b16 %v3680
        %v4856 = vunpack.c.h.b16 %v3680
        %v4857 = vunpack.c.l.b16 %v3681
        %v4858 = vunpack.c.h.b16 %v3681
        %v4859 = vunpack.c.l.b16 %v3682
        %v4860 = vunpack.c.h.b16 %v3682
        %v4861 = vunpack.c.l.b16 %v3683
        %v4862 = vunpack.c.h.b16 %v3683
        %v4863 = vunpack.c.l.b16 %v3684
        %v4864 = vunpack.c.h.b16 %v3684
        %v4865 = vunpack.c.l.b16 %v3685
        %v4866 = vunpack.c.h.b16 %v3685
        %v4867 = vunpack.c.l.b16 %v3686
        %v4868 = vunpack.c.h.b16 %v3686
        %v4869 = vunpack.c.l.b16 %v3687
        %v4870 = vunpack.c.h.b16 %v3687
        %v4871 = vunpack.c.l.b16 %v3688
        %v4872 = vunpack.c.h.b16 %v3688
        %v4873 = vunpack.c.l.b16 %v3689
        %v4874 = vunpack.c.h.b16 %v3689
        %v4875 = vunpack.c.l.b16 %v3690
        %v4876 = vunpack.c.h.b16 %v3690
        %v4877 = vunpack.c.l.b16 %v3691
        %v4878 = vunpack.c.h.b16 %v3691
        %v4879 = vunpack.c.l.b16 %v3692
        %v4880 = vunpack.c.h.b16 %v3692
        %v4881 = vunpack.c.l.b16 %v3693
        %v4882 = vunpack.c.h.b16 %v3693
        %v4883 = vunpack.c.l.b16 %v3694
        %v4884 = vunpack.c.h.b16 %v3694
        %v4885 = vunpack.c.l.b16 %v3695
        %v4886 = vunpack.c.h.b16 %v3695
        %v4887 = vunpack.c.l.b16 %v3696
        %v4888 = vunpack.c.h.b16 %v3696
        %v4889 = vunpack.c.l.b16 %v3697
        %v4890 = vunpack.c.h.b16 %v3697
        %v4891 = vunpack.c.l.b16 %v3698
        %v4892 = vunpack.c.h.b16 %v3698
        %v4893 = vunpack.c.l.b16 %v3699
        %v4894 = vunpack.c.h.b16 %v3699
        %v4895 = vunpack.c.l.b16 %v3700
        %v4896 = vunpack.c.h.b16 %v3700
        %v4897 = vunpack.c.l.b16 %v3701
        %v4898 = vunpack.c.h.b16 %v3701
        %v4899 = vunpack.c.l.b16 %v3702
        %v4900 = vunpack.c.h.b16 %v3702
        %v4901 = vunpack.c.l.b16 %v3703
        %v4902 = vunpack.c.h.b16 %v3703
        %v4903 = vunpack.c.l.b16 %v3704
        %v4904 = vunpack.c.h.b16 %v3704
        %v4905 = vunpack.c.l.b16 %v3705
        %v4906 = vunpack.c.h.b16 %v3705
        %v4907 = vunpack.c.l.b16 %v3706
        %v4908 = vunpack.c.h.b16 %v3706
        %v4909 = vunpack.c.l.b16 %v3707
        %v4910 = vunpack.c.h.b16 %v3707
        %v4911 = vunpack.c.l.b16 %v3708
        %v4912 = vunpack.c.h.b16 %v3708
        %v4913 = vunpack.c.l.b16 %v3709
        %v4914 = vunpack.c.h.b16 %v3709
        %v4915 = vunpack.c.l.b16 %v3710
        %v4916 = vunpack.c.h.b16 %v3710
        %v4917 = vunpack.c.l.b16 %v3711
        %v4918 = vunpack.c.h.b16 %v3711
        %v4919 = vunpack.c.l.b16 %v3712
        %v4920 = vunpack.c.h.b16 %v3712
        %v4921 = vunpack.c.l.b16 %v3713
        %v4922 = vunpack.c.h.b16 %v3713
        %v4923 = vunpack.c.l.b16 %v3714
        %v4924 = vunpack.c.h.b16 %v3714
        %v4925 = vunpack.c.l.b16 %v3715
        %v4926 = vunpack.c.h.b16 %v3715
        %v4927 = vunpack.c.l.b16 %v3716
        %v4928 = vunpack.c.h.b16 %v3716
        %v4929 = vunpack.c.l.b16 %v3717
        %v4930 = vunpack.c.h.b16 %v3717
        %v4931 = vunpack.c.l.b16 %v3718
        %v4932 = vunpack.c.h.b16 %v3718
        %v4933 = vunpack.c.l.b16 %v3719
        %v4934 = vunpack.c.h.b16 %v3719
        %v4935 = vunpack.c.l.b16 %v3720
        %v4936 = vunpack.c.h.b16 %v3720
        %v4937 = vunpack.c.l.b16 %v3721
        %v4938 = vunpack.c.h.b16 %v3721
        %v4939 = vunpack.c.l.b16 %v3722
        %v4940 = vunpack.c.h.b16 %v3722
        %v4941 = vunpack.c.l.b16 %v3723
        %v4942 = vunpack.c.h.b16 %v3723
        %v4943 = vunpack.c.l.b16 %v3724
        %v4944 = vunpack.c.h.b16 %v3724
        %v4945 = vunpack.c.l.b16 %v3725
        %v4946 = vunpack.c.h.b16 %v3725
        %v4947 = vunpack.c.l.b16 %v3726
        %v4948 = vunpack.c.h.b16 %v3726
        %v4949 = vunpack.c.l.b16 %v3727
        %v4950 = vunpack.c.h.b16 %v3727
        %v4951 = vunpack.c.l.b16 %v3728
        %v4952 = vunpack.c.h.b16 %v3728
        %v4953 = vunpack.c.l.b16 %v3729
        %v4954 = vunpack.c.h.b16 %v3729
        %v4955 = vunpack.c.l.b16 %v3730
        %v4956 = vunpack.c.h.b16 %v3730
        %v4957 = vunpack.c.l.b16 %v3731
        %v4958 = vunpack.c.h.b16 %v3731
        %v4959 = vunpack.c.l.b16 %v3732
        %v4960 = vunpack.c.h.b16 %v3732
        %v4961 = vunpack.c.l.b16 %v3733
        %v4962 = vunpack.c.h.b16 %v3733
        %v4963 = vunpack.c.l.b16 %v3734
        %v4964 = vunpack.c.h.b16 %v3734
        %v4965 = vunpack.c.l.b16 %v3735
        %v4966 = vunpack.c.h.b16 %v3735
        %v4967 = vunpack.c.l.b16 %v3736
        %v4968 = vunpack.c.h.b16 %v3736
        %v4969 = vunpack.c.l.b16 %v3737
        %v4970 = vunpack.c.h.b16 %v3737
        %v4971 = vunpack.c.l.b16 %v3738
        %v4972 = vunpack.c.h.b16 %v3738
        %v4973 = vunpack.c.l.b16 %v3739
        %v4974 = vunpack.c.h.b16 %v3739
        %v4975 = vunpack.c.l.b16 %v3740
        %v4976 = vunpack.c.h.b16 %v3740
        %v4977 = vunpack.c.l.b16 %v3741
        %v4978 = vunpack.c.h.b16 %v3741
        %v4979 = vunpack.c.l.b16 %v3742
        %v4980 = vunpack.c.h.b16 %v3742
        %v4981 = vunpack.c.l.b16 %v3743
        %v4982 = vunpack.c.h.b16 %v3743
        %v4983 = vunpack.c.l.b16 %v3744
        %v4984 = vunpack.c.h.b16 %v3744
        %v4985 = vunpack.c.l.b16 %v3745
        %v4986 = vunpack.c.h.b16 %v3745
        %v4987 = vunpack.c.l.b16 %v3746
        %v4988 = vunpack.c.h.b16 %v3746
        %v4989 = vunpack.c.l.b16 %v3747
        %v4990 = vunpack.c.h.b16 %v3747
        %v4991 = vunpack.c.l.b16 %v3748
        %v4992 = vunpack.c.h.b16 %v3748
        %v4993 = vunpack.c.l.b16 %v3749
        %v4994 = vunpack.c.h.b16 %v3749
        %v4995 = vunpack.c.l.b16 %v3750
        %v4996 = vunpack.c.h.b16 %v3750
        %v4997 = vunpack.c.l.b16 %v3751
        %v4998 = vunpack.c.h.b16 %v3751
        %v4999 = vunpack.c.l.b16 %v3752
        %v5000 = vunpack.c.h.b16 %v3752
        %v5001 = vunpack.c.l.b16 %v3753
        %v5002 = vunpack.c.h.b16 %v3753
        %v5003 = vunpack.c.l.b16 %v3754
        %v5004 = vunpack.c.h.b16 %v3754
        %v5005 = vunpack.c.l.b16 %v3755
        %v5006 = vunpack.c.h.b16 %v3755
        %v5007 = vunpack.c.l.b16 %v3756
        %v5008 = vunpack.c.h.b16 %v3756
        %v5009 = vunpack.c.l.b16 %v3757
        %v5010 = vunpack.c.h.b16 %v3757
        %v5011 = vunpack.c.l.b16 %v3758
        %v5012 = vunpack.c.h.b16 %v3758
        %v5013 = vunpack.c.l.b16 %v3759
        %v5014 = vunpack.c.h.b16 %v3759
        %v5015 = vunpack.c.l.b16 %v3760
        %v5016 = vunpack.c.h.b16 %v3760
        %v5017 = vunpack.c.l.b16 %v3761
        %v5018 = vunpack.c.h.b16 %v3761
        %v5019 = vunpack.c.l.b16 %v3762
        %v5020 = vunpack.c.h.b16 %v3762
        %v5021 = vunpack.c.l.b16 %v3763
        %v5022 = vunpack.c.h.b16 %v3763
        %v5023 = vunpack.c.l.b16 %v3764
        %v5024 = vunpack.c.h.b16 %v3764
        %v5025 = vunpack.c.l.b16 %v3765
        %v5026 = vunpack.c.h.b16 %v3765
        %v5027 = vunpack.c.l.b16 %v3766
        %v5028 = vunpack.c.h.b16 %v3766
        %v5029 = vunpack.c.l.b16 %v3767
        %v5030 = vunpack.c.h.b16 %v3767
        %v5031 = vunpack.c.l.b16 %v3768
        %v5032 = vunpack.c.h.b16 %v3768
        %v5033 = vunpack.c.l.b16 %v3769
        %v5034 = vunpack.c.h.b16 %v3769
        %v5035 = vunpack.c.l.b16 %v3770
        %v5036 = vunpack.c.h.b16 %v3770
        %v5037 = vunpack.c.l.b16 %v3771
        %v5038 = vunpack.c.h.b16 %v3771
        %v5039 = vunpack.c.l.b16 %v3772
        %v5040 = vunpack.c.h.b16 %v3772
        %v5041 = vunpack.c.l.b16 %v3773
        %v5042 = vunpack.c.h.b16 %v3773
        %v5043 = vunpack.c.l.b16 %v3774
        %v5044 = vunpack.c.h.b16 %v3774
        %v5045 = vunpack.c.l.b16 %v3775
        %v5046 = vunpack.c.h.b16 %v3775
        %v5047 = vunpack.c.l.b16 %v3776
        %v5048 = vunpack.c.h.b16 %v3776
        %v5049 = vunpack.c.l.b16 %v3777
        %v5050 = vunpack.c.h.b16 %v3777
        %v5051 = vunpack.c.l.b16 %v3778
        %v5052 = vunpack.c.h.b16 %v3778
        %v5053 = vunpack.c.l.b16 %v3779
        %v5054 = vunpack.c.h.b16 %v3779
        %v5055 = vunpack.c.l.b16 %v3780
        %v5056 = vunpack.c.h.b16 %v3780
        %v5057 = vunpack.c.l.b16 %v3781
        %v5058 = vunpack.c.h.b16 %v3781
        %v5059 = vunpack.c.l.b16 %v3782
        %v5060 = vunpack.c.h.b16 %v3782
        %v5061 = vunpack.c.l.b16 %v3783
        %v5062 = vunpack.c.h.b16 %v3783
        %v5063 = vunpack.c.l.b16 %v3784
        %v5064 = vunpack.c.h.b16 %v3784
        %v5065 = vunpack.c.l.b16 %v3785
        %v5066 = vunpack.c.h.b16 %v3785
        %v5067 = vunpack.c.l.b16 %v3786
        %v5068 = vunpack.c.h.b16 %v3786
        %v5069 = vunpack.c.l.b16 %v3787
        %v5070 = vunpack.c.h.b16 %v3787
        %v5071 = vunpack.c.l.b16 %v3788
        %v5072 = vunpack.c.h.b16 %v3788
        %v5073 = vunpack.c.l.b16 %v3789
        %v5074 = vunpack.c.h.b16 %v3789
        %v5075 = vunpack.c.l.b16 %v3790
        %v5076 = vunpack.c.h.b16 %v3790
        %v5077 = vunpack.c.l.b16 %v3791
        %v5078 = vunpack.c.h.b16 %v3791
        %v5079 = vunpack.c.l.b16 %v3792
        %v5080 = vunpack.c.h.b16 %v3792
        %v5081 = vunpack.c.l.b16 %v3793
        %v5082 = vunpack.c.h.b16 %v3793
        %v5083 = vunpack.c.l.b16 %v3794
        %v5084 = vunpack.c.h.b16 %v3794
        %v5085 = vunpack.c.l.b16 %v3795
        %v5086 = vunpack.c.h.b16 %v3795
        %v5087 = vunpack.c.l.b16 %v3796
        %v5088 = vunpack.c.h.b16 %v3796
        %v5089 = vunpack.c.l.b16 %v3797
        %v5090 = vunpack.c.h.b16 %v3797
        %v5091 = vunpack.c.l.b16 %v3798
        %v5092 = vunpack.c.h.b16 %v3798
        %v5093 = vunpack.c.l.b16 %v3799
        %v5094 = vunpack.c.h.b16 %v3799
        %v5095 = vunpack.c.l.b16 %v3800
        %v5096 = vunpack.c.h.b16 %v3800
        %v5097 = vunpack.c.l.b16 %v3801
        %v5098 = vunpack.c.h.b16 %v3801
        %v5099 = vunpack.c.l.b16 %v3802
        %v5100 = vunpack.c.h.b16 %v3802
        %v5101 = vunpack.c.l.b16 %v3803
        %v5102 = vunpack.c.h.b16 %v3803
        %v5103 = vunpack.c.l.b16 %v3804
        %v5104 = vunpack.c.h.b16 %v3804
        %v5105 = vunpack.c.l.b16 %v3805
        %v5106 = vunpack.c.h.b16 %v3805
        %v5107 = vunpack.c.l.b16 %v3806
        %v5108 = vunpack.c.h.b16 %v3806
        %v5109 = vunpack.c.l.b16 %v3807
        %v5110 = vunpack.c.h.b16 %v3807
        %v5111 = vunpack.c.l.b16 %v3808
        %v5112 = vunpack.c.h.b16 %v3808
        %v5113 = vunpack.c.l.b16 %v3809
        %v5114 = vunpack.c.h.b16 %v3809
        %v5115 = vunpack.c.l.b16 %v3810
        %v5116 = vunpack.c.h.b16 %v3810
        %v5117 = vunpack.c.l.b16 %v3811
        %v5118 = vunpack.c.h.b16 %v3811
        %v5119 = vunpack.c.l.b16 %v3812
        %v5120 = vunpack.c.h.b16 %v3812
        %v5121 = vunpack.c.l.b16 %v3813
        %v5122 = vunpack.c.h.b16 %v3813
        %v5123 = vunpack.c.l.b16 %v3814
        %v5124 = vunpack.c.h.b16 %v3814
        %v5125 = vunpack.c.l.b16 %v3815
        %v5126 = vunpack.c.h.b16 %v3815
        %v5127 = vunpack.c.l.b16 %v3816
        %v5128 = vunpack.c.h.b16 %v3816
        %v5129 = vunpack.c.l.b16 %v3817
        %v5130 = vunpack.c.h.b16 %v3817
        %v5131 = vunpack.c.l.b16 %v3818
        %v5132 = vunpack.c.h.b16 %v3818
        %v5133 = vunpack.c.l.b16 %v3819
        %v5134 = vunpack.c.h.b16 %v3819
        %v5135 = vunpack.c.l.b16 %v3820
        %v5136 = vunpack.c.h.b16 %v3820
        %v5137 = vunpack.c.l.b16 %v3821
        %v5138 = vunpack.c.h.b16 %v3821
        %v5139 = vunpack.c.l.b16 %v3822
        %v5140 = vunpack.c.h.b16 %v3822
        %v5141 = vunpack.c.l.b16 %v3823
        %v5142 = vunpack.c.h.b16 %v3823
        %v5143 = vunpack.c.l.b16 %v3824
        %v5144 = vunpack.c.h.b16 %v3824
        %v5145 = vunpack.c.l.b16 %v3825
        %v5146 = vunpack.c.h.b16 %v3825
        %v5147 = vunpack.c.l.b16 %v3826
        %v5148 = vunpack.c.h.b16 %v3826
        %v5149 = vunpack.c.l.b16 %v3827
        %v5150 = vunpack.c.h.b16 %v3827
        %v5151 = vunpack.c.l.b16 %v3828
        %v5152 = vunpack.c.h.b16 %v3828
        %v5153 = vunpack.c.l.b16 %v3829
        %v5154 = vunpack.c.h.b16 %v3829
        %v5155 = vunpack.c.l.b16 %v3830
        %v5156 = vunpack.c.h.b16 %v3830
        %v5157 = vunpack.c.l.b16 %v3831
        %v5158 = vunpack.c.h.b16 %v3831
        %v5159 = vunpack.c.l.b16 %v3832
        %v5160 = vunpack.c.h.b16 %v3832
        %v5161 = vunpack.c.l.b16 %v3833
        %v5162 = vunpack.c.h.b16 %v3833
        %v5163 = vunpack.c.l.b16 %v3834
        %v5164 = vunpack.c.h.b16 %v3834
        %v5165 = vunpack.c.l.b16 %v3835
        %v5166 = vunpack.c.h.b16 %v3835
        %v5167 = vunpack.c.l.b16 %v3836
        %v5168 = vunpack.c.h.b16 %v3836
        %v5169 = vunpack.c.l.b16 %v3837
        %v5170 = vunpack.c.h.b16 %v3837
        %v5171 = vunpack.c.l.b16 %v3838
        %v5172 = vunpack.c.h.b16 %v3838
        %v5173 = vunpack.c.l.b16 %v3839
        %v5174 = vunpack.c.h.b16 %v3839
        %v5175 = vunpack.c.l.b16 %v3840
        %v5176 = vunpack.c.h.b16 %v3840
        %v5177 = vunpack.c.l.b16 %v3841
        %v5178 = vunpack.c.h.b16 %v3841
        %v5179 = vunpack.c.l.b16 %v3842
        %v5180 = vunpack.c.h.b16 %v3842
        %v5181 = vunpack.c.l.b16 %v3843
        %v5182 = vunpack.c.h.b16 %v3843
        %v5183 = vunpack.c.l.b16 %v3844
        %v5184 = vunpack.c.h.b16 %v3844
        %v5185 = vunpack.c.l.b16 %v3845
        %v5186 = vunpack.c.h.b16 %v3845
        %v5187 = vunpack.c.l.b16 %v3846
        %v5188 = vunpack.c.h.b16 %v3846
        %v5189 = vunpack.c.l.b16 %v3847
        %v5190 = vunpack.c.h.b16 %v3847
        %v5191 = vunpack.c.l.b16 %v3848
        %v5192 = vunpack.c.h.b16 %v3848
        %v5193 = vunpack.c.l.b16 %v3849
        %v5194 = vunpack.c.h.b16 %v3849
        %v5195 = vunpack.c.l.b16 %v3850
        %v5196 = vunpack.c.h.b16 %v3850
        %v5197 = vunpack.c.l.b16 %v3851
        %v5198 = vunpack.c.h.b16 %v3851
        %v5199 = vunpack.c.l.b16 %v3852
        %v5200 = vunpack.c.h.b16 %v3852
        %v5201 = vunpack.c.l.b16 %v3853
        %v5202 = vunpack.c.h.b16 %v3853
        %v5203 = vunpack.c.l.b16 %v3854
        %v5204 = vunpack.c.h.b16 %v3854
        %v5205 = vunpack.c.l.b16 %v3855
        %v5206 = vunpack.c.h.b16 %v3855
        %v5207 = vunpack.c.l.b16 %v3856
        %v5208 = vunpack.c.h.b16 %v3856
        %v5209 = vunpack.c.l.b16 %v3857
        %v5210 = vunpack.c.h.b16 %v3857
        %v5211 = vunpack.c.l.b16 %v3858
        %v5212 = vunpack.c.h.b16 %v3858
        %v5213 = vpack.c.b16 %v4321, %v4317
        %v5214 = vpack.c.b16 %v4322, %v4318
        %v5215 = vpack.c.b16 %v4323, %v4319
        %v5216 = vpack.c.b16 %v4324, %v4320
        %v5217 = vpack.c.b16 %v4329, %v4325
        %v5218 = vpack.c.b16 %v4330, %v4326
        %v5219 = vpack.c.b16 %v4331, %v4327
        %v5220 = vpack.c.b16 %v4332, %v4328
        %v5221 = vpack.c.b16 %v4337, %v4333
        %v5222 = vpack.c.b16 %v4338, %v4334
        %v5223 = vpack.c.b16 %v4339, %v4335
        %v5224 = vpack.c.b16 %v4340, %v4336
        %v5225 = vpack.c.b16 %v4345, %v4341
        %v5226 = vpack.c.b16 %v4346, %v4342
        %v5227 = vpack.c.b16 %v4347, %v4343
        %v5228 = vpack.c.b16 %v4348, %v4344
        %v5229 = vpack.c.b16 %v4353, %v4349
        %v5230 = vpack.c.b16 %v4354, %v4350
        %v5231 = vpack.c.b16 %v4355, %v4351
        %v5232 = vpack.c.b16 %v4356, %v4352
        %v5233 = vpack.c.b16 %v4361, %v4357
        %v5234 = vpack.c.b16 %v4362, %v4358
        %v5235 = vpack.c.b16 %v4363, %v4359
        %v5236 = vpack.c.b16 %v4364, %v4360
        %v5237 = vpack.c.b16 %v4369, %v4365
        %v5238 = vpack.c.b16 %v4370, %v4366
        %v5239 = vpack.c.b16 %v4371, %v4367
        %v5240 = vpack.c.b16 %v4372, %v4368
        %v5241 = vpack.c.b16 %v4377, %v4373
        %v5242 = vpack.c.b16 %v4378, %v4374
        %v5243 = vpack.c.b16 %v4379, %v4375
        %v5244 = vpack.c.b16 %v4380, %v4376
        %v5245 = vpack.c.b16 %v4385, %v4381
        %v5246 = vpack.c.b16 %v4386, %v4382
        %v5247 = vpack.c.b16 %v4387, %v4383
        %v5248 = vpack.c.b16 %v4388, %v4384
        %v5249 = vpack.c.b16 %v4393, %v4389
        %v5250 = vpack.c.b16 %v4394, %v4390
        %v5251 = vpack.c.b16 %v4395, %v4391
        %v5252 = vpack.c.b16 %v4396, %v4392
        %v5253 = vpack.c.b16 %v4401, %v4397
        %v5254 = vpack.c.b16 %v4402, %v4398
        %v5255 = vpack.c.b16 %v4403, %v4399
        %v5256 = vpack.c.b16 %v4404, %v4400
        %v5257 = vpack.c.b16 %v4409, %v4405
        %v5258 = vpack.c.b16 %v4410, %v4406
        %v5259 = vpack.c.b16 %v4411, %v4407
        %v5260 = vpack.c.b16 %v4412, %v4408
        %v5261 = vpack.c.b16 %v4417, %v4413
        %v5262 = vpack.c.b16 %v4418, %v4414
        %v5263 = vpack.c.b16 %v4419, %v4415
        %v5264 = vpack.c.b16 %v4420, %v4416
        %v5265 = vpack.c.b16 %v4425, %v4421
        %v5266 = vpack.c.b16 %v4426, %v4422
        %v5267 = vpack.c.b16 %v4427, %v4423
        %v5268 = vpack.c.b16 %v4428, %v4424
        %v5269 = vpack.c.b16 %v4433, %v4429
        %v5270 = vpack.c.b16 %v4434, %v4430
        %v5271 = vpack.c.b16 %v4435, %v4431
        %v5272 = vpack.c.b16 %v4436, %v4432
        %v5273 = vpack.c.b16 %v4441, %v4437
        %v5274 = vpack.c.b16 %v4442, %v4438
        %v5275 = vpack.c.b16 %v4443, %v4439
        %v5276 = vpack.c.b16 %v4444, %v4440
        %v5277 = vpack.c.b16 %v4449, %v4445
        %v5278 = vpack.c.b16 %v4450, %v4446
        %v5279 = vpack.c.b16 %v4451, %v4447
        %v5280 = vpack.c.b16 %v4452, %v4448
        %v5281 = vpack.c.b16 %v4457, %v4453
        %v5282 = vpack.c.b16 %v4458, %v4454
        %v5283 = vpack.c.b16 %v4459, %v4455
        %v5284 = vpack.c.b16 %v4460, %v4456
        %v5285 = vpack.c.b16 %v4465, %v4461
        %v5286 = vpack.c.b16 %v4466, %v4462
        %v5287 = vpack.c.b16 %v4467, %v4463
        %v5288 = vpack.c.b16 %v4468, %v4464
        %v5289 = vpack.c.b16 %v4473, %v4469
        %v5290 = vpack.c.b16 %v4474, %v4470
        %v5291 = vpack.c.b16 %v4475, %v4471
        %v5292 = vpack.c.b16 %v4476, %v4472
        %v5293 = vpack.c.b16 %v4481, %v4477
        %v5294 = vpack.c.b16 %v4482, %v4478
        %v5295 = vpack.c.b16 %v4483, %v4479
        %v5296 = vpack.c.b16 %v4484, %v4480
        %v5297 = vpack.c.b16 %v4489, %v4485
        %v5298 = vpack.c.b16 %v4490, %v4486
        %v5299 = vpack.c.b16 %v4491, %v4487
        %v5300 = vpack.c.b16 %v4492, %v4488
        %v5301 = vpack.c.b16 %v4497, %v4493
        %v5302 = vpack.c.b16 %v4498, %v4494
        %v5303 = vpack.c.b16 %v4499, %v4495
        %v5304 = vpack.c.b16 %v4500, %v4496
        %v5305 = vpack.c.b16 %v4505, %v4501
        %v5306 = vpack.c.b16 %v4506, %v4502
        %v5307 = vpack.c.b16 %v4507, %v4503
        %v5308 = vpack.c.b16 %v4508, %v4504
        %v5309 = vpack.c.b16 %v4513, %v4509
        %v5310 = vpack.c.b16 %v4514, %v4510
        %v5311 = vpack.c.b16 %v4515, %v4511
        %v5312 = vpack.c.b16 %v4516, %v4512
        %v5313 = vpack.c.b16 %v4521, %v4517
        %v5314 = vpack.c.b16 %v4522, %v4518
        %v5315 = vpack.c.b16 %v4523, %v4519
        %v5316 = vpack.c.b16 %v4524, %v4520
        %v5317 = vpack.c.b16 %v4529, %v4525
        %v5318 = vpack.c.b16 %v4530, %v4526
        %v5319 = vpack.c.b16 %v4531, %v4527
        %v5320 = vpack.c.b16 %v4532, %v4528
        %v5321 = vpack.c.b16 %v4537, %v4533
        %v5322 = vpack.c.b16 %v4538, %v4534
        %v5323 = vpack.c.b16 %v4539, %v4535
        %v5324 = vpack.c.b16 %v4540, %v4536
        %v5325 = vpack.c.b16 %v4545, %v4541
        %v5326 = vpack.c.b16 %v4546, %v4542
        %v5327 = vpack.c.b16 %v4547, %v4543
        %v5328 = vpack.c.b16 %v4548, %v4544
        %v5329 = vpack.c.b16 %v4553, %v4549
        %v5330 = vpack.c.b16 %v4554, %v4550
        %v5331 = vpack.c.b16 %v4555, %v4551
        %v5332 = vpack.c.b16 %v4556, %v4552
        %v5333 = vpack.c.b16 %v4561, %v4557
        %v5334 = vpack.c.b16 %v4562, %v4558
        %v5335 = vpack.c.b16 %v4563, %v4559
        %v5336 = vpack.c.b16 %v4564, %v4560
        %v5337 = vpack.c.b16 %v4569, %v4565
        %v5338 = vpack.c.b16 %v4570, %v4566
        %v5339 = vpack.c.b16 %v4571, %v4567
        %v5340 = vpack.c.b16 %v4572, %v4568
        %v5341 = vpack.c.b16 %v4577, %v4573
        %v5342 = vpack.c.b16 %v4578, %v4574
        %v5343 = vpack.c.b16 %v4579, %v4575
        %v5344 = vpack.c.b16 %v4580, %v4576
        %v5345 = vpack.c.b16 %v4585, %v4581
        %v5346 = vpack.c.b16 %v4586, %v4582
        %v5347 = vpack.c.b16 %v4587, %v4583
        %v5348 = vpack.c.b16 %v4588, %v4584
        %v5349 = vpack.c.b16 %v4593, %v4589
        %v5350 = vpack.c.b16 %v4594, %v4590
        %v5351 = vpack.c.b16 %v4595, %v4591
        %v5352 = vpack.c.b16 %v4596, %v4592
        %v5353 = vpack.c.b16 %v4601, %v4597
        %v5354 = vpack.c.b16 %v4602, %v4598
        %v5355 = vpack.c.b16 %v4603, %v4599
        %v5356 = vpack.c.b16 %v4604, %v4600
        %v5357 = vpack.c.b16 %v4609, %v4605
        %v5358 = vpack.c.b16 %v4610, %v4606
        %v5359 = vpack.c.b16 %v4611, %v4607
        %v5360 = vpack.c.b16 %v4612, %v4608
        %v5361 = vpack.c.b16 %v4617, %v4613
        %v5362 = vpack.c.b16 %v4618, %v4614
        %v5363 = vpack.c.b16 %v4619, %v4615
        %v5364 = vpack.c.b16 %v4620, %v4616
        %v5365 = vpack.c.b16 %v4625, %v4621
        %v5366 = vpack.c.b16 %v4626, %v4622
        %v5367 = vpack.c.b16 %v4627, %v4623
        %v5368 = vpack.c.b16 %v4628, %v4624
        %v5369 = vpack.c.b16 %v4633, %v4629
        %v5370 = vpack.c.b16 %v4634, %v4630
        %v5371 = vpack.c.b16 %v4635, %v4631
        %v5372 = vpack.c.b16 %v4636, %v4632
        %v5373 = vpack.c.b16 %v4641, %v4637
        %v5374 = vpack.c.b16 %v4642, %v4638
        %v5375 = vpack.c.b16 %v4643, %v4639
        %v5376 = vpack.c.b16 %v4644, %v4640
        %v5377 = vpack.c.b16 %v4649, %v4645
        %v5378 = vpack.c.b16 %v4650, %v4646
        %v5379 = vpack.c.b16 %v4651, %v4647
        %v5380 = vpack.c.b16 %v4652, %v4648
        %v5381 = vpack.c.b16 %v4657, %v4653
        %v5382 = vpack.c.b16 %v4658, %v4654
        %v5383 = vpack.c.b16 %v4659, %v4655
        %v5384 = vpack.c.b16 %v4660, %v4656
        %v5385 = vpack.c.b16 %v4665, %v4661
        %v5386 = vpack.c.b16 %v4666, %v4662
        %v5387 = vpack.c.b16 %v4667, %v4663
        %v5388 = vpack.c.b16 %v4668, %v4664
        %v5389 = vpack.c.b16 %v4673, %v4669
        %v5390 = vpack.c.b16 %v4674, %v4670
        %v5391 = vpack.c.b16 %v4675, %v4671
        %v5392 = vpack.c.b16 %v4676, %v4672
        %v5393 = vpack.c.b16 %v4681, %v4677
        %v5394 = vpack.c.b16 %v4682, %v4678
        %v5395 = vpack.c.b16 %v4683, %v4679
        %v5396 = vpack.c.b16 %v4684, %v4680
        %v5397 = vpack.c.b16 %v4689, %v4685
        %v5398 = vpack.c.b16 %v4690, %v4686
        %v5399 = vpack.c.b16 %v4691, %v4687
        %v5400 = vpack.c.b16 %v4692, %v4688
        %v5401 = vpack.c.b16 %v4697, %v4693
        %v5402 = vpack.c.b16 %v4698, %v4694
        %v5403 = vpack.c.b16 %v4699, %v4695
        %v5404 = vpack.c.b16 %v4700, %v4696
        %v5405 = vpack.c.b16 %v4705, %v4701
        %v5406 = vpack.c.b16 %v4706, %v4702
        %v5407 = vpack.c.b16 %v4707, %v4703
        %v5408 = vpack.c.b16 %v4708, %v4704
        %v5409 = vpack.c.b16 %v4713, %v4709
        %v5410 = vpack.c.b16 %v4714, %v4710
        %v5411 = vpack.c.b16 %v4715, %v4711
        %v5412 = vpack.c.b16 %v4716, %v4712
        %v5413 = vpack.c.b16 %v4721, %v4717
        %v5414 = vpack.c.b16 %v4722, %v4718
        %v5415 = vpack.c.b16 %v4723, %v4719
        %v5416 = vpack.c.b16 %v4724, %v4720
        %v5417 = vpack.c.b16 %v4729, %v4725
        %v5418 = vpack.c.b16 %v4730, %v4726
        %v5419 = vpack.c.b16 %v4731, %v4727
        %v5420 = vpack.c.b16 %v4732, %v4728
        %v5421 = vpack.c.b16 %v4737, %v4733
        %v5422 = vpack.c.b16 %v4738, %v4734
        %v5423 = vpack.c.b16 %v4739, %v4735
        %v5424 = vpack.c.b16 %v4740, %v4736
        %v5425 = vpack.c.b16 %v4745, %v4741
        %v5426 = vpack.c.b16 %v4746, %v4742
        %v5427 = vpack.c.b16 %v4747, %v4743
        %v5428 = vpack.c.b16 %v4748, %v4744
        %v5429 = vpack.c.b16 %v4753, %v4749
        %v5430 = vpack.c.b16 %v4754, %v4750
        %v5431 = vpack.c.b16 %v4755, %v4751
        %v5432 = vpack.c.b16 %v4756, %v4752
        %v5433 = vpack.c.b16 %v4761, %v4757
        %v5434 = vpack.c.b16 %v4762, %v4758
        %v5435 = vpack.c.b16 %v4763, %v4759
        %v5436 = vpack.c.b16 %v4764, %v4760
        %v5437 = vpack.c.b16 %v4769, %v4765
        %v5438 = vpack.c.b16 %v4770, %v4766
        %v5439 = vpack.c.b16 %v4771, %v4767
        %v5440 = vpack.c.b16 %v4772, %v4768
        %v5441 = vpack.c.b16 %v4777, %v4773
        %v5442 = vpack.c.b16 %v4778, %v4774
        %v5443 = vpack.c.b16 %v4779, %v4775
        %v5444 = vpack.c.b16 %v4780, %v4776
        %v5445 = vpack.c.b16 %v4785, %v4781
        %v5446 = vpack.c.b16 %v4786, %v4782
        %v5447 = vpack.c.b16 %v4787, %v4783
        %v5448 = vpack.c.b16 %v4788, %v4784
        %v5449 = vpack.c.b16 %v4793, %v4789
        %v5450 = vpack.c.b16 %v4794, %v4790
        %v5451 = vpack.c.b16 %v4795, %v4791
        %v5452 = vpack.c.b16 %v4796, %v4792
        %v5453 = vpack.c.b16 %v4801, %v4797
        %v5454 = vpack.c.b16 %v4802, %v4798
        %v5455 = vpack.c.b16 %v4803, %v4799
        %v5456 = vpack.c.b16 %v4804, %v4800
        %v5457 = vpack.c.b16 %v4809, %v4805
        %v5458 = vpack.c.b16 %v4810, %v4806
        %v5459 = vpack.c.b16 %v4811, %v4807
        %v5460 = vpack.c.b16 %v4812, %v4808
        %v5461 = vpack.c.b16 %v4817, %v4813
        %v5462 = vpack.c.b16 %v4818, %v4814
        %v5463 = vpack.c.b16 %v4819, %v4815
        %v5464 = vpack.c.b16 %v4820, %v4816
        %v5465 = vpack.c.b16 %v4825, %v4821
        %v5466 = vpack.c.b16 %v4826, %v4822
        %v5467 = vpack.c.b16 %v4827, %v4823
        %v5468 = vpack.c.b16 %v4828, %v4824
        %v5469 = vpack.c.b16 %v4833, %v4829
        %v5470 = vpack.c.b16 %v4834, %v4830
        %v5471 = vpack.c.b16 %v4835, %v4831
        %v5472 = vpack.c.b16 %v4836, %v4832
        %v5473 = vpack.c.b16 %v4841, %v4837
        %v5474 = vpack.c.b16 %v4842, %v4838
        %v5475 = vpack.c.b16 %v4843, %v4839
        %v5476 = vpack.c.b16 %v4844, %v4840
        %v5477 = vpack.c.b16 %v4849, %v4845
        %v5478 = vpack.c.b16 %v4850, %v4846
        %v5479 = vpack.c.b16 %v4851, %v4847
        %v5480 = vpack.c.b16 %v4852, %v4848
        %v5481 = vpack.c.b16 %v4857, %v4853
        %v5482 = vpack.c.b16 %v4858, %v4854
        %v5483 = vpack.c.b16 %v4859, %v4855
        %v5484 = vpack.c.b16 %v4860, %v4856
        %v5485 = vpack.c.b16 %v4865, %v4861
        %v5486 = vpack.c.b16 %v4866, %v4862
        %v5487 = vpack.c.b16 %v4867, %v4863
        %v5488 = vpack.c.b16 %v4868, %v4864
        %v5489 = vpack.c.b16 %v4873, %v4869
        %v5490 = vpack.c.b16 %v4874, %v4870
        %v5491 = vpack.c.b16 %v4875, %v4871
        %v5492 = vpack.c.b16 %v4876, %v4872
        %v5493 = vpack.c.b16 %v4881, %v4877
        %v5494 = vpack.c.b16 %v4882, %v4878
        %v5495 = vpack.c.b16 %v4883, %v4879
        %v5496 = vpack.c.b16 %v4884, %v4880
        %v5497 = vpack.c.b16 %v4889, %v4885
        %v5498 = vpack.c.b16 %v4890, %v4886
        %v5499 = vpack.c.b16 %v4891, %v4887
        %v5500 = vpack.c.b16 %v4892, %v4888
        %v5501 = vpack.c.b16 %v4897, %v4893
        %v5502 = vpack.c.b16 %v4898, %v4894
        %v5503 = vpack.c.b16 %v4899, %v4895
        %v5504 = vpack.c.b16 %v4900, %v4896
        %v5505 = vpack.c.b16 %v4905, %v4901
        %v5506 = vpack.c.b16 %v4906, %v4902
        %v5507 = vpack.c.b16 %v4907, %v4903
        %v5508 = vpack.c.b16 %v4908, %v4904
        %v5509 = vpack.c.b16 %v4913, %v4909
        %v5510 = vpack.c.b16 %v4914, %v4910
        %v5511 = vpack.c.b16 %v4915, %v4911
        %v5512 = vpack.c.b16 %v4916, %v4912
        %v5513 = vpack.c.b16 %v4921, %v4917
        %v5514 = vpack.c.b16 %v4922, %v4918
        %v5515 = vpack.c.b16 %v4923, %v4919
        %v5516 = vpack.c.b16 %v4924, %v4920
        %v5517 = vpack.c.b16 %v4929, %v4925
        %v5518 = vpack.c.b16 %v4930, %v4926
        %v5519 = vpack.c.b16 %v4931, %v4927
        %v5520 = vpack.c.b16 %v4932, %v4928
        %v5521 = vpack.c.b16 %v4937, %v4933
        %v5522 = vpack.c.b16 %v4938, %v4934
        %v5523 = vpack.c.b16 %v4939, %v4935
        %v5524 = vpack.c.b16 %v4940, %v4936
        %v5525 = vpack.c.b16 %v4945, %v4941
        %v5526 = vpack.c.b16 %v4946, %v4942
        %v5527 = vpack.c.b16 %v4947, %v4943
        %v5528 = vpack.c.b16 %v4948, %v4944
        %v5529 = vpack.c.b16 %v4953, %v4949
        %v5530 = vpack.c.b16 %v4954, %v4950
        %v5531 = vpack.c.b16 %v4955, %v4951
        %v5532 = vpack.c.b16 %v4956, %v4952
        %v5533 = vpack.c.b16 %v4961, %v4957
        %v5534 = vpack.c.b16 %v4962, %v4958
        %v5535 = vpack.c.b16 %v4963, %v4959
        %v5536 = vpack.c.b16 %v4964, %v4960
        %v5537 = vpack.c.b16 %v4969, %v4965
        %v5538 = vpack.c.b16 %v4970, %v4966
        %v5539 = vpack.c.b16 %v4971, %v4967
        %v5540 = vpack.c.b16 %v4972, %v4968
        %v5541 = vpack.c.b16 %v4977, %v4973
        %v5542 = vpack.c.b16 %v4978, %v4974
        %v5543 = vpack.c.b16 %v4979, %v4975
        %v5544 = vpack.c.b16 %v4980, %v4976
        %v5545 = vpack.c.b16 %v4985, %v4981
        %v5546 = vpack.c.b16 %v4986, %v4982
        %v5547 = vpack.c.b16 %v4987, %v4983
        %v5548 = vpack.c.b16 %v4988, %v4984
        %v5549 = vpack.c.b16 %v4993, %v4989
        %v5550 = vpack.c.b16 %v4994, %v4990
        %v5551 = vpack.c.b16 %v4995, %v4991
        %v5552 = vpack.c.b16 %v4996, %v4992
        %v5553 = vpack.c.b16 %v5001, %v4997
        %v5554 = vpack.c.b16 %v5002, %v4998
        %v5555 = vpack.c.b16 %v5003, %v4999
        %v5556 = vpack.c.b16 %v5004, %v5000
        %v5557 = vpack.c.b16 %v5009, %v5005
        %v5558 = vpack.c.b16 %v5010, %v5006
        %v5559 = vpack.c.b16 %v5011, %v5007
        %v5560 = vpack.c.b16 %v5012, %v5008
        %v5561 = vpack.c.b16 %v5017, %v5013
        %v5562 = vpack.c.b16 %v5018, %v5014
        %v5563 = vpack.c.b16 %v5019, %v5015
        %v5564 = vpack.c.b16 %v5020, %v5016
        %v5565 = vpack.c.b16 %v5025, %v5021
        %v5566 = vpack.c.b16 %v5026, %v5022
        %v5567 = vpack.c.b16 %v5027, %v5023
        %v5568 = vpack.c.b16 %v5028, %v5024
        %v5569 = vpack.c.b16 %v5033, %v5029
        %v5570 = vpack.c.b16 %v5034, %v5030
        %v5571 = vpack.c.b16 %v5035, %v5031
        %v5572 = vpack.c.b16 %v5036, %v5032
        %v5573 = vpack.c.b16 %v5041, %v5037
        %v5574 = vpack.c.b16 %v5042, %v5038
        %v5575 = vpack.c.b16 %v5043, %v5039
        %v5576 = vpack.c.b16 %v5044, %v5040
        %v5577 = vpack.c.b16 %v5049, %v5045
        %v5578 = vpack.c.b16 %v5050, %v5046
        %v5579 = vpack.c.b16 %v5051, %v5047
        %v5580 = vpack.c.b16 %v5052, %v5048
        %v5581 = vpack.c.b16 %v5057, %v5053
        %v5582 = vpack.c.b16 %v5058, %v5054
        %v5583 = vpack.c.b16 %v5059, %v5055
        %v5584 = vpack.c.b16 %v5060, %v5056
        %v5585 = vpack.c.b16 %v5065, %v5061
        %v5586 = vpack.c.b16 %v5066, %v5062
        %v5587 = vpack.c.b16 %v5067, %v5063
        %v5588 = vpack.c.b16 %v5068, %v5064
        %v5589 = vpack.c.b16 %v5073, %v5069
        %v5590 = vpack.c.b16 %v5074, %v5070
        %v5591 = vpack.c.b16 %v5075, %v5071
        %v5592 = vpack.c.b16 %v5076, %v5072
        %v5593 = vpack.c.b16 %v5081, %v5077
        %v5594 = vpack.c.b16 %v5082, %v5078
        %v5595 = vpack.c.b16 %v5083, %v5079
        %v5596 = vpack.c.b16 %v5084, %v5080
        %v5597 = vpack.c.b16 %v5089, %v5085
        %v5598 = vpack.c.b16 %v5090, %v5086
        %v5599 = vpack.c.b16 %v5091, %v5087
        %v5600 = vpack.c.b16 %v5092, %v5088
        %v5601 = vpack.c.b16 %v5097, %v5093
        %v5602 = vpack.c.b16 %v5098, %v5094
        %v5603 = vpack.c.b16 %v5099, %v5095
        %v5604 = vpack.c.b16 %v5100, %v5096
        %v5605 = vpack.c.b16 %v5105, %v5101
        %v5606 = vpack.c.b16 %v5106, %v5102
        %v5607 = vpack.c.b16 %v5107, %v5103
        %v5608 = vpack.c.b16 %v5108, %v5104
        %v5609 = vpack.c.b16 %v5113, %v5109
        %v5610 = vpack.c.b16 %v5114, %v5110
        %v5611 = vpack.c.b16 %v5115, %v5111
        %v5612 = vpack.c.b16 %v5116, %v5112
        %v5613 = vpack.c.b16 %v5121, %v5117
        %v5614 = vpack.c.b16 %v5122, %v5118
        %v5615 = vpack.c.b16 %v5123, %v5119
        %v5616 = vpack.c.b16 %v5124, %v5120
        %v5617 = vpack.c.b16 %v5129, %v5125
        %v5618 = vpack.c.b16 %v5130, %v5126
        %v5619 = vpack.c.b16 %v5131, %v5127
        %v5620 = vpack.c.b16 %v5132, %v5128
        %v5621 = vpack.c.b16 %v5137, %v5133
        %v5622 = vpack.c.b16 %v5138, %v5134
        %v5623 = vpack.c.b16 %v5139, %v5135
        %v5624 = vpack.c.b16 %v5140, %v5136
        %v5625 = vpack.c.b16 %v5145, %v5141
        %v5626 = vpack.c.b16 %v5146, %v5142
        %v5627 = vpack.c.b16 %v5147, %v5143
        %v5628 = vpack.c.b16 %v5148, %v5144
        %v5629 = vpack.c.b16 %v5153, %v5149
        %v5630 = vpack.c.b16 %v5154, %v5150
        %v5631 = vpack.c.b16 %v5155, %v5151
        %v5632 = vpack.c.b16 %v5156, %v5152
        %v5633 = vpack.c.b16 %v5161, %v5157
        %v5634 = vpack.c.b16 %v5162, %v5158
        %v5635 = vpack.c.b16 %v5163, %v5159
        %v5636 = vpack.c.b16 %v5164, %v5160
        %v5637 = vpack.c.b16 %v5169, %v5165
        %v5638 = vpack.c.b16 %v5170, %v5166
        %v5639 = vpack.c.b16 %v5171, %v5167
        %v5640 = vpack.c.b16 %v5172, %v5168
        %v5641 = vpack.c.b16 %v5177, %v5173
        %v5642 = vpack.c.b16 %v5178, %v5174
        %v5643 = vpack.c.b16 %v5179, %v5175
        %v5644 = vpack.c.b16 %v5180, %v5176
        %v5645 = vpack.c.b16 %v5185, %v5181
        %v5646 = vpack.c.b16 %v5186, %v5182
        %v5647 = vpack.c.b16 %v5187, %v5183
        %v5648 = vpack.c.b16 %v5188, %v5184
        %v5649 = vpack.c.b16 %v5193, %v5189
        %v5650 = vpack.c.b16 %v5194, %v5190
        %v5651 = vpack.c.b16 %v5195, %v5191
        %v5652 = vpack.c.b16 %v5196, %v5192
        %v5653 = vpack.c.b16 %v5201, %v5197
        %v5654 = vpack.c.b16 %v5202, %v5198
        %v5655 = vpack.c.b16 %v5203, %v5199
        %v5656 = vpack.c.b16 %v5204, %v5200
        %v5657 = vpack.c.b16 %v5209, %v5205
        %v5658 = vpack.c.b16 %v5210, %v5206
        %v5659 = vpack.c.b16 %v5211, %v5207
        %v5660 = vpack.c.b16 %v5212, %v5208
        %6109 = vmatpush.bf16.msra.mxu0 %v5241
        %6110 = vmatpush.bf16.msra.mxu0 %v5237
        %6111 = vmatpush.bf16.msra.mxu0 %v5233
        %6112 = vmatpush.bf16.msra.mxu0 %v5229
        %6113 = vmatpush.bf16.msra.mxu0 %v5225
        %6114 = vmatpush.bf16.msra.mxu0 %v5221
        %6115 = vmatpush.bf16.msra.mxu0 %v5217
        %6116 = vmatpush.bf16.msra.mxu0 %v5213
        %6117 = vmatmul.bf16.gmra.mxu0 %v3397
        %v6118 = vpop.f32.mrf.mxu0
        %v6119 = vadd.f32 %v3861, %v6118
        %v6120 = vpop.f32.mrf.mxu0
        %6121 = vdwg.mxu0
        %6122 = vmatpush.bf16.msra.mxu0 %v5273
        %6123 = vmatpush.bf16.msra.mxu0 %v5269
        %6124 = vmatpush.bf16.msra.mxu0 %v5265
        %6125 = vmatpush.bf16.msra.mxu0 %v5261
        %6126 = vmatpush.bf16.msra.mxu0 %v5257
        %6127 = vmatpush.bf16.msra.mxu0 %v5253
        %6128 = vmatpush.bf16.msra.mxu0 %v5249
        %6129 = vmatpush.bf16.msra.mxu0 %v5245
        %6130 = vmatmul.bf16.gmra.mxu0 %v3398
        %v6131 = vpop.f32.mrf.mxu0
        %v6132 = vadd.f32 %v6119, %v6131
        %v6133 = vpop.f32.mrf.mxu0
        %6134 = vdwg.mxu0
        %6135 = vmatpush.bf16.msra.mxu0 %v5305
        %6136 = vmatpush.bf16.msra.mxu0 %v5301
        %6137 = vmatpush.bf16.msra.mxu0 %v5297
        %6138 = vmatpush.bf16.msra.mxu0 %v5293
        %6139 = vmatpush.bf16.msra.mxu0 %v5289
        %6140 = vmatpush.bf16.msra.mxu0 %v5285
        %6141 = vmatpush.bf16.msra.mxu0 %v5281
        %6142 = vmatpush.bf16.msra.mxu0 %v5277
        %6143 = vmatmul.bf16.gmra.mxu0 %v3399
        %v6144 = vpop.f32.mrf.mxu0
        %v6145 = vadd.f32 %v6132, %v6144
        %v6146 = vpop.f32.mrf.mxu0
        %6147 = vdwg.mxu0
        %6148 = vmatpush.bf16.msra.mxu0 %v5337
        %6149 = vmatpush.bf16.msra.mxu0 %v5333
        %6150 = vmatpush.bf16.msra.mxu0 %v5329
        %6151 = vmatpush.bf16.msra.mxu0 %v5325
        %6152 = vmatpush.bf16.msra.mxu0 %v5321
        %6153 = vmatpush.bf16.msra.mxu0 %v5317
        %6154 = vmatpush.bf16.msra.mxu0 %v5313
        %6155 = vmatpush.bf16.msra.mxu0 %v5309
        %6156 = vmatmul.bf16.gmra.mxu0 %v3400
        %v6157 = vpop.f32.mrf.mxu0
        %v6158 = vadd.f32 %v6145, %v6157
        %v6159 = vpop.f32.mrf.mxu0
        %6160 = vdwg.mxu0
        %6161 = vmatpush.bf16.msra.mxu0 %v5369
        %6162 = vmatpush.bf16.msra.mxu0 %v5365
        %6163 = vmatpush.bf16.msra.mxu0 %v5361
        %6164 = vmatpush.bf16.msra.mxu0 %v5357
        %6165 = vmatpush.bf16.msra.mxu0 %v5353
        %6166 = vmatpush.bf16.msra.mxu0 %v5349
        %6167 = vmatpush.bf16.msra.mxu0 %v5345
        %6168 = vmatpush.bf16.msra.mxu0 %v5341
        %6169 = vmatmul.bf16.gmra.mxu0 %v3401
        %v6170 = vpop.f32.mrf.mxu0
        %v6171 = vadd.f32 %v6158, %v6170
        %v6172 = vpop.f32.mrf.mxu0
        %6173 = vdwg.mxu0
        %6174 = vmatpush.bf16.msra.mxu0 %v5401
        %6175 = vmatpush.bf16.msra.mxu0 %v5397
        %6176 = vmatpush.bf16.msra.mxu0 %v5393
        %6177 = vmatpush.bf16.msra.mxu0 %v5389
        %6178 = vmatpush.bf16.msra.mxu0 %v5385
        %6179 = vmatpush.bf16.msra.mxu0 %v5381
        %6180 = vmatpush.bf16.msra.mxu0 %v5377
        %6181 = vmatpush.bf16.msra.mxu0 %v5373
        %6182 = vmatmul.bf16.gmra.mxu0 %v3402
        %v6183 = vpop.f32.mrf.mxu0
        %v6184 = vadd.f32 %v6171, %v6183
        %v6185 = vpop.f32.mrf.mxu0
        %6186 = vdwg.mxu0
        %6187 = vmatpush.bf16.msra.mxu0 %v5433
        %6188 = vmatpush.bf16.msra.mxu0 %v5429
        %6189 = vmatpush.bf16.msra.mxu0 %v5425
        %6190 = vmatpush.bf16.msra.mxu0 %v5421
        %6191 = vmatpush.bf16.msra.mxu0 %v5417
        %6192 = vmatpush.bf16.msra.mxu0 %v5413
        %6193 = vmatpush.bf16.msra.mxu0 %v5409
        %6194 = vmatpush.bf16.msra.mxu0 %v5405
        %6195 = vmatmul.bf16.gmra.mxu0 %v3403
        %v6196 = vpop.f32.mrf.mxu0
        %v6197 = vadd.f32 %v6184, %v6196
        %v6198 = vpop.f32.mrf.mxu0
        %6199 = vdwg.mxu0
        %6200 = vmatpush.bf16.msra.mxu0 %v5465
        %6201 = vmatpush.bf16.msra.mxu0 %v5461
        %6202 = vmatpush.bf16.msra.mxu0 %v5457
        %6203 = vmatpush.bf16.msra.mxu0 %v5453
        %6204 = vmatpush.bf16.msra.mxu0 %v5449
        %6205 = vmatpush.bf16.msra.mxu0 %v5445
        %6206 = vmatpush.bf16.msra.mxu0 %v5441
        %6207 = vmatpush.bf16.msra.mxu0 %v5437
        %6208 = vmatmul.bf16.gmra.mxu0 %v3404
        %v6209 = vpop.f32.mrf.mxu0
        %v6210 = vadd.f32 %v6197, %v6209
        %v6211 = vpop.f32.mrf.mxu0
        %6212 = vdwg.mxu0
        %6213 = vmatpush.bf16.msra.mxu0 %v5497
        %6214 = vmatpush.bf16.msra.mxu0 %v5493
        %6215 = vmatpush.bf16.msra.mxu0 %v5489
        %6216 = vmatpush.bf16.msra.mxu0 %v5485
        %6217 = vmatpush.bf16.msra.mxu0 %v5481
        %6218 = vmatpush.bf16.msra.mxu0 %v5477
        %6219 = vmatpush.bf16.msra.mxu0 %v5473
        %6220 = vmatpush.bf16.msra.mxu0 %v5469
        %6221 = vmatmul.bf16.gmra.mxu0 %v3405
        %v6222 = vpop.f32.mrf.mxu0
        %v6223 = vadd.f32 %v6210, %v6222
        %v6224 = vpop.f32.mrf.mxu0
        %6225 = vdwg.mxu0
        %6226 = vmatpush.bf16.msra.mxu0 %v5529
        %6227 = vmatpush.bf16.msra.mxu0 %v5525
        %6228 = vmatpush.bf16.msra.mxu0 %v5521
        %6229 = vmatpush.bf16.msra.mxu0 %v5517
        %6230 = vmatpush.bf16.msra.mxu0 %v5513
        %6231 = vmatpush.bf16.msra.mxu0 %v5509
        %6232 = vmatpush.bf16.msra.mxu0 %v5505
        %6233 = vmatpush.bf16.msra.mxu0 %v5501
        %6234 = vmatmul.bf16.gmra.mxu0 %v3406
        %v6235 = vpop.f32.mrf.mxu0
        %v6236 = vadd.f32 %v6223, %v6235
        %v6237 = vpop.f32.mrf.mxu0
        %6238 = vdwg.mxu0
        %6239 = vmatpush.bf16.msra.mxu0 %v5561
        %6240 = vmatpush.bf16.msra.mxu0 %v5557
        %6241 = vmatpush.bf16.msra.mxu0 %v5553
        %6242 = vmatpush.bf16.msra.mxu0 %v5549
        %6243 = vmatpush.bf16.msra.mxu0 %v5545
        %6244 = vmatpush.bf16.msra.mxu0 %v5541
        %6245 = vmatpush.bf16.msra.mxu0 %v5537
        %6246 = vmatpush.bf16.msra.mxu0 %v5533
        %6247 = vmatmul.bf16.gmra.mxu0 %v3407
        %v6248 = vpop.f32.mrf.mxu0
        %v6249 = vadd.f32 %v6236, %v6248
        %v6250 = vpop.f32.mrf.mxu0
        %6251 = vdwg.mxu0
        %6252 = vmatpush.bf16.msra.mxu0 %v5593
        %6253 = vmatpush.bf16.msra.mxu0 %v5589
        %6254 = vmatpush.bf16.msra.mxu0 %v5585
        %6255 = vmatpush.bf16.msra.mxu0 %v5581
        %6256 = vmatpush.bf16.msra.mxu0 %v5577
        %6257 = vmatpush.bf16.msra.mxu0 %v5573
        %6258 = vmatpush.bf16.msra.mxu0 %v5569
        %6259 = vmatpush.bf16.msra.mxu0 %v5565
        %6260 = vmatmul.bf16.gmra.mxu0 %v3408
        %v6261 = vpop.f32.mrf.mxu0
        %v6262 = vadd.f32 %v6249, %v6261
        %v6263 = vpop.f32.mrf.mxu0
        %6264 = vdwg.mxu0
        %6265 = vmatpush.bf16.msra.mxu0 %v5625
        %6266 = vmatpush.bf16.msra.mxu0 %v5621
        %6267 = vmatpush.bf16.msra.mxu0 %v5617
        %6268 = vmatpush.bf16.msra.mxu0 %v5613
        %6269 = vmatpush.bf16.msra.mxu0 %v5609
        %6270 = vmatpush.bf16.msra.mxu0 %v5605
        %6271 = vmatpush.bf16.msra.mxu0 %v5601
        %6272 = vmatpush.bf16.msra.mxu0 %v5597
        %6273 = vmatmul.bf16.gmra.mxu0 %v3409
        %v6274 = vpop.f32.mrf.mxu0
        %v6275 = vadd.f32 %v6262, %v6274
        %v6276 = vpop.f32.mrf.mxu0
        %6277 = vdwg.mxu0
        %6278 = vmatpush.bf16.msra.mxu0 %v5657
        %6279 = vmatpush.bf16.msra.mxu0 %v5653
        %6280 = vmatpush.bf16.msra.mxu0 %v5649
        %6281 = vmatpush.bf16.msra.mxu0 %v5645
        %6282 = vmatpush.bf16.msra.mxu0 %v5641
        %6283 = vmatpush.bf16.msra.mxu0 %v5637
        %6284 = vmatpush.bf16.msra.mxu0 %v5633
        %6285 = vmatpush.bf16.msra.mxu0 %v5629
        %6286 = vmatmul.bf16.gmra.mxu0 %v3410
        %v6287 = vpop.f32.mrf.mxu0
        %v6288 = vadd.f32 %v6275, %v6287
        %v6289 = vpop.f32.mrf.mxu0
        %6290 = vdwg.mxu0
        %6291 = vmatpush.bf16.msra.mxu0 %v5242
        %6292 = vmatpush.bf16.msra.mxu0 %v5238
        %6293 = vmatpush.bf16.msra.mxu0 %v5234
        %6294 = vmatpush.bf16.msra.mxu0 %v5230
        %6295 = vmatpush.bf16.msra.mxu0 %v5226
        %6296 = vmatpush.bf16.msra.mxu0 %v5222
        %6297 = vmatpush.bf16.msra.mxu0 %v5218
        %6298 = vmatpush.bf16.msra.mxu0 %v5214
        %6299 = vmatmul.bf16.gmra.mxu0 %v3397
        %v6300 = vpop.f32.mrf.mxu0
        %v6301 = vadd.f32 %v3862, %v6300
        %v6302 = vpop.f32.mrf.mxu0
        %6303 = vdwg.mxu0
        %6304 = vmatpush.bf16.msra.mxu0 %v5274
        %6305 = vmatpush.bf16.msra.mxu0 %v5270
        %6306 = vmatpush.bf16.msra.mxu0 %v5266
        %6307 = vmatpush.bf16.msra.mxu0 %v5262
        %6308 = vmatpush.bf16.msra.mxu0 %v5258
        %6309 = vmatpush.bf16.msra.mxu0 %v5254
        %6310 = vmatpush.bf16.msra.mxu0 %v5250
        %6311 = vmatpush.bf16.msra.mxu0 %v5246
        %6312 = vmatmul.bf16.gmra.mxu0 %v3398
        %v6313 = vpop.f32.mrf.mxu0
        %v6314 = vadd.f32 %v6301, %v6313
        %v6315 = vpop.f32.mrf.mxu0
        %6316 = vdwg.mxu0
        %6317 = vmatpush.bf16.msra.mxu0 %v5306
        %6318 = vmatpush.bf16.msra.mxu0 %v5302
        %6319 = vmatpush.bf16.msra.mxu0 %v5298
        %6320 = vmatpush.bf16.msra.mxu0 %v5294
        %6321 = vmatpush.bf16.msra.mxu0 %v5290
        %6322 = vmatpush.bf16.msra.mxu0 %v5286
        %6323 = vmatpush.bf16.msra.mxu0 %v5282
        %6324 = vmatpush.bf16.msra.mxu0 %v5278
        %6325 = vmatmul.bf16.gmra.mxu0 %v3399
        %v6326 = vpop.f32.mrf.mxu0
        %v6327 = vadd.f32 %v6314, %v6326
        %v6328 = vpop.f32.mrf.mxu0
        %6329 = vdwg.mxu0
        %6330 = vmatpush.bf16.msra.mxu0 %v5338
        %6331 = vmatpush.bf16.msra.mxu0 %v5334
        %6332 = vmatpush.bf16.msra.mxu0 %v5330
        %6333 = vmatpush.bf16.msra.mxu0 %v5326
        %6334 = vmatpush.bf16.msra.mxu0 %v5322
        %6335 = vmatpush.bf16.msra.mxu0 %v5318
        %6336 = vmatpush.bf16.msra.mxu0 %v5314
        %6337 = vmatpush.bf16.msra.mxu0 %v5310
        %6338 = vmatmul.bf16.gmra.mxu0 %v3400
        %v6339 = vpop.f32.mrf.mxu0
        %v6340 = vadd.f32 %v6327, %v6339
        %v6341 = vpop.f32.mrf.mxu0
        %6342 = vdwg.mxu0
        %6343 = vmatpush.bf16.msra.mxu0 %v5370
        %6344 = vmatpush.bf16.msra.mxu0 %v5366
        %6345 = vmatpush.bf16.msra.mxu0 %v5362
        %6346 = vmatpush.bf16.msra.mxu0 %v5358
        %6347 = vmatpush.bf16.msra.mxu0 %v5354
        %6348 = vmatpush.bf16.msra.mxu0 %v5350
        %6349 = vmatpush.bf16.msra.mxu0 %v5346
        %6350 = vmatpush.bf16.msra.mxu0 %v5342
        %6351 = vmatmul.bf16.gmra.mxu0 %v3401
        %v6352 = vpop.f32.mrf.mxu0
        %v6353 = vadd.f32 %v6340, %v6352
        %v6354 = vpop.f32.mrf.mxu0
        %6355 = vdwg.mxu0
        %6356 = vmatpush.bf16.msra.mxu0 %v5402
        %6357 = vmatpush.bf16.msra.mxu0 %v5398
        %6358 = vmatpush.bf16.msra.mxu0 %v5394
        %6359 = vmatpush.bf16.msra.mxu0 %v5390
        %6360 = vmatpush.bf16.msra.mxu0 %v5386
        %6361 = vmatpush.bf16.msra.mxu0 %v5382
        %6362 = vmatpush.bf16.msra.mxu0 %v5378
        %6363 = vmatpush.bf16.msra.mxu0 %v5374
        %6364 = vmatmul.bf16.gmra.mxu0 %v3402
        %v6365 = vpop.f32.mrf.mxu0
        %v6366 = vadd.f32 %v6353, %v6365
        %v6367 = vpop.f32.mrf.mxu0
        %6368 = vdwg.mxu0
        %6369 = vmatpush.bf16.msra.mxu0 %v5434
        %6370 = vmatpush.bf16.msra.mxu0 %v5430
        %6371 = vmatpush.bf16.msra.mxu0 %v5426
        %6372 = vmatpush.bf16.msra.mxu0 %v5422
        %6373 = vmatpush.bf16.msra.mxu0 %v5418
        %6374 = vmatpush.bf16.msra.mxu0 %v5414
        %6375 = vmatpush.bf16.msra.mxu0 %v5410
        %6376 = vmatpush.bf16.msra.mxu0 %v5406
        %6377 = vmatmul.bf16.gmra.mxu0 %v3403
        %v6378 = vpop.f32.mrf.mxu0
        %v6379 = vadd.f32 %v6366, %v6378
        %v6380 = vpop.f32.mrf.mxu0
        %6381 = vdwg.mxu0
        %6382 = vmatpush.bf16.msra.mxu0 %v5466
        %6383 = vmatpush.bf16.msra.mxu0 %v5462
        %6384 = vmatpush.bf16.msra.mxu0 %v5458
        %6385 = vmatpush.bf16.msra.mxu0 %v5454
        %6386 = vmatpush.bf16.msra.mxu0 %v5450
        %6387 = vmatpush.bf16.msra.mxu0 %v5446
        %6388 = vmatpush.bf16.msra.mxu0 %v5442
        %6389 = vmatpush.bf16.msra.mxu0 %v5438
        %6390 = vmatmul.bf16.gmra.mxu0 %v3404
        %v6391 = vpop.f32.mrf.mxu0
        %v6392 = vadd.f32 %v6379, %v6391
        %v6393 = vpop.f32.mrf.mxu0
        %6394 = vdwg.mxu0
        %6395 = vmatpush.bf16.msra.mxu0 %v5498
        %6396 = vmatpush.bf16.msra.mxu0 %v5494
        %6397 = vmatpush.bf16.msra.mxu0 %v5490
        %6398 = vmatpush.bf16.msra.mxu0 %v5486
        %6399 = vmatpush.bf16.msra.mxu0 %v5482
        %6400 = vmatpush.bf16.msra.mxu0 %v5478
        %6401 = vmatpush.bf16.msra.mxu0 %v5474
        %6402 = vmatpush.bf16.msra.mxu0 %v5470
        %6403 = vmatmul.bf16.gmra.mxu0 %v3405
        %v6404 = vpop.f32.mrf.mxu0
        %v6405 = vadd.f32 %v6392, %v6404
        %v6406 = vpop.f32.mrf.mxu0
        %6407 = vdwg.mxu0
        %6408 = vmatpush.bf16.msra.mxu0 %v5530
        %6409 = vmatpush.bf16.msra.mxu0 %v5526
        %6410 = vmatpush.bf16.msra.mxu0 %v5522
        %6411 = vmatpush.bf16.msra.mxu0 %v5518
        %6412 = vmatpush.bf16.msra.mxu0 %v5514
        %6413 = vmatpush.bf16.msra.mxu0 %v5510
        %6414 = vmatpush.bf16.msra.mxu0 %v5506
        %6415 = vmatpush.bf16.msra.mxu0 %v5502
        %6416 = vmatmul.bf16.gmra.mxu0 %v3406
        %v6417 = vpop.f32.mrf.mxu0
        %v6418 = vadd.f32 %v6405, %v6417
        %v6419 = vpop.f32.mrf.mxu0
        %6420 = vdwg.mxu0
        %6421 = vmatpush.bf16.msra.mxu0 %v5562
        %6422 = vmatpush.bf16.msra.mxu0 %v5558
        %6423 = vmatpush.bf16.msra.mxu0 %v5554
        %6424 = vmatpush.bf16.msra.mxu0 %v5550
        %6425 = vmatpush.bf16.msra.mxu0 %v5546
        %6426 = vmatpush.bf16.msra.mxu0 %v5542
        %6427 = vmatpush.bf16.msra.mxu0 %v5538
        %6428 = vmatpush.bf16.msra.mxu0 %v5534
        %6429 = vmatmul.bf16.gmra.mxu0 %v3407
        %v6430 = vpop.f32.mrf.mxu0
        %v6431 = vadd.f32 %v6418, %v6430
        %v6432 = vpop.f32.mrf.mxu0
        %6433 = vdwg.mxu0
        %6434 = vmatpush.bf16.msra.mxu0 %v5594
        %6435 = vmatpush.bf16.msra.mxu0 %v5590
        %6436 = vmatpush.bf16.msra.mxu0 %v5586
        %6437 = vmatpush.bf16.msra.mxu0 %v5582
        %6438 = vmatpush.bf16.msra.mxu0 %v5578
        %6439 = vmatpush.bf16.msra.mxu0 %v5574
        %6440 = vmatpush.bf16.msra.mxu0 %v5570
        %6441 = vmatpush.bf16.msra.mxu0 %v5566
        %6442 = vmatmul.bf16.gmra.mxu0 %v3408
        %v6443 = vpop.f32.mrf.mxu0
        %v6444 = vadd.f32 %v6431, %v6443
        %v6445 = vpop.f32.mrf.mxu0
        %6446 = vdwg.mxu0
        %6447 = vmatpush.bf16.msra.mxu0 %v5626
        %6448 = vmatpush.bf16.msra.mxu0 %v5622
        %6449 = vmatpush.bf16.msra.mxu0 %v5618
        %6450 = vmatpush.bf16.msra.mxu0 %v5614
        %6451 = vmatpush.bf16.msra.mxu0 %v5610
        %6452 = vmatpush.bf16.msra.mxu0 %v5606
        %6453 = vmatpush.bf16.msra.mxu0 %v5602
        %6454 = vmatpush.bf16.msra.mxu0 %v5598
        %6455 = vmatmul.bf16.gmra.mxu0 %v3409
        %v6456 = vpop.f32.mrf.mxu0
        %v6457 = vadd.f32 %v6444, %v6456
        %v6458 = vpop.f32.mrf.mxu0
        %6459 = vdwg.mxu0
        %6460 = vmatpush.bf16.msra.mxu0 %v5658
        %6461 = vmatpush.bf16.msra.mxu0 %v5654
        %6462 = vmatpush.bf16.msra.mxu0 %v5650
        %6463 = vmatpush.bf16.msra.mxu0 %v5646
        %6464 = vmatpush.bf16.msra.mxu0 %v5642
        %6465 = vmatpush.bf16.msra.mxu0 %v5638
        %6466 = vmatpush.bf16.msra.mxu0 %v5634
        %6467 = vmatpush.bf16.msra.mxu0 %v5630
        %6468 = vmatmul.bf16.gmra.mxu0 %v3410
        %v6469 = vpop.f32.mrf.mxu0
        %v6470 = vadd.f32 %v6457, %v6469
        %v6471 = vpop.f32.mrf.mxu0
        %6472 = vdwg.mxu0
        %6473 = vmatpush.bf16.msra.mxu0 %v5243
        %6474 = vmatpush.bf16.msra.mxu0 %v5239
        %6475 = vmatpush.bf16.msra.mxu0 %v5235
        %6476 = vmatpush.bf16.msra.mxu0 %v5231
        %6477 = vmatpush.bf16.msra.mxu0 %v5227
        %6478 = vmatpush.bf16.msra.mxu0 %v5223
        %6479 = vmatpush.bf16.msra.mxu0 %v5219
        %6480 = vmatpush.bf16.msra.mxu0 %v5215
        %6481 = vmatmul.bf16.gmra.mxu0 %v3397
        %v6482 = vpop.f32.mrf.mxu0
        %v6483 = vadd.f32 %v3863, %v6482
        %v6484 = vpop.f32.mrf.mxu0
        %6485 = vdwg.mxu0
        %6486 = vmatpush.bf16.msra.mxu0 %v5275
        %6487 = vmatpush.bf16.msra.mxu0 %v5271
        %6488 = vmatpush.bf16.msra.mxu0 %v5267
        %6489 = vmatpush.bf16.msra.mxu0 %v5263
        %6490 = vmatpush.bf16.msra.mxu0 %v5259
        %6491 = vmatpush.bf16.msra.mxu0 %v5255
        %6492 = vmatpush.bf16.msra.mxu0 %v5251
        %6493 = vmatpush.bf16.msra.mxu0 %v5247
        %6494 = vmatmul.bf16.gmra.mxu0 %v3398
        %v6495 = vpop.f32.mrf.mxu0
        %v6496 = vadd.f32 %v6483, %v6495
        %v6497 = vpop.f32.mrf.mxu0
        %6498 = vdwg.mxu0
        %6499 = vmatpush.bf16.msra.mxu0 %v5307
        %6500 = vmatpush.bf16.msra.mxu0 %v5303
        %6501 = vmatpush.bf16.msra.mxu0 %v5299
        %6502 = vmatpush.bf16.msra.mxu0 %v5295
        %6503 = vmatpush.bf16.msra.mxu0 %v5291
        %6504 = vmatpush.bf16.msra.mxu0 %v5287
        %6505 = vmatpush.bf16.msra.mxu0 %v5283
        %6506 = vmatpush.bf16.msra.mxu0 %v5279
        %6507 = vmatmul.bf16.gmra.mxu0 %v3399
        %v6508 = vpop.f32.mrf.mxu0
        %v6509 = vadd.f32 %v6496, %v6508
        %v6510 = vpop.f32.mrf.mxu0
        %6511 = vdwg.mxu0
        %6512 = vmatpush.bf16.msra.mxu0 %v5339
        %6513 = vmatpush.bf16.msra.mxu0 %v5335
        %6514 = vmatpush.bf16.msra.mxu0 %v5331
        %6515 = vmatpush.bf16.msra.mxu0 %v5327
        %6516 = vmatpush.bf16.msra.mxu0 %v5323
        %6517 = vmatpush.bf16.msra.mxu0 %v5319
        %6518 = vmatpush.bf16.msra.mxu0 %v5315
        %6519 = vmatpush.bf16.msra.mxu0 %v5311
        %6520 = vmatmul.bf16.gmra.mxu0 %v3400
        %v6521 = vpop.f32.mrf.mxu0
        %v6522 = vadd.f32 %v6509, %v6521
        %v6523 = vpop.f32.mrf.mxu0
        %6524 = vdwg.mxu0
        %6525 = vmatpush.bf16.msra.mxu0 %v5371
        %6526 = vmatpush.bf16.msra.mxu0 %v5367
        %6527 = vmatpush.bf16.msra.mxu0 %v5363
        %6528 = vmatpush.bf16.msra.mxu0 %v5359
        %6529 = vmatpush.bf16.msra.mxu0 %v5355
        %6530 = vmatpush.bf16.msra.mxu0 %v5351
        %6531 = vmatpush.bf16.msra.mxu0 %v5347
        %6532 = vmatpush.bf16.msra.mxu0 %v5343
        %6533 = vmatmul.bf16.gmra.mxu0 %v3401
        %v6534 = vpop.f32.mrf.mxu0
        %v6535 = vadd.f32 %v6522, %v6534
        %v6536 = vpop.f32.mrf.mxu0
        %6537 = vdwg.mxu0
        %6538 = vmatpush.bf16.msra.mxu0 %v5403
        %6539 = vmatpush.bf16.msra.mxu0 %v5399
        %6540 = vmatpush.bf16.msra.mxu0 %v5395
        %6541 = vmatpush.bf16.msra.mxu0 %v5391
        %6542 = vmatpush.bf16.msra.mxu0 %v5387
        %6543 = vmatpush.bf16.msra.mxu0 %v5383
        %6544 = vmatpush.bf16.msra.mxu0 %v5379
        %6545 = vmatpush.bf16.msra.mxu0 %v5375
        %6546 = vmatmul.bf16.gmra.mxu0 %v3402
        %v6547 = vpop.f32.mrf.mxu0
        %v6548 = vadd.f32 %v6535, %v6547
        %v6549 = vpop.f32.mrf.mxu0
        %6550 = vdwg.mxu0
        %6551 = vmatpush.bf16.msra.mxu0 %v5435
        %6552 = vmatpush.bf16.msra.mxu0 %v5431
        %6553 = vmatpush.bf16.msra.mxu0 %v5427
        %6554 = vmatpush.bf16.msra.mxu0 %v5423
        %6555 = vmatpush.bf16.msra.mxu0 %v5419
        %6556 = vmatpush.bf16.msra.mxu0 %v5415
        %6557 = vmatpush.bf16.msra.mxu0 %v5411
        %6558 = vmatpush.bf16.msra.mxu0 %v5407
        %6559 = vmatmul.bf16.gmra.mxu0 %v3403
        %v6560 = vpop.f32.mrf.mxu0
        %v6561 = vadd.f32 %v6548, %v6560
        %v6562 = vpop.f32.mrf.mxu0
        %6563 = vdwg.mxu0
        %6564 = vmatpush.bf16.msra.mxu0 %v5467
        %6565 = vmatpush.bf16.msra.mxu0 %v5463
        %6566 = vmatpush.bf16.msra.mxu0 %v5459
        %6567 = vmatpush.bf16.msra.mxu0 %v5455
        %6568 = vmatpush.bf16.msra.mxu0 %v5451
        %6569 = vmatpush.bf16.msra.mxu0 %v5447
        %6570 = vmatpush.bf16.msra.mxu0 %v5443
        %6571 = vmatpush.bf16.msra.mxu0 %v5439
        %6572 = vmatmul.bf16.gmra.mxu0 %v3404
        %v6573 = vpop.f32.mrf.mxu0
        %v6574 = vadd.f32 %v6561, %v6573
        %v6575 = vpop.f32.mrf.mxu0
        %6576 = vdwg.mxu0
        %6577 = vmatpush.bf16.msra.mxu0 %v5499
        %6578 = vmatpush.bf16.msra.mxu0 %v5495
        %6579 = vmatpush.bf16.msra.mxu0 %v5491
        %6580 = vmatpush.bf16.msra.mxu0 %v5487
        %6581 = vmatpush.bf16.msra.mxu0 %v5483
        %6582 = vmatpush.bf16.msra.mxu0 %v5479
        %6583 = vmatpush.bf16.msra.mxu0 %v5475
        %6584 = vmatpush.bf16.msra.mxu0 %v5471
        %6585 = vmatmul.bf16.gmra.mxu0 %v3405
        %v6586 = vpop.f32.mrf.mxu0
        %v6587 = vadd.f32 %v6574, %v6586
        %v6588 = vpop.f32.mrf.mxu0
        %6589 = vdwg.mxu0
        %6590 = vmatpush.bf16.msra.mxu0 %v5531
        %6591 = vmatpush.bf16.msra.mxu0 %v5527
        %6592 = vmatpush.bf16.msra.mxu0 %v5523
        %6593 = vmatpush.bf16.msra.mxu0 %v5519
        %6594 = vmatpush.bf16.msra.mxu0 %v5515
        %6595 = vmatpush.bf16.msra.mxu0 %v5511
        %6596 = vmatpush.bf16.msra.mxu0 %v5507
        %6597 = vmatpush.bf16.msra.mxu0 %v5503
        %6598 = vmatmul.bf16.gmra.mxu0 %v3406
        %v6599 = vpop.f32.mrf.mxu0
        %v6600 = vadd.f32 %v6587, %v6599
        %v6601 = vpop.f32.mrf.mxu0
        %6602 = vdwg.mxu0
        %6603 = vmatpush.bf16.msra.mxu0 %v5563
        %6604 = vmatpush.bf16.msra.mxu0 %v5559
        %6605 = vmatpush.bf16.msra.mxu0 %v5555
        %6606 = vmatpush.bf16.msra.mxu0 %v5551
        %6607 = vmatpush.bf16.msra.mxu0 %v5547
        %6608 = vmatpush.bf16.msra.mxu0 %v5543
        %6609 = vmatpush.bf16.msra.mxu0 %v5539
        %6610 = vmatpush.bf16.msra.mxu0 %v5535
        %6611 = vmatmul.bf16.gmra.mxu0 %v3407
        %v6612 = vpop.f32.mrf.mxu0
        %v6613 = vadd.f32 %v6600, %v6612
        %v6614 = vpop.f32.mrf.mxu0
        %6615 = vdwg.mxu0
        %6616 = vmatpush.bf16.msra.mxu0 %v5595
        %6617 = vmatpush.bf16.msra.mxu0 %v5591
        %6618 = vmatpush.bf16.msra.mxu0 %v5587
        %6619 = vmatpush.bf16.msra.mxu0 %v5583
        %6620 = vmatpush.bf16.msra.mxu0 %v5579
        %6621 = vmatpush.bf16.msra.mxu0 %v5575
        %6622 = vmatpush.bf16.msra.mxu0 %v5571
        %6623 = vmatpush.bf16.msra.mxu0 %v5567
        %6624 = vmatmul.bf16.gmra.mxu0 %v3408
        %v6625 = vpop.f32.mrf.mxu0
        %v6626 = vadd.f32 %v6613, %v6625
        %v6627 = vpop.f32.mrf.mxu0
        %6628 = vdwg.mxu0
        %6629 = vmatpush.bf16.msra.mxu0 %v5627
        %6630 = vmatpush.bf16.msra.mxu0 %v5623
        %6631 = vmatpush.bf16.msra.mxu0 %v5619
        %6632 = vmatpush.bf16.msra.mxu0 %v5615
        %6633 = vmatpush.bf16.msra.mxu0 %v5611
        %6634 = vmatpush.bf16.msra.mxu0 %v5607
        %6635 = vmatpush.bf16.msra.mxu0 %v5603
        %6636 = vmatpush.bf16.msra.mxu0 %v5599
        %6637 = vmatmul.bf16.gmra.mxu0 %v3409
        %v6638 = vpop.f32.mrf.mxu0
        %v6639 = vadd.f32 %v6626, %v6638
        %v6640 = vpop.f32.mrf.mxu0
        %6641 = vdwg.mxu0
        %6642 = vmatpush.bf16.msra.mxu0 %v5659
        %6643 = vmatpush.bf16.msra.mxu0 %v5655
        %6644 = vmatpush.bf16.msra.mxu0 %v5651
        %6645 = vmatpush.bf16.msra.mxu0 %v5647
        %6646 = vmatpush.bf16.msra.mxu0 %v5643
        %6647 = vmatpush.bf16.msra.mxu0 %v5639
        %6648 = vmatpush.bf16.msra.mxu0 %v5635
        %6649 = vmatpush.bf16.msra.mxu0 %v5631
        %6650 = vmatmul.bf16.gmra.mxu0 %v3410
        %v6651 = vpop.f32.mrf.mxu0
        %v6652 = vadd.f32 %v6639, %v6651
        %v6653 = vpop.f32.mrf.mxu0
        %6654 = vdwg.mxu0
        %6655 = vmatpush.bf16.msra.mxu0 %v5244
        %6656 = vmatpush.bf16.msra.mxu0 %v5240
        %6657 = vmatpush.bf16.msra.mxu0 %v5236
        %6658 = vmatpush.bf16.msra.mxu0 %v5232
        %6659 = vmatpush.bf16.msra.mxu0 %v5228
        %6660 = vmatpush.bf16.msra.mxu0 %v5224
        %6661 = vmatpush.bf16.msra.mxu0 %v5220
        %6662 = vmatpush.bf16.msra.mxu0 %v5216
        %6663 = vmatmul.bf16.gmra.mxu0 %v3397
        %v6664 = vpop.f32.mrf.mxu0
        %v6665 = vadd.f32 %v3864, %v6664
        %v6666 = vpop.f32.mrf.mxu0
        %6667 = vdwg.mxu0
        %6668 = vmatpush.bf16.msra.mxu0 %v5276
        %6669 = vmatpush.bf16.msra.mxu0 %v5272
        %6670 = vmatpush.bf16.msra.mxu0 %v5268
        %6671 = vmatpush.bf16.msra.mxu0 %v5264
        %6672 = vmatpush.bf16.msra.mxu0 %v5260
        %6673 = vmatpush.bf16.msra.mxu0 %v5256
        %6674 = vmatpush.bf16.msra.mxu0 %v5252
        %6675 = vmatpush.bf16.msra.mxu0 %v5248
        %6676 = vmatmul.bf16.gmra.mxu0 %v3398
        %v6677 = vpop.f32.mrf.mxu0
        %v6678 = vadd.f32 %v6665, %v6677
        %v6679 = vpop.f32.mrf.mxu0
        %6680 = vdwg.mxu0
        %6681 = vmatpush.bf16.msra.mxu0 %v5308
        %6682 = vmatpush.bf16.msra.mxu0 %v5304
        %6683 = vmatpush.bf16.msra.mxu0 %v5300
        %6684 = vmatpush.bf16.msra.mxu0 %v5296
        %6685 = vmatpush.bf16.msra.mxu0 %v5292
        %6686 = vmatpush.bf16.msra.mxu0 %v5288
        %6687 = vmatpush.bf16.msra.mxu0 %v5284
        %6688 = vmatpush.bf16.msra.mxu0 %v5280
        %6689 = vmatmul.bf16.gmra.mxu0 %v3399
        %v6690 = vpop.f32.mrf.mxu0
        %v6691 = vadd.f32 %v6678, %v6690
        %v6692 = vpop.f32.mrf.mxu0
        %6693 = vdwg.mxu0
        %6694 = vmatpush.bf16.msra.mxu0 %v5340
        %6695 = vmatpush.bf16.msra.mxu0 %v5336
        %6696 = vmatpush.bf16.msra.mxu0 %v5332
        %6697 = vmatpush.bf16.msra.mxu0 %v5328
        %6698 = vmatpush.bf16.msra.mxu0 %v5324
        %6699 = vmatpush.bf16.msra.mxu0 %v5320
        %6700 = vmatpush.bf16.msra.mxu0 %v5316
        %6701 = vmatpush.bf16.msra.mxu0 %v5312
        %6702 = vmatmul.bf16.gmra.mxu0 %v3400
        %v6703 = vpop.f32.mrf.mxu0
        %v6704 = vadd.f32 %v6691, %v6703
        %v6705 = vpop.f32.mrf.mxu0
        %6706 = vdwg.mxu0
        %6707 = vmatpush.bf16.msra.mxu0 %v5372
        %6708 = vmatpush.bf16.msra.mxu0 %v5368
        %6709 = vmatpush.bf16.msra.mxu0 %v5364
        %6710 = vmatpush.bf16.msra.mxu0 %v5360
        %6711 = vmatpush.bf16.msra.mxu0 %v5356
        %6712 = vmatpush.bf16.msra.mxu0 %v5352
        %6713 = vmatpush.bf16.msra.mxu0 %v5348
        %6714 = vmatpush.bf16.msra.mxu0 %v5344
        %6715 = vmatmul.bf16.gmra.mxu0 %v3401
        %v6716 = vpop.f32.mrf.mxu0
        %v6717 = vadd.f32 %v6704, %v6716
        %v6718 = vpop.f32.mrf.mxu0
        %6719 = vdwg.mxu0
        %6720 = vmatpush.bf16.msra.mxu0 %v5404
        %6721 = vmatpush.bf16.msra.mxu0 %v5400
        %6722 = vmatpush.bf16.msra.mxu0 %v5396
        %6723 = vmatpush.bf16.msra.mxu0 %v5392
        %6724 = vmatpush.bf16.msra.mxu0 %v5388
        %6725 = vmatpush.bf16.msra.mxu0 %v5384
        %6726 = vmatpush.bf16.msra.mxu0 %v5380
        %6727 = vmatpush.bf16.msra.mxu0 %v5376
        %6728 = vmatmul.bf16.gmra.mxu0 %v3402
        %v6729 = vpop.f32.mrf.mxu0
        %v6730 = vadd.f32 %v6717, %v6729
        %v6731 = vpop.f32.mrf.mxu0
        %6732 = vdwg.mxu0
        %6733 = vmatpush.bf16.msra.mxu0 %v5436
        %6734 = vmatpush.bf16.msra.mxu0 %v5432
        %6735 = vmatpush.bf16.msra.mxu0 %v5428
        %6736 = vmatpush.bf16.msra.mxu0 %v5424
        %6737 = vmatpush.bf16.msra.mxu0 %v5420
        %6738 = vmatpush.bf16.msra.mxu0 %v5416
        %6739 = vmatpush.bf16.msra.mxu0 %v5412
        %6740 = vmatpush.bf16.msra.mxu0 %v5408
        %6741 = vmatmul.bf16.gmra.mxu0 %v3403
        %v6742 = vpop.f32.mrf.mxu0
        %v6743 = vadd.f32 %v6730, %v6742
        %v6744 = vpop.f32.mrf.mxu0
        %6745 = vdwg.mxu0
        %6746 = vmatpush.bf16.msra.mxu0 %v5468
        %6747 = vmatpush.bf16.msra.mxu0 %v5464
        %6748 = vmatpush.bf16.msra.mxu0 %v5460
        %6749 = vmatpush.bf16.msra.mxu0 %v5456
        %6750 = vmatpush.bf16.msra.mxu0 %v5452
        %6751 = vmatpush.bf16.msra.mxu0 %v5448
        %6752 = vmatpush.bf16.msra.mxu0 %v5444
        %6753 = vmatpush.bf16.msra.mxu0 %v5440
        %6754 = vmatmul.bf16.gmra.mxu0 %v3404
        %v6755 = vpop.f32.mrf.mxu0
        %v6756 = vadd.f32 %v6743, %v6755
        %v6757 = vpop.f32.mrf.mxu0
        %6758 = vdwg.mxu0
        %6759 = vmatpush.bf16.msra.mxu0 %v5500
        %6760 = vmatpush.bf16.msra.mxu0 %v5496
        %6761 = vmatpush.bf16.msra.mxu0 %v5492
        %6762 = vmatpush.bf16.msra.mxu0 %v5488
        %6763 = vmatpush.bf16.msra.mxu0 %v5484
        %6764 = vmatpush.bf16.msra.mxu0 %v5480
        %6765 = vmatpush.bf16.msra.mxu0 %v5476
        %6766 = vmatpush.bf16.msra.mxu0 %v5472
        %6767 = vmatmul.bf16.gmra.mxu0 %v3405
        %v6768 = vpop.f32.mrf.mxu0
        %v6769 = vadd.f32 %v6756, %v6768
        %v6770 = vpop.f32.mrf.mxu0
        %6771 = vdwg.mxu0
        %6772 = vmatpush.bf16.msra.mxu0 %v5532
        %6773 = vmatpush.bf16.msra.mxu0 %v5528
        %6774 = vmatpush.bf16.msra.mxu0 %v5524
        %6775 = vmatpush.bf16.msra.mxu0 %v5520
        %6776 = vmatpush.bf16.msra.mxu0 %v5516
        %6777 = vmatpush.bf16.msra.mxu0 %v5512
        %6778 = vmatpush.bf16.msra.mxu0 %v5508
        %6779 = vmatpush.bf16.msra.mxu0 %v5504
        %6780 = vmatmul.bf16.gmra.mxu0 %v3406
        %v6781 = vpop.f32.mrf.mxu0
        %v6782 = vadd.f32 %v6769, %v6781
        %v6783 = vpop.f32.mrf.mxu0
        %6784 = vdwg.mxu0
        %6785 = vmatpush.bf16.msra.mxu0 %v5564
        %6786 = vmatpush.bf16.msra.mxu0 %v5560
        %6787 = vmatpush.bf16.msra.mxu0 %v5556
        %6788 = vmatpush.bf16.msra.mxu0 %v5552
        %6789 = vmatpush.bf16.msra.mxu0 %v5548
        %6790 = vmatpush.bf16.msra.mxu0 %v5544
        %6791 = vmatpush.bf16.msra.mxu0 %v5540
        %6792 = vmatpush.bf16.msra.mxu0 %v5536
        %6793 = vmatmul.bf16.gmra.mxu0 %v3407
        %v6794 = vpop.f32.mrf.mxu0
        %v6795 = vadd.f32 %v6782, %v6794
        %v6796 = vpop.f32.mrf.mxu0
        %6797 = vdwg.mxu0
        %6798 = vmatpush.bf16.msra.mxu0 %v5596
        %6799 = vmatpush.bf16.msra.mxu0 %v5592
        %6800 = vmatpush.bf16.msra.mxu0 %v5588
        %6801 = vmatpush.bf16.msra.mxu0 %v5584
        %6802 = vmatpush.bf16.msra.mxu0 %v5580
        %6803 = vmatpush.bf16.msra.mxu0 %v5576
        %6804 = vmatpush.bf16.msra.mxu0 %v5572
        %6805 = vmatpush.bf16.msra.mxu0 %v5568
        %6806 = vmatmul.bf16.gmra.mxu0 %v3408
        %v6807 = vpop.f32.mrf.mxu0
        %v6808 = vadd.f32 %v6795, %v6807
        %v6809 = vpop.f32.mrf.mxu0
        %6810 = vdwg.mxu0
        %6811 = vmatpush.bf16.msra.mxu0 %v5628
        %6812 = vmatpush.bf16.msra.mxu0 %v5624
        %6813 = vmatpush.bf16.msra.mxu0 %v5620
        %6814 = vmatpush.bf16.msra.mxu0 %v5616
        %6815 = vmatpush.bf16.msra.mxu0 %v5612
        %6816 = vmatpush.bf16.msra.mxu0 %v5608
        %6817 = vmatpush.bf16.msra.mxu0 %v5604
        %6818 = vmatpush.bf16.msra.mxu0 %v5600
        %6819 = vmatmul.bf16.gmra.mxu0 %v3409
        %v6820 = vpop.f32.mrf.mxu0
        %v6821 = vadd.f32 %v6808, %v6820
        %v6822 = vpop.f32.mrf.mxu0
        %6823 = vdwg.mxu0
        %6824 = vmatpush.bf16.msra.mxu0 %v5660
        %6825 = vmatpush.bf16.msra.mxu0 %v5656
        %6826 = vmatpush.bf16.msra.mxu0 %v5652
        %6827 = vmatpush.bf16.msra.mxu0 %v5648
        %6828 = vmatpush.bf16.msra.mxu0 %v5644
        %6829 = vmatpush.bf16.msra.mxu0 %v5640
        %6830 = vmatpush.bf16.msra.mxu0 %v5636
        %6831 = vmatpush.bf16.msra.mxu0 %v5632
        %6832 = vmatmul.bf16.gmra.mxu0 %v3410
        %v6833 = vpop.f32.mrf.mxu0
        %v6834 = vadd.f32 %v6821, %v6833
        %v6835 = vpop.f32.mrf.mxu0
        %6836 = vdwg.mxu0
        %6837 = vst [vmem:[%s217] sm:$0xff] %v6288
        %6838 = vst [vmem:[%s217 + $0x8] sm:$0xff] %v6470
        %6839 = vst [vmem:[%s217 + $0x10] sm:$0xff] %v6652
        %6840 = vst.msk [vmem:[%s217 + $0x18] sm:$0xff] %vm2623, %v6834
        %s6841 = sand.u32 %s137, 1
        %s6842 = scalar_lea.sflag [#allocation3], %s6841
        %s6843 = sand.u32 %s137, 1
        %s6844 = smul.addr %s6843, 32
        %s6845 = scalar_lea.vmem [#allocation2], %s6844
        // Predicated region
        $region41: #{feed_forward.1} parent=39 // pred_check
          %p6846 = pneg %p147
        $region42: #{feed_forward.1} parent=39 // pred_check_branch
          %6848 = sbr.rel (%p6846) target = $region44
        $region43: #{feed_forward.1} parent=39 // pred_region
          %6850 = vsyncadd %s6842, 0
          %s6851 = smul.addr %s19, 4
          %s6852 = smul.addr %s6851, 8
          %s6853 = scalar_lea.hbm %s5, %s6852
          %s6855 = sshll.u32 %s6845, 4
          %s6856 = int_to_ptr.vmem [resolvable:$true] %s6855
          %s6857 = sshll.u32 %s6853, 4
          %s6858 = int_to_ptr.hbm [resolvable:$true] %s6857
          %6860 = dma.vmem_to_hbm [thread:$0]  %s6856, 512, %s6858, %s6842
        $region44: #{feed_forward.1} parent=39 // pred_fallthru
          _
      $region40: #{feed_forward.1} parent=5 // pred_fallthru
        _
      %p6861 = scmp.le.s32.totalorder 2, %s14
      // Predicated region
      $region45: #{feed_forward.1} parent=5 // pred_check
        %p6862 = pneg %p6861
      $region46: #{feed_forward.1} parent=5 // pred_check_branch
        %6864 = sbr.rel (%p6862) target = $region48
      $region47: #{feed_forward.1} parent=5 // pred_region
        %s6865 = ssub.s32 %s14, 2
        // Predicated region
        $region49: #{feed_forward.1} parent=47 // pred_check
          %p6866 = pneg %p153
        $region50: #{feed_forward.1} parent=47 // pred_check_branch
          %6868 = sbr.rel (%p6866) target = $region52
        $region51: #{feed_forward.1} parent=47 // pred_region
          %s6869 = sand.u32 %s138, 1
          %s6870 = scalar_lea.sflag [#allocation3], %s6869
          %s6871 = sand.u32 %s138, 1
          %s6872 = smul.addr %s6871, 32
          %s6873 = scalar_lea.vmem [#allocation2], %s6872
          %6875 = dma.done %s6870, 512
        $region52: #{feed_forward.1} parent=47 // pred_fallthru
          _
      $region48: #{feed_forward.1} parent=5 // pred_fallthru
        _
    $region6: #{feed_forward.1} parent=1 // loop_footer
      %s18 = sadd.s32 1, %s14
    $region7: #{feed_forward.1} parent=1 // loop_footer_branch
      %13 = sbr.rel target = $region3
    $region8: #{feed_forward.1} parent=1 // loop_exit
      _
    %6876 = vsyncpa [#allocation3], 1
    %s6877 = scalar_lea.sflag [#allocation3], 1
    %6878 = vsyncpa %s6877, 1

</llo_original>
